<compile_context>
chip_gen: v6e
topology: v6e:2x2x1
jax: 0.10.0
libtpu: 0.0.40
codegen_flags: <defaults>
</compile_context>

<pallas_src>
import functools

import jax
import jax.numpy as jnp
from jax.experimental import pallas as pl
from jax.experimental.pallas import tpu as pltpu


def _round_up(x, m):
    return (x + m - 1) // m * m


# ----------------------------------------------------------------------------
# Matmul: K-tiled, bf16 inputs, f32 VMEM accumulator, optional fused bias+tanh
# ----------------------------------------------------------------------------
def _matmul_kernel(a_ref, b_ref, bias_ref, o_ref, acc_ref, *, activation):
    @pl.when(pl.program_id(2) == 0)
    def _init():
        acc_ref[...] = jnp.zeros_like(acc_ref)

    acc_ref[...] += jnp.dot(a_ref[...], b_ref[...],
                            preferred_element_type=jnp.float32)

    @pl.when(pl.program_id(2) == pl.num_programs(2) - 1)
    def _epilogue():
        y = acc_ref[...] + bias_ref[...]
        if activation == "tanh":
            y = jnp.tanh(y)
        o_ref[...] = y.astype(o_ref.dtype)


def pallas_matmul(a, b, bias=None, activation=None):
    """(M, K) @ (K, N) -> (M, N) f32 with optional fused bias + tanh epilogue."""
    M, K = a.shape
    K2, N = b.shape
    assert K == K2
    if bias is None:
        bias = jnp.zeros((N,), jnp.float32)

    # Aligned, VMEM-safe tiles on v5e / v6e / v7x.
    bm = min(256, _round_up(M, 8))
    m_pad = _round_up(M, bm)
    n_pad = _round_up(N, 128)
    tn = 256 if n_pad % 256 == 0 else 128
    k_pad = _round_up(K, 128)
    if k_pad <= 512:
        tk = k_pad
    else:
        tk = 512
        k_pad = _round_up(K, tk)

    a_p = jnp.pad(a.astype(jnp.bfloat16), ((0, m_pad - M), (0, k_pad - K)))
    b_p = jnp.pad(b.astype(jnp.bfloat16), ((0, k_pad - K), (0, n_pad - N)))
    bias_p = jnp.pad(bias.astype(jnp.float32), (0, n_pad - N)).reshape(1, n_pad)

    out = pl.pallas_call(
        functools.partial(_matmul_kernel, activation=activation),
        out_shape=jax.ShapeDtypeStruct((m_pad, n_pad), jnp.float32),
        grid=(m_pad // bm, n_pad // tn, k_pad // tk),
        in_specs=[pl.BlockSpec((bm, tk), lambda i, j, k: (i, k)),
                  pl.BlockSpec((tk, tn), lambda i, j, k: (k, j)),
                  pl.BlockSpec((1, tn), lambda i, j, k: (0, j))],
        out_specs=pl.BlockSpec((bm, tn), lambda i, j, k: (i, j)),
        scratch_shapes=[pltpu.VMEM((bm, tn), jnp.float32)],
        compiler_params=pltpu.CompilerParams(
            dimension_semantics=("parallel", "parallel", "arbitrary")),
    )(a_p, b_p, bias_p)
    return out[:M, :N]


# ----------------------------------------------------------------------------
# BatchNorm2d (train mode) + ReLU: two-pass, M-tiled
# ----------------------------------------------------------------------------
def _bn_stats_kernel(x_ref, s_ref, ss_ref):
    @pl.when(pl.program_id(0) == 0)
    def _init():
        s_ref[...] = jnp.zeros_like(s_ref)
        ss_ref[...] = jnp.zeros_like(ss_ref)

    x = x_ref[...]
    s_ref[...] += jnp.sum(x, axis=0, keepdims=True)
    ss_ref[...] += jnp.sum(x * x, axis=0, keepdims=True)


def _scale_shift_relu_kernel(x_ref, sc_ref, sh_ref, o_ref):
    o_ref[...] = jnp.maximum(x_ref[...] * sc_ref[...] + sh_ref[...], 0.0)


def pallas_batchnorm_relu(x2d, gamma, beta, eps=1e-5):
    """x2d: (M, C) f32.  Batch statistics over all M rows (PyTorch train())."""
    M, C = x2d.shape
    bm = min(512, _round_up(M, 8))
    m_pad = _round_up(M, bm)
    x_p = jnp.pad(x2d, ((0, m_pad - M), (0, 0)))   # zero rows don't affect sums
    grid = (m_pad // bm,)

    s, ss = pl.pallas_call(
        _bn_stats_kernel,
        out_shape=(jax.ShapeDtypeStruct((1, C), jnp.float32),
                   jax.ShapeDtypeStruct((1, C), jnp.float32)),
        grid=grid,
        in_specs=[pl.BlockSpec((bm, C), lambda i: (i, 0))],
        out_specs=(pl.BlockSpec((1, C), lambda i: (0, 0)),
                   pl.BlockSpec((1, C), lambda i: (0, 0))),
        compiler_params=pltpu.CompilerParams(
            dimension_semantics=("arbitrary",)),
    )(x_p)

    mean = s / M
    var = ss / M - mean * mean              # biased variance, like PyTorch train()
    inv = jax.lax.rsqrt(var + eps)
    scale = gamma.reshape(1, C) * inv
    shift = beta.reshape(1, C) - mean * scale
    # TODO(synk): running_mean/var are not tracked (eval-mode BN unsupported).

    y = pl.pallas_call(
        _scale_shift_relu_kernel,
        out_shape=jax.ShapeDtypeStruct((m_pad, C), jnp.float32),
        grid=grid,
        in_specs=[pl.BlockSpec((bm, C), lambda i: (i, 0)),
                  pl.BlockSpec((1, C), lambda i: (0, 0)),
                  pl.BlockSpec((1, C), lambda i: (0, 0))],
        out_specs=pl.BlockSpec((bm, C), lambda i: (i, 0)),
        compiler_params=pltpu.CompilerParams(
            dimension_semantics=("parallel",)),
    )(x_p, scale, shift)
    return y[:M]


# ----------------------------------------------------------------------------
# ConvTranspose2d (k=4, s=2) via 4-phase (sub-pixel) decomposition + matmul
# ----------------------------------------------------------------------------
def conv_transpose_phase(x, w_t, stride, padding, bias=None, activation=None,
                         c_out_pad=None):
    """x: (N, H, W, C_in) NHWC.  w_t: PyTorch ConvTranspose2d weight
    (C_in, C_out, 4, 4).  Returns NHWC (N, H_out, W_out, C_out).

    out[ho, wo] = sum_{hi,ki: 2*hi - p + ki = ho} x[hi] * w[ki]; for each output
    phase (pa, pb) = ((ho+p)%2, (wo+p)%2) only taps ki in {pa, pa+2},
    kj in {pb, pb+2} contribute, so one matmul with 4*C_in rows and
    4*C_out columns computes all phases without touching the stride-2 zeros."""
    N, H, W, C_in = x.shape
    C_in2, C_out, k, k2 = w_t.shape
    assert (k, k2, stride) == (4, 4, 2) and C_in == C_in2
    H_out = (H - 1) * stride - 2 * padding + k
    W_out = (W - 1) * stride - 2 * padding + k

    if c_out_pad is None:
        c_out_pad = C_out
    w_p = jnp.pad(w_t, ((0, 0), (0, c_out_pad - C_out), (0, 0), (0, 0)))
    if bias is not None:
        bias_cols = jnp.tile(jnp.pad(bias, (0, c_out_pad - C_out)), 4)
    else:
        bias_cols = None

    # A slab: rows (n, t, r) with t in 0..H, r in 0..W; columns = 4 taps * C_in,
    # tap (dki, dkj) value = x[t - dki, r - dkj] (zero outside the image).
    xpad = jnp.pad(x, ((0, 0), (1, 1), (1, 1), (0, 0)))
    Ht, Wt = H + 1, W + 1
    taps = [xpad[:, 1 - dki:1 - dki + Ht, 1 - dkj:1 - dkj + Wt, :]
            for dki in (0, 1) for dkj in (0, 1)]
    a = jnp.concatenate(taps, axis=-1).reshape(N * Ht * Wt, 4 * C_in)

    # B: rows (dki, dkj, ci) -> cols (pa, pb, co), value w[ci, co, 2*dki+pa, 2*dkj+pb].
    wr = w_p.reshape(C_in, c_out_pad, 2, 2, 2, 2)            # (ci, co, dki, pa, dkj, pb)
    b_mat = wr.transpose(2, 4, 0, 3, 5, 1).reshape(4 * C_in, 4 * c_out_pad)

    out = pallas_matmul(a, b_mat, bias=bias_cols, activation=activation)

    # Un-interleave phases: output pixel (2t+pa, 2r+pb) lives at index (t,r,pa,pb).
    out = out.reshape(N, Ht, Wt, 2, 2, c_out_pad)
    out = out.transpose(0, 1, 3, 2, 4, 5).reshape(N, 2 * Ht, 2 * Wt, c_out_pad)
    return out[:, padding:padding + H_out, padding:padding + W_out, :C_out]


# ----------------------------------------------------------------------------
# Generator parameters + forward
# ----------------------------------------------------------------------------
def init_generator_params(key, z_dim, channels_img, features_g,
                          num_classes, embed_size):
    ks = jax.random.split(key, 6)

    def w(k, shape, scale=0.05):
        return jax.random.normal(k, shape, jnp.float32) * scale

    chs = [z_dim + embed_size, features_g * 16, features_g * 8,
           features_g * 4, features_g * 2]
    blocks = []
    for i in range(4):
        blocks.append({
            "w": w(ks[i], (chs[i], chs[i + 1], 4, 4)),      # ConvT, bias=False
            "gamma": jnp.ones((chs[i + 1],), jnp.float32),  # BN weight init
            "beta": jnp.zeros((chs[i + 1],), jnp.float32),  # BN bias init
        })
    return {
        "blocks": blocks,
        "final_w": w(ks[4], (features_g * 2, channels_img, 4, 4)),
        "final_b": jnp.zeros((channels_img,), jnp.float32),  # ConvT bias=True
        "embed": w(ks[5], (num_classes, embed_size), scale=1.0),
    }


def generator_forward(params, x, labels):
    """x: (N, z_dim, 1, 1) NCHW; labels: (N,) int32 -> (N, C_img, 64, 64)."""
    emb = params["embed"][labels]                      # (N, embed_size), glue gather
    N = x.shape[0]
    h = jnp.concatenate([x.reshape(N, -1), emb], axis=1)   # cat on channel dim
    h = h[:, None, None, :]                            # NHWC (N, 1, 1, z+E)

    strides_pads = [(2, 0), (2, 1), (2, 1), (2, 1)]
    for blk, (s, p) in zip(params["blocks"], strides_pads):
        h = conv_transpose_phase(h, blk["w"], s, p)
        Nb, H, W, C = h.shape
        h = pallas_batchnorm_relu(h.reshape(Nb * H * W, C),
                                  blk["gamma"], blk["beta"]).reshape(Nb, H, W, C)

    # Final layer: bias + tanh fused into the matmul epilogue; channels padded
    # to 32 per phase (4*32 = 128 lanes) for lane-dense stores, sliced after.
    c_img = params["final_w"].shape[1]
    h = conv_transpose_phase(h, params["final_w"], 2, 1,
                             bias=params["final_b"], activation="tanh",
                             c_out_pad=_round_up(c_img, 32))
    return jnp.transpose(h, (0, 3, 1, 2))              # back to NCHW


# ----------------------------------------------------------------------------
if __name__ == "__main__":
    z_dim, channels_img, features_g = 8, 3, 4
    num_classes, img_size, embed_size = 10, 64, 8
    batch = 2

    key = jax.random.PRNGKey(0)
    kp, kx, kl = jax.random.split(key, 3)
    params = init_generator_params(kp, z_dim, channels_img, features_g,
                                   num_classes, embed_size)
    x = jax.random.normal(kx, (batch, z_dim, 1, 1), jnp.float32)
    labels = jax.random.randint(kl, (batch,), 0, num_classes)

    fwd = jax.jit(generator_forward)
    out = jax.block_until_ready(fwd(params, x, labels))

    assert out.shape == (batch, channels_img, img_size, img_size), out.shape
    assert bool(jnp.all(jnp.isfinite(out)))
    print("KERNEL_OK")
</pallas_src>

<mosaic_0001>
module attributes {stable_mosaic.version = 11 : i64} {
  func.func @_matmul_kernel(%arg0: i32, %arg1: i32, %arg2: i32, %arg3: memref<8x128xbf16, #tpu.memory_space<vmem>>, %arg4: memref<128x256xbf16, #tpu.memory_space<vmem>>, %arg5: memref<1x256xf32, #tpu.memory_space<vmem>>, %arg6: memref<8x256xf32, #tpu.memory_space<vmem>>, %arg7: memref<8x256xf32, #tpu.memory_space<vmem>>) attributes {dimension_semantics = [#tpu.dimension_semantics<parallel>, #tpu.dimension_semantics<parallel>, #tpu.dimension_semantics<arbitrary>], iteration_bounds = array<i64: 1, 1, 1>, scalar_prefetch = 0 : i64, scratch_operands = 1 : i64, tpu.core_type = #tpu.core_type<tc>, window_params = [{transform_indices = @transform_0, window_bounds = array<i64: 8, 128>}, {transform_indices = @transform_1, window_bounds = array<i64: 128, 256>}, {transform_indices = @transform_2, window_bounds = array<i64: 1, 256>}, {transform_indices = @transform_3, window_bounds = array<i64: 8, 256>}]} {
    %c0_i32 = arith.constant 0 : i32
    %0 = arith.cmpi eq, %arg2, %c0_i32 : i32
    %1 = arith.extui %0 : i1 to i32
    %c0_i32_0 = arith.constant 0 : i32
    %2 = arith.cmpi ne, %1, %c0_i32_0 : i32
    scf.if %2 {
      %cst_10 = arith.constant 0.000000e+00 : f32
      %12 = vector.broadcast %cst_10 : f32 to vector<8x256xf32>
      %c0_11 = arith.constant 0 : index
      %c0_12 = arith.constant 0 : index
      %13 = vector.load %arg7[%c0_11, %c0_12] : memref<8x256xf32, #tpu.memory_space<vmem>>, vector<8x256xf32>
      tpu.vector_store %arg7[%c0_11, %c0_12], %12 {strides = array<i32>} : memref<8x256xf32, #tpu.memory_space<vmem>>, vector<8x256xf32>,
    } else {
    }
    %c0 = arith.constant 0 : index
    %c0_1 = arith.constant 0 : index
    %3 = vector.load %arg7[%c0, %c0_1] : memref<8x256xf32, #tpu.memory_space<vmem>>, vector<8x256xf32>
    %c0_2 = arith.constant 0 : index
    %c0_3 = arith.constant 0 : index
    %4 = vector.load %arg3[%c0_2, %c0_3] : memref<8x128xbf16, #tpu.memory_space<vmem>>, vector<8x128xbf16>
    %c0_4 = arith.constant 0 : index
    %c0_5 = arith.constant 0 : index
    %5 = vector.load %arg4[%c0_4, %c0_5] : memref<128x256xbf16, #tpu.memory_space<vmem>>, vector<128x256xbf16>
    %cst = arith.constant dense<0.000000e+00> : vector<8x256xf32>
    %6 = tpu.matmul %4, %5, %cst {dimension_numbers = #tpu.dot_dimension_numbers<[1], [0], [0], [1], [0, 0, 1, 1], [], []>} : vector<8x128xbf16>, vector<128x256xbf16>, vector<8x256xf32> -> vector<8x256xf32>
    %7 = arith.addf %3, %6 : vector<8x256xf32>
    %c0_6 = arith.constant 0 : index
    %c0_7 = arith.constant 0 : index
    %8 = vector.load %arg7[%c0_6, %c0_7] : memref<8x256xf32, #tpu.memory_space<vmem>>, vector<8x256xf32>
    tpu.vector_store %arg7[%c0_6, %c0_7], %7 {strides = array<i32>} : memref<8x256xf32, #tpu.memory_space<vmem>>, vector<8x256xf32>,
    %c0_i32_8 = arith.constant 0 : i32
    %9 = arith.cmpi eq, %arg2, %c0_i32_8 : i32
    %10 = arith.extui %9 : i1 to i32
    %c0_i32_9 = arith.constant 0 : i32
    %11 = arith.cmpi ne, %10, %c0_i32_9 : i32
    scf.if %11 {
      %c0_10 = arith.constant 0 : index
      %c0_11 = arith.constant 0 : index
      %12 = vector.load %arg7[%c0_10, %c0_11] : memref<8x256xf32, #tpu.memory_space<vmem>>, vector<8x256xf32>
      %c0_12 = arith.constant 0 : index
      %c0_13 = arith.constant 0 : index
      %13 = vector.load %arg5[%c0_12, %c0_13] : memref<1x256xf32, #tpu.memory_space<vmem>>, vector<1x256xf32>
      %14 = vector.broadcast %13 : vector<1x256xf32> to vector<8x256xf32>
      %15 = arith.addf %12, %14 : vector<8x256xf32>
      %c0_14 = arith.constant 0 : index
      %c0_15 = arith.constant 0 : index
      %16 = vector.load %arg6[%c0_14, %c0_15] : memref<8x256xf32, #tpu.memory_space<vmem>>, vector<8x256xf32>
      tpu.vector_store %arg6[%c0_14, %c0_15], %15 {strides = array<i32>} : memref<8x256xf32, #tpu.memory_space<vmem>>, vector<8x256xf32>,
    } else {
    }
    return
  }
  func.func @transform_0(%arg0: i32, %arg1: i32, %arg2: i32) -> (i32, i32) {
    %c0_i32 = arith.constant 0 : i32
    return %arg0, %arg2 : i32, i32
  }
  func.func @transform_1(%arg0: i32, %arg1: i32, %arg2: i32) -> (i32, i32) {
    %c0_i32 = arith.constant 0 : i32
    return %arg2, %arg1 : i32, i32
  }
  func.func @transform_2(%arg0: i32, %arg1: i32, %arg2: i32) -> (i32, i32) {
    %c0_i32 = arith.constant 0 : i32
    %c0_i32_0 = arith.constant 0 : i32
    return %c0_i32, %arg1 : i32, i32
  }
  func.func @transform_3(%arg0: i32, %arg1: i32, %arg2: i32) -> (i32, i32) {
    %c0_i32 = arith.constant 0 : i32
    return %arg0, %arg1 : i32, i32
  }
}

module attributes {stable_mosaic.version = 11 : i64} {
  func.func @_bn_stats_kernel(%arg0: i32, %arg1: memref<32x64xf32, #tpu.memory_space<vmem>>, %arg2: memref<1x64xf32, #tpu.memory_space<vmem>>, %arg3: memref<1x64xf32, #tpu.memory_space<vmem>>) attributes {dimension_semantics = [#tpu.dimension_semantics<arbitrary>], iteration_bounds = array<i64: 1>, scalar_prefetch = 0 : i64, scratch_operands = 0 : i64, tpu.core_type = #tpu.core_type<tc>, window_params = [{transform_indices = @transform_0, window_bounds = array<i64: 32, 64>}, {pipeline_mode = #tpu.pipeline_mode<synchronous>, transform_indices = @transform_1, window_bounds = array<i64: 1, 64>}, {pipeline_mode = #tpu.pipeline_mode<synchronous>, transform_indices = @transform_2, window_bounds = array<i64: 1, 64>}]} {
    %c0_i32 = arith.constant 0 : i32
    %0 = arith.cmpi eq, %arg0, %c0_i32 : i32
    %1 = arith.extui %0 : i1 to i32
    %c0_i32_0 = arith.constant 0 : i32
    %2 = arith.cmpi ne, %1, %c0_i32_0 : i32
    scf.if %2 {
      %cst_11 = arith.constant 0.000000e+00 : f32
      %15 = vector.broadcast %cst_11 : f32 to vector<1x64xf32>
      %c0_12 = arith.constant 0 : index
      %c0_13 = arith.constant 0 : index
      %16 = vector.load %arg2[%c0_12, %c0_13] : memref<1x64xf32, #tpu.memory_space<vmem>>, vector<1x64xf32>
      tpu.vector_store %arg2[%c0_12, %c0_13], %15 {strides = array<i32>} : memref<1x64xf32, #tpu.memory_space<vmem>>, vector<1x64xf32>,
      %cst_14 = arith.constant 0.000000e+00 : f32
      %17 = vector.broadcast %cst_14 : f32 to vector<1x64xf32>
      %c0_15 = arith.constant 0 : index
      %c0_16 = arith.constant 0 : index
      %18 = vector.load %arg3[%c0_15, %c0_16] : memref<1x64xf32, #tpu.memory_space<vmem>>, vector<1x64xf32>
      tpu.vector_store %arg3[%c0_15, %c0_16], %17 {strides = array<i32>} : memref<1x64xf32, #tpu.memory_space<vmem>>, vector<1x64xf32>,
    } else {
    }
    %c0 = arith.constant 0 : index
    %c0_1 = arith.constant 0 : index
    %3 = vector.load %arg1[%c0, %c0_1] : memref<32x64xf32, #tpu.memory_space<vmem>>, vector<32x64xf32>
    %c0_2 = arith.constant 0 : index
    %c0_3 = arith.constant 0 : index
    %4 = vector.load %arg2[%c0_2, %c0_3] : memref<1x64xf32, #tpu.memory_space<vmem>>, vector<1x64xf32>
    %cst = arith.constant dense<0.000000e+00> : vector<64xf32>
    %5 = vector.multi_reduction <add>, %3, %cst [0] : vector<32x64xf32> to vector<64xf32>
    %6 = vector.shape_cast %5 : vector<64xf32> to vector<1x64xf32>
    %7 = arith.addf %4, %6 : vector<1x64xf32>
    %c0_4 = arith.constant 0 : index
    %c0_5 = arith.constant 0 : index
    %8 = vector.load %arg2[%c0_4, %c0_5] : memref<1x64xf32, #tpu.memory_space<vmem>>, vector<1x64xf32>
    tpu.vector_store %arg2[%c0_4, %c0_5], %7 {strides = array<i32>} : memref<1x64xf32, #tpu.memory_space<vmem>>, vector<1x64xf32>,
    %c0_6 = arith.constant 0 : index
    %c0_7 = arith.constant 0 : index
    %9 = vector.load %arg3[%c0_6, %c0_7] : memref<1x64xf32, #tpu.memory_space<vmem>>, vector<1x64xf32>
    %10 = arith.mulf %3, %3 : vector<32x64xf32>
    %cst_8 = arith.constant dense<0.000000e+00> : vector<64xf32>
    %11 = vector.multi_reduction <add>, %10, %cst_8 [0] : vector<32x64xf32> to vector<64xf32>
    %12 = vector.shape_cast %11 : vector<64xf32> to vector<1x64xf32>
    %13 = arith.addf %9, %12 : vector<1x64xf32>
    %c0_9 = arith.constant 0 : index
    %c0_10 = arith.constant 0 : index
    %14 = vector.load %arg3[%c0_9, %c0_10] : memref<1x64xf32, #tpu.memory_space<vmem>>, vector<1x64xf32>
    tpu.vector_store %arg3[%c0_9, %c0_10], %13 {strides = array<i32>} : memref<1x64xf32, #tpu.memory_space<vmem>>, vector<1x64xf32>,
    return
  }
  func.func @transform_0(%arg0: i32) -> (i32, i32) {
    %c0_i32 = arith.constant 0 : i32
    %c0_i32_0 = arith.constant 0 : i32
    return %arg0, %c0_i32 : i32, i32
  }
  func.func @transform_1(%arg0: i32) -> (i32, i32) {
    %c0_i32 = arith.constant 0 : i32
    %c0_i32_0 = arith.constant 0 : i32
    %c0_i32_1 = arith.constant 0 : i32
    return %c0_i32, %c0_i32_0 : i32, i32
  }
  func.func @transform_2(%arg0: i32) -> (i32, i32) {
    %c0_i32 = arith.constant 0 : i32
    %c0_i32_0 = arith.constant 0 : i32
    %c0_i32_1 = arith.constant 0 : i32
    return %c0_i32, %c0_i32_0 : i32, i32
  }
}

module attributes {stable_mosaic.version = 11 : i64} {
  func.func @_scale_shift_relu_kernel(%arg0: i32, %arg1: memref<32x64xf32, #tpu.memory_space<vmem>>, %arg2: memref<1x64xf32, #tpu.memory_space<vmem>>, %arg3: memref<1x64xf32, #tpu.memory_space<vmem>>, %arg4: memref<32x64xf32, #tpu.memory_space<vmem>>) attributes {dimension_semantics = [#tpu.dimension_semantics<parallel>], iteration_bounds = array<i64: 1>, scalar_prefetch = 0 : i64, scratch_operands = 0 : i64, tpu.core_type = #tpu.core_type<tc>, window_params = [{transform_indices = @transform_0, window_bounds = array<i64: 32, 64>}, {pipeline_mode = #tpu.pipeline_mode<synchronous>, transform_indices = @transform_1, window_bounds = array<i64: 1, 64>}, {pipeline_mode = #tpu.pipeline_mode<synchronous>, transform_indices = @transform_2, window_bounds = array<i64: 1, 64>}, {transform_indices = @transform_3, window_bounds = array<i64: 32, 64>}]} {
    %c0 = arith.constant 0 : index
    %c0_0 = arith.constant 0 : index
    %0 = vector.load %arg1[%c0, %c0_0] : memref<32x64xf32, #tpu.memory_space<vmem>>, vector<32x64xf32>
    %c0_1 = arith.constant 0 : index
    %c0_2 = arith.constant 0 : index
    %1 = vector.load %arg2[%c0_1, %c0_2] : memref<1x64xf32, #tpu.memory_space<vmem>>, vector<1x64xf32>
    %2 = vector.broadcast %1 : vector<1x64xf32> to vector<32x64xf32>
    %3 = arith.mulf %0, %2 : vector<32x64xf32>
    %c0_3 = arith.constant 0 : index
    %c0_4 = arith.constant 0 : index
    %4 = vector.load %arg3[%c0_3, %c0_4] : memref<1x64xf32, #tpu.memory_space<vmem>>, vector<1x64xf32>
    %5 = vector.broadcast %4 : vector<1x64xf32> to vector<32x64xf32>
    %6 = arith.addf %3, %5 : vector<32x64xf32>
    %cst = arith.constant 0.000000e+00 : f32
    %7 = vector.broadcast %cst : f32 to vector<32x64xf32>
    %8 = arith.maximumf %6, %7 : vector<32x64xf32>
    %c0_5 = arith.constant 0 : index
    %c0_6 = arith.constant 0 : index
    %9 = vector.load %arg4[%c0_5, %c0_6] : memref<32x64xf32, #tpu.memory_space<vmem>>, vector<32x64xf32>
    tpu.vector_store %arg4[%c0_5, %c0_6], %8 {strides = array<i32>} : memref<32x64xf32, #tpu.memory_space<vmem>>, vector<32x64xf32>,
    return
  }
  func.func @transform_0(%arg0: i32) -> (i32, i32) {
    %c0_i32 = arith.constant 0 : i32
    %c0_i32_0 = arith.constant 0 : i32
    return %arg0, %c0_i32 : i32, i32
  }
  func.func @transform_1(%arg0: i32) -> (i32, i32) {
    %c0_i32 = arith.constant 0 : i32
    %c0_i32_0 = arith.constant 0 : i32
    %c0_i32_1 = arith.constant 0 : i32
    return %c0_i32, %c0_i32_0 : i32, i32
  }
  func.func @transform_2(%arg0: i32) -> (i32, i32) {
    %c0_i32 = arith.constant 0 : i32
    %c0_i32_0 = arith.constant 0 : i32
    %c0_i32_1 = arith.constant 0 : i32
    return %c0_i32, %c0_i32_0 : i32, i32
  }
  func.func @transform_3(%arg0: i32) -> (i32, i32) {
    %c0_i32 = arith.constant 0 : i32
    %c0_i32_0 = arith.constant 0 : i32
    return %arg0, %c0_i32 : i32, i32
  }
}

module attributes {stable_mosaic.version = 11 : i64} {
  func.func @_matmul_kernel(%arg0: i32, %arg1: i32, %arg2: i32, %arg3: memref<56x256xbf16, #tpu.memory_space<vmem>>, %arg4: memref<256x128xbf16, #tpu.memory_space<vmem>>, %arg5: memref<1x128xf32, #tpu.memory_space<vmem>>, %arg6: memref<56x128xf32, #tpu.memory_space<vmem>>, %arg7: memref<56x128xf32, #tpu.memory_space<vmem>>) attributes {dimension_semantics = [#tpu.dimension_semantics<parallel>, #tpu.dimension_semantics<parallel>, #tpu.dimension_semantics<arbitrary>], iteration_bounds = array<i64: 1, 1, 1>, scalar_prefetch = 0 : i64, scratch_operands = 1 : i64, tpu.core_type = #tpu.core_type<tc>, window_params = [{transform_indices = @transform_0, window_bounds = array<i64: 56, 256>}, {transform_indices = @transform_1, window_bounds = array<i64: 256, 128>}, {transform_indices = @transform_2, window_bounds = array<i64: 1, 128>}, {transform_indices = @transform_3, window_bounds = array<i64: 56, 128>}]} {
    %c0_i32 = arith.constant 0 : i32
    %0 = arith.cmpi eq, %arg2, %c0_i32 : i32
    %1 = arith.extui %0 : i1 to i32
    %c0_i32_0 = arith.constant 0 : i32
    %2 = arith.cmpi ne, %1, %c0_i32_0 : i32
    scf.if %2 {
      %cst_10 = arith.constant 0.000000e+00 : f32
      %12 = vector.broadcast %cst_10 : f32 to vector<56x128xf32>
      %c0_11 = arith.constant 0 : index
      %c0_12 = arith.constant 0 : index
      %13 = vector.load %arg7[%c0_11, %c0_12] : memref<56x128xf32, #tpu.memory_space<vmem>>, vector<56x128xf32>
      tpu.vector_store %arg7[%c0_11, %c0_12], %12 {strides = array<i32>} : memref<56x128xf32, #tpu.memory_space<vmem>>, vector<56x128xf32>,
    } else {
    }
    %c0 = arith.constant 0 : index
    %c0_1 = arith.constant 0 : index
    %3 = vector.load %arg7[%c0, %c0_1] : memref<56x128xf32, #tpu.memory_space<vmem>>, vector<56x128xf32>
    %c0_2 = arith.constant 0 : index
    %c0_3 = arith.constant 0 : index
    %4 = vector.load %arg3[%c0_2, %c0_3] : memref<56x256xbf16, #tpu.memory_space<vmem>>, vector<56x256xbf16>
    %c0_4 = arith.constant 0 : index
    %c0_5 = arith.constant 0 : index
    %5 = vector.load %arg4[%c0_4, %c0_5] : memref<256x128xbf16, #tpu.memory_space<vmem>>, vector<256x128xbf16>
    %cst = arith.constant dense<0.000000e+00> : vector<56x128xf32>
    %6 = tpu.matmul %4, %5, %cst {dimension_numbers = #tpu.dot_dimension_numbers<[1], [0], [0], [1], [0, 0, 1, 1], [], []>} : vector<56x256xbf16>, vector<256x128xbf16>, vector<56x128xf32> -> vector<56x128xf32>
    %7 = arith.addf %3, %6 : vector<56x128xf32>
    %c0_6 = arith.constant 0 : index
    %c0_7 = arith.constant 0 : index
    %8 = vector.load %arg7[%c0_6, %c0_7] : memref<56x128xf32, #tpu.memory_space<vmem>>, vector<56x128xf32>
    tpu.vector_store %arg7[%c0_6, %c0_7], %7 {strides = array<i32>} : memref<56x128xf32, #tpu.memory_space<vmem>>, vector<56x128xf32>,
    %c0_i32_8 = arith.constant 0 : i32
    %9 = arith.cmpi eq, %arg2, %c0_i32_8 : i32
    %10 = arith.extui %9 : i1 to i32
    %c0_i32_9 = arith.constant 0 : i32
    %11 = arith.cmpi ne, %10, %c0_i32_9 : i32
    scf.if %11 {
      %c0_10 = arith.constant 0 : index
      %c0_11 = arith.constant 0 : index
      %12 = vector.load %arg7[%c0_10, %c0_11] : memref<56x128xf32, #tpu.memory_space<vmem>>, vector<56x128xf32>
      %c0_12 = arith.constant 0 : index
      %c0_13 = arith.constant 0 : index
      %13 = vector.load %arg5[%c0_12, %c0_13] : memref<1x128xf32, #tpu.memory_space<vmem>>, vector<1x128xf32>
      %14 = vector.broadcast %13 : vector<1x128xf32> to vector<56x128xf32>
      %15 = arith.addf %12, %14 : vector<56x128xf32>
      %c0_14 = arith.constant 0 : index
      %c0_15 = arith.constant 0 : index
      %16 = vector.load %arg6[%c0_14, %c0_15] : memref<56x128xf32, #tpu.memory_space<vmem>>, vector<56x128xf32>
      tpu.vector_store %arg6[%c0_14, %c0_15], %15 {strides = array<i32>} : memref<56x128xf32, #tpu.memory_space<vmem>>, vector<56x128xf32>,
    } else {
    }
    return
  }
  func.func @transform_0(%arg0: i32, %arg1: i32, %arg2: i32) -> (i32, i32) {
    %c0_i32 = arith.constant 0 : i32
    return %arg0, %arg2 : i32, i32
  }
  func.func @transform_1(%arg0: i32, %arg1: i32, %arg2: i32) -> (i32, i32) {
    %c0_i32 = arith.constant 0 : i32
    return %arg2, %arg1 : i32, i32
  }
  func.func @transform_2(%arg0: i32, %arg1: i32, %arg2: i32) -> (i32, i32) {
    %c0_i32 = arith.constant 0 : i32
    %c0_i32_0 = arith.constant 0 : i32
    return %c0_i32, %arg1 : i32, i32
  }
  func.func @transform_3(%arg0: i32, %arg1: i32, %arg2: i32) -> (i32, i32) {
    %c0_i32 = arith.constant 0 : i32
    return %arg0, %arg1 : i32, i32
  }
}

module attributes {stable_mosaic.version = 11 : i64} {
  func.func @_bn_stats_kernel(%arg0: i32, %arg1: memref<128x32xf32, #tpu.memory_space<vmem>>, %arg2: memref<1x32xf32, #tpu.memory_space<vmem>>, %arg3: memref<1x32xf32, #tpu.memory_space<vmem>>) attributes {dimension_semantics = [#tpu.dimension_semantics<arbitrary>], iteration_bounds = array<i64: 1>, scalar_prefetch = 0 : i64, scratch_operands = 0 : i64, tpu.core_type = #tpu.core_type<tc>, window_params = [{transform_indices = @transform_0, window_bounds = array<i64: 128, 32>}, {pipeline_mode = #tpu.pipeline_mode<synchronous>, transform_indices = @transform_1, window_bounds = array<i64: 1, 32>}, {pipeline_mode = #tpu.pipeline_mode<synchronous>, transform_indices = @transform_2, window_bounds = array<i64: 1, 32>}]} {
    %c0_i32 = arith.constant 0 : i32
    %0 = arith.cmpi eq, %arg0, %c0_i32 : i32
    %1 = arith.extui %0 : i1 to i32
    %c0_i32_0 = arith.constant 0 : i32
    %2 = arith.cmpi ne, %1, %c0_i32_0 : i32
    scf.if %2 {
      %cst_11 = arith.constant 0.000000e+00 : f32
      %15 = vector.broadcast %cst_11 : f32 to vector<1x32xf32>
      %c0_12 = arith.constant 0 : index
      %c0_13 = arith.constant 0 : index
      %16 = vector.load %arg2[%c0_12, %c0_13] : memref<1x32xf32, #tpu.memory_space<vmem>>, vector<1x32xf32>
      tpu.vector_store %arg2[%c0_12, %c0_13], %15 {strides = array<i32>} : memref<1x32xf32, #tpu.memory_space<vmem>>, vector<1x32xf32>,
      %cst_14 = arith.constant 0.000000e+00 : f32
      %17 = vector.broadcast %cst_14 : f32 to vector<1x32xf32>
      %c0_15 = arith.constant 0 : index
      %c0_16 = arith.constant 0 : index
      %18 = vector.load %arg3[%c0_15, %c0_16] : memref<1x32xf32, #tpu.memory_space<vmem>>, vector<1x32xf32>
      tpu.vector_store %arg3[%c0_15, %c0_16], %17 {strides = array<i32>} : memref<1x32xf32, #tpu.memory_space<vmem>>, vector<1x32xf32>,
    } else {
    }
    %c0 = arith.constant 0 : index
    %c0_1 = arith.constant 0 : index
    %3 = vector.load %arg1[%c0, %c0_1] : memref<128x32xf32, #tpu.memory_space<vmem>>, vector<128x32xf32>
    %c0_2 = arith.constant 0 : index
    %c0_3 = arith.constant 0 : index
    %4 = vector.load %arg2[%c0_2, %c0_3] : memref<1x32xf32, #tpu.memory_space<vmem>>, vector<1x32xf32>
    %cst = arith.constant dense<0.000000e+00> : vector<32xf32>
    %5 = vector.multi_reduction <add>, %3, %cst [0] : vector<128x32xf32> to vector<32xf32>
    %6 = vector.shape_cast %5 : vector<32xf32> to vector<1x32xf32>
    %7 = arith.addf %4, %6 : vector<1x32xf32>
    %c0_4 = arith.constant 0 : index
    %c0_5 = arith.constant 0 : index
    %8 = vector.load %arg2[%c0_4, %c0_5] : memref<1x32xf32, #tpu.memory_space<vmem>>, vector<1x32xf32>
    tpu.vector_store %arg2[%c0_4, %c0_5], %7 {strides = array<i32>} : memref<1x32xf32, #tpu.memory_space<vmem>>, vector<1x32xf32>,
    %c0_6 = arith.constant 0 : index
    %c0_7 = arith.constant 0 : index
    %9 = vector.load %arg3[%c0_6, %c0_7] : memref<1x32xf32, #tpu.memory_space<vmem>>, vector<1x32xf32>
    %10 = arith.mulf %3, %3 : vector<128x32xf32>
    %cst_8 = arith.constant dense<0.000000e+00> : vector<32xf32>
    %11 = vector.multi_reduction <add>, %10, %cst_8 [0] : vector<128x32xf32> to vector<32xf32>
    %12 = vector.shape_cast %11 : vector<32xf32> to vector<1x32xf32>
    %13 = arith.addf %9, %12 : vector<1x32xf32>
    %c0_9 = arith.constant 0 : index
    %c0_10 = arith.constant 0 : index
    %14 = vector.load %arg3[%c0_9, %c0_10] : memref<1x32xf32, #tpu.memory_space<vmem>>, vector<1x32xf32>
    tpu.vector_store %arg3[%c0_9, %c0_10], %13 {strides = array<i32>} : memref<1x32xf32, #tpu.memory_space<vmem>>, vector<1x32xf32>,
    return
  }
  func.func @transform_0(%arg0: i32) -> (i32, i32) {
    %c0_i32 = arith.constant 0 : i32
    %c0_i32_0 = arith.constant 0 : i32
    return %arg0, %c0_i32 : i32, i32
  }
  func.func @transform_1(%arg0: i32) -> (i32, i32) {
    %c0_i32 = arith.constant 0 : i32
    %c0_i32_0 = arith.constant 0 : i32
    %c0_i32_1 = arith.constant 0 : i32
    return %c0_i32, %c0_i32_0 : i32, i32
  }
  func.func @transform_2(%arg0: i32) -> (i32, i32) {
    %c0_i32 = arith.constant 0 : i32
    %c0_i32_0 = arith.constant 0 : i32
    %c0_i32_1 = arith.constant 0 : i32
    return %c0_i32, %c0_i32_0 : i32, i32
  }
}

module attributes {stable_mosaic.version = 11 : i64} {
  func.func @_scale_shift_relu_kernel(%arg0: i32, %arg1: memref<128x32xf32, #tpu.memory_space<vmem>>, %arg2: memref<1x32xf32, #tpu.memory_space<vmem>>, %arg3: memref<1x32xf32, #tpu.memory_space<vmem>>, %arg4: memref<128x32xf32, #tpu.memory_space<vmem>>) attributes {dimension_semantics = [#tpu.dimension_semantics<parallel>], iteration_bounds = array<i64: 1>, scalar_prefetch = 0 : i64, scratch_operands = 0 : i64, tpu.core_type = #tpu.core_type<tc>, window_params = [{transform_indices = @transform_0, window_bounds = array<i64: 128, 32>}, {pipeline_mode = #tpu.pipeline_mode<synchronous>, transform_indices = @transform_1, window_bounds = array<i64: 1, 32>}, {pipeline_mode = #tpu.pipeline_mode<synchronous>, transform_indices = @transform_2, window_bounds = array<i64: 1, 32>}, {transform_indices = @transform_3, window_bounds = array<i64: 128, 32>}]} {
    %c0 = arith.constant 0 : index
    %c0_0 = arith.constant 0 : index
    %0 = vector.load %arg1[%c0, %c0_0] : memref<128x32xf32, #tpu.memory_space<vmem>>, vector<128x32xf32>
    %c0_1 = arith.constant 0 : index
    %c0_2 = arith.constant 0 : index
    %1 = vector.load %arg2[%c0_1, %c0_2] : memref<1x32xf32, #tpu.memory_space<vmem>>, vector<1x32xf32>
    %2 = vector.broadcast %1 : vector<1x32xf32> to vector<128x32xf32>
    %3 = arith.mulf %0, %2 : vector<128x32xf32>
    %c0_3 = arith.constant 0 : index
    %c0_4 = arith.constant 0 : index
    %4 = vector.load %arg3[%c0_3, %c0_4] : memref<1x32xf32, #tpu.memory_space<vmem>>, vector<1x32xf32>
    %5 = vector.broadcast %4 : vector<1x32xf32> to vector<128x32xf32>
    %6 = arith.addf %3, %5 : vector<128x32xf32>
    %cst = arith.constant 0.000000e+00 : f32
    %7 = vector.broadcast %cst : f32 to vector<128x32xf32>
    %8 = arith.maximumf %6, %7 : vector<128x32xf32>
    %c0_5 = arith.constant 0 : index
    %c0_6 = arith.constant 0 : index
    %9 = vector.load %arg4[%c0_5, %c0_6] : memref<128x32xf32, #tpu.memory_space<vmem>>, vector<128x32xf32>
    tpu.vector_store %arg4[%c0_5, %c0_6], %8 {strides = array<i32>} : memref<128x32xf32, #tpu.memory_space<vmem>>, vector<128x32xf32>,
    return
  }
  func.func @transform_0(%arg0: i32) -> (i32, i32) {
    %c0_i32 = arith.constant 0 : i32
    %c0_i32_0 = arith.constant 0 : i32
    return %arg0, %c0_i32 : i32, i32
  }
  func.func @transform_1(%arg0: i32) -> (i32, i32) {
    %c0_i32 = arith.constant 0 : i32
    %c0_i32_0 = arith.constant 0 : i32
    %c0_i32_1 = arith.constant 0 : i32
    return %c0_i32, %c0_i32_0 : i32, i32
  }
  func.func @transform_2(%arg0: i32) -> (i32, i32) {
    %c0_i32 = arith.constant 0 : i32
    %c0_i32_0 = arith.constant 0 : i32
    %c0_i32_1 = arith.constant 0 : i32
    return %c0_i32, %c0_i32_0 : i32, i32
  }
  func.func @transform_3(%arg0: i32) -> (i32, i32) {
    %c0_i32 = arith.constant 0 : i32
    %c0_i32_0 = arith.constant 0 : i32
    return %arg0, %c0_i32 : i32, i32
  }
}

module attributes {stable_mosaic.version = 11 : i64} {
  func.func @_matmul_kernel(%arg0: i32, %arg1: i32, %arg2: i32, %arg3: memref<168x128xbf16, #tpu.memory_space<vmem>>, %arg4: memref<128x128xbf16, #tpu.memory_space<vmem>>, %arg5: memref<1x128xf32, #tpu.memory_space<vmem>>, %arg6: memref<168x128xf32, #tpu.memory_space<vmem>>, %arg7: memref<168x128xf32, #tpu.memory_space<vmem>>) attributes {dimension_semantics = [#tpu.dimension_semantics<parallel>, #tpu.dimension_semantics<parallel>, #tpu.dimension_semantics<arbitrary>], iteration_bounds = array<i64: 1, 1, 1>, scalar_prefetch = 0 : i64, scratch_operands = 1 : i64, tpu.core_type = #tpu.core_type<tc>, window_params = [{transform_indices = @transform_0, window_bounds = array<i64: 168, 128>}, {transform_indices = @transform_1, window_bounds = array<i64: 128, 128>}, {transform_indices = @transform_2, window_bounds = array<i64: 1, 128>}, {transform_indices = @transform_3, window_bounds = array<i64: 168, 128>}]} {
    %c0_i32 = arith.constant 0 : i32
    %0 = arith.cmpi eq, %arg2, %c0_i32 : i32
    %1 = arith.extui %0 : i1 to i32
    %c0_i32_0 = arith.constant 0 : i32
    %2 = arith.cmpi ne, %1, %c0_i32_0 : i32
    scf.if %2 {
      %cst_10 = arith.constant 0.000000e+00 : f32
      %12 = vector.broadcast %cst_10 : f32 to vector<168x128xf32>
      %c0_11 = arith.constant 0 : index
      %c0_12 = arith.constant 0 : index
      %13 = vector.load %arg7[%c0_11, %c0_12] : memref<168x128xf32, #tpu.memory_space<vmem>>, vector<168x128xf32>
      tpu.vector_store %arg7[%c0_11, %c0_12], %12 {strides = array<i32>} : memref<168x128xf32, #tpu.memory_space<vmem>>, vector<168x128xf32>,
    } else {
    }
    %c0 = arith.constant 0 : index
    %c0_1 = arith.constant 0 : index
    %3 = vector.load %arg7[%c0, %c0_1] : memref<168x128xf32, #tpu.memory_space<vmem>>, vector<168x128xf32>
    %c0_2 = arith.constant 0 : index
    %c0_3 = arith.constant 0 : index
    %4 = vector.load %arg3[%c0_2, %c0_3] : memref<168x128xbf16, #tpu.memory_space<vmem>>, vector<168x128xbf16>
    %c0_4 = arith.constant 0 : index
    %c0_5 = arith.constant 0 : index
    %5 = vector.load %arg4[%c0_4, %c0_5] : memref<128x128xbf16, #tpu.memory_space<vmem>>, vector<128x128xbf16>
    %cst = arith.constant dense<0.000000e+00> : vector<168x128xf32>
    %6 = tpu.matmul %4, %5, %cst {dimension_numbers = #tpu.dot_dimension_numbers<[1], [0], [0], [1], [0, 0, 1, 1], [], []>} : vector<168x128xbf16>, vector<128x128xbf16>, vector<168x128xf32> -> vector<168x128xf32>
    %7 = arith.addf %3, %6 : vector<168x128xf32>
    %c0_6 = arith.constant 0 : index
    %c0_7 = arith.constant 0 : index
    %8 = vector.load %arg7[%c0_6, %c0_7] : memref<168x128xf32, #tpu.memory_space<vmem>>, vector<168x128xf32>
    tpu.vector_store %arg7[%c0_6, %c0_7], %7 {strides = array<i32>} : memref<168x128xf32, #tpu.memory_space<vmem>>, vector<168x128xf32>,
    %c0_i32_8 = arith.constant 0 : i32
    %9 = arith.cmpi eq, %arg2, %c0_i32_8 : i32
    %10 = arith.extui %9 : i1 to i32
    %c0_i32_9 = arith.constant 0 : i32
    %11 = arith.cmpi ne, %10, %c0_i32_9 : i32
    scf.if %11 {
      %c0_10 = arith.constant 0 : index
      %c0_11 = arith.constant 0 : index
      %12 = vector.load %arg7[%c0_10, %c0_11] : memref<168x128xf32, #tpu.memory_space<vmem>>, vector<168x128xf32>
      %c0_12 = arith.constant 0 : index
      %c0_13 = arith.constant 0 : index
      %13 = vector.load %arg5[%c0_12, %c0_13] : memref<1x128xf32, #tpu.memory_space<vmem>>, vector<1x128xf32>
      %14 = vector.broadcast %13 : vector<1x128xf32> to vector<168x128xf32>
      %15 = arith.addf %12, %14 : vector<168x128xf32>
      %c0_14 = arith.constant 0 : index
      %c0_15 = arith.constant 0 : index
      %16 = vector.load %arg6[%c0_14, %c0_15] : memref<168x128xf32, #tpu.memory_space<vmem>>, vector<168x128xf32>
      tpu.vector_store %arg6[%c0_14, %c0_15], %15 {strides = array<i32>} : memref<168x128xf32, #tpu.memory_space<vmem>>, vector<168x128xf32>,
    } else {
    }
    return
  }
  func.func @transform_0(%arg0: i32, %arg1: i32, %arg2: i32) -> (i32, i32) {
    %c0_i32 = arith.constant 0 : i32
    return %arg0, %arg2 : i32, i32
  }
  func.func @transform_1(%arg0: i32, %arg1: i32, %arg2: i32) -> (i32, i32) {
    %c0_i32 = arith.constant 0 : i32
    return %arg2, %arg1 : i32, i32
  }
  func.func @transform_2(%arg0: i32, %arg1: i32, %arg2: i32) -> (i32, i32) {
    %c0_i32 = arith.constant 0 : i32
    %c0_i32_0 = arith.constant 0 : i32
    return %c0_i32, %arg1 : i32, i32
  }
  func.func @transform_3(%arg0: i32, %arg1: i32, %arg2: i32) -> (i32, i32) {
    %c0_i32 = arith.constant 0 : i32
    return %arg0, %arg1 : i32, i32
  }
}

module attributes {stable_mosaic.version = 11 : i64} {
  func.func @_bn_stats_kernel(%arg0: i32, %arg1: memref<512x16xf32, #tpu.memory_space<vmem>>, %arg2: memref<1x16xf32, #tpu.memory_space<vmem>>, %arg3: memref<1x16xf32, #tpu.memory_space<vmem>>) attributes {dimension_semantics = [#tpu.dimension_semantics<arbitrary>], iteration_bounds = array<i64: 1>, scalar_prefetch = 0 : i64, scratch_operands = 0 : i64, tpu.core_type = #tpu.core_type<tc>, window_params = [{transform_indices = @transform_0, window_bounds = array<i64: 512, 16>}, {pipeline_mode = #tpu.pipeline_mode<synchronous>, transform_indices = @transform_1, window_bounds = array<i64: 1, 16>}, {pipeline_mode = #tpu.pipeline_mode<synchronous>, transform_indices = @transform_2, window_bounds = array<i64: 1, 16>}]} {
    %c0_i32 = arith.constant 0 : i32
    %0 = arith.cmpi eq, %arg0, %c0_i32 : i32
    %1 = arith.extui %0 : i1 to i32
    %c0_i32_0 = arith.constant 0 : i32
    %2 = arith.cmpi ne, %1, %c0_i32_0 : i32
    scf.if %2 {
      %cst_11 = arith.constant 0.000000e+00 : f32
      %15 = vector.broadcast %cst_11 : f32 to vector<1x16xf32>
      %c0_12 = arith.constant 0 : index
      %c0_13 = arith.constant 0 : index
      %16 = vector.load %arg2[%c0_12, %c0_13] : memref<1x16xf32, #tpu.memory_space<vmem>>, vector<1x16xf32>
      tpu.vector_store %arg2[%c0_12, %c0_13], %15 {strides = array<i32>} : memref<1x16xf32, #tpu.memory_space<vmem>>, vector<1x16xf32>,
      %cst_14 = arith.constant 0.000000e+00 : f32
      %17 = vector.broadcast %cst_14 : f32 to vector<1x16xf32>
      %c0_15 = arith.constant 0 : index
      %c0_16 = arith.constant 0 : index
      %18 = vector.load %arg3[%c0_15, %c0_16] : memref<1x16xf32, #tpu.memory_space<vmem>>, vector<1x16xf32>
      tpu.vector_store %arg3[%c0_15, %c0_16], %17 {strides = array<i32>} : memref<1x16xf32, #tpu.memory_space<vmem>>, vector<1x16xf32>,
    } else {
    }
    %c0 = arith.constant 0 : index
    %c0_1 = arith.constant 0 : index
    %3 = vector.load %arg1[%c0, %c0_1] : memref<512x16xf32, #tpu.memory_space<vmem>>, vector<512x16xf32>
    %c0_2 = arith.constant 0 : index
    %c0_3 = arith.constant 0 : index
    %4 = vector.load %arg2[%c0_2, %c0_3] : memref<1x16xf32, #tpu.memory_space<vmem>>, vector<1x16xf32>
    %cst = arith.constant dense<0.000000e+00> : vector<16xf32>
    %5 = vector.multi_reduction <add>, %3, %cst [0] : vector<512x16xf32> to vector<16xf32>
    %6 = vector.shape_cast %5 : vector<16xf32> to vector<1x16xf32>
    %7 = arith.addf %4, %6 : vector<1x16xf32>
    %c0_4 = arith.constant 0 : index
    %c0_5 = arith.constant 0 : index
    %8 = vector.load %arg2[%c0_4, %c0_5] : memref<1x16xf32, #tpu.memory_space<vmem>>, vector<1x16xf32>
    tpu.vector_store %arg2[%c0_4, %c0_5], %7 {strides = array<i32>} : memref<1x16xf32, #tpu.memory_space<vmem>>, vector<1x16xf32>,
    %c0_6 = arith.constant 0 : index
    %c0_7 = arith.constant 0 : index
    %9 = vector.load %arg3[%c0_6, %c0_7] : memref<1x16xf32, #tpu.memory_space<vmem>>, vector<1x16xf32>
    %10 = arith.mulf %3, %3 : vector<512x16xf32>
    %cst_8 = arith.constant dense<0.000000e+00> : vector<16xf32>
    %11 = vector.multi_reduction <add>, %10, %cst_8 [0] : vector<512x16xf32> to vector<16xf32>
    %12 = vector.shape_cast %11 : vector<16xf32> to vector<1x16xf32>
    %13 = arith.addf %9, %12 : vector<1x16xf32>
    %c0_9 = arith.constant 0 : index
    %c0_10 = arith.constant 0 : index
    %14 = vector.load %arg3[%c0_9, %c0_10] : memref<1x16xf32, #tpu.memory_space<vmem>>, vector<1x16xf32>
    tpu.vector_store %arg3[%c0_9, %c0_10], %13 {strides = array<i32>} : memref<1x16xf32, #tpu.memory_space<vmem>>, vector<1x16xf32>,
    return
  }
  func.func @transform_0(%arg0: i32) -> (i32, i32) {
    %c0_i32 = arith.constant 0 : i32
    %c0_i32_0 = arith.constant 0 : i32
    return %arg0, %c0_i32 : i32, i32
  }
  func.func @transform_1(%arg0: i32) -> (i32, i32) {
    %c0_i32 = arith.constant 0 : i32
    %c0_i32_0 = arith.constant 0 : i32
    %c0_i32_1 = arith.constant 0 : i32
    return %c0_i32, %c0_i32_0 : i32, i32
  }
  func.func @transform_2(%arg0: i32) -> (i32, i32) {
    %c0_i32 = arith.constant 0 : i32
    %c0_i32_0 = arith.constant 0 : i32
    %c0_i32_1 = arith.constant 0 : i32
    return %c0_i32, %c0_i32_0 : i32, i32
  }
}

module attributes {stable_mosaic.version = 11 : i64} {
  func.func @_scale_shift_relu_kernel(%arg0: i32, %arg1: memref<512x16xf32, #tpu.memory_space<vmem>>, %arg2: memref<1x16xf32, #tpu.memory_space<vmem>>, %arg3: memref<1x16xf32, #tpu.memory_space<vmem>>, %arg4: memref<512x16xf32, #tpu.memory_space<vmem>>) attributes {dimension_semantics = [#tpu.dimension_semantics<parallel>], iteration_bounds = array<i64: 1>, scalar_prefetch = 0 : i64, scratch_operands = 0 : i64, tpu.core_type = #tpu.core_type<tc>, window_params = [{transform_indices = @transform_0, window_bounds = array<i64: 512, 16>}, {pipeline_mode = #tpu.pipeline_mode<synchronous>, transform_indices = @transform_1, window_bounds = array<i64: 1, 16>}, {pipeline_mode = #tpu.pipeline_mode<synchronous>, transform_indices = @transform_2, window_bounds = array<i64: 1, 16>}, {transform_indices = @transform_3, window_bounds = array<i64: 512, 16>}]} {
    %c0 = arith.constant 0 : index
    %c0_0 = arith.constant 0 : index
    %0 = vector.load %arg1[%c0, %c0_0] : memref<512x16xf32, #tpu.memory_space<vmem>>, vector<512x16xf32>
    %c0_1 = arith.constant 0 : index
    %c0_2 = arith.constant 0 : index
    %1 = vector.load %arg2[%c0_1, %c0_2] : memref<1x16xf32, #tpu.memory_space<vmem>>, vector<1x16xf32>
    %2 = vector.broadcast %1 : vector<1x16xf32> to vector<512x16xf32>
    %3 = arith.mulf %0, %2 : vector<512x16xf32>
    %c0_3 = arith.constant 0 : index
    %c0_4 = arith.constant 0 : index
    %4 = vector.load %arg3[%c0_3, %c0_4] : memref<1x16xf32, #tpu.memory_space<vmem>>, vector<1x16xf32>
    %5 = vector.broadcast %4 : vector<1x16xf32> to vector<512x16xf32>
    %6 = arith.addf %3, %5 : vector<512x16xf32>
    %cst = arith.constant 0.000000e+00 : f32
    %7 = vector.broadcast %cst : f32 to vector<512x16xf32>
    %8 = arith.maximumf %6, %7 : vector<512x16xf32>
    %c0_5 = arith.constant 0 : index
    %c0_6 = arith.constant 0 : index
    %9 = vector.load %arg4[%c0_5, %c0_6] : memref<512x16xf32, #tpu.memory_space<vmem>>, vector<512x16xf32>
    tpu.vector_store %arg4[%c0_5, %c0_6], %8 {strides = array<i32>} : memref<512x16xf32, #tpu.memory_space<vmem>>, vector<512x16xf32>,
    return
  }
  func.func @transform_0(%arg0: i32) -> (i32, i32) {
    %c0_i32 = arith.constant 0 : i32
    %c0_i32_0 = arith.constant 0 : i32
    return %arg0, %c0_i32 : i32, i32
  }
  func.func @transform_1(%arg0: i32) -> (i32, i32) {
    %c0_i32 = arith.constant 0 : i32
    %c0_i32_0 = arith.constant 0 : i32
    %c0_i32_1 = arith.constant 0 : i32
    return %c0_i32, %c0_i32_0 : i32, i32
  }
  func.func @transform_2(%arg0: i32) -> (i32, i32) {
    %c0_i32 = arith.constant 0 : i32
    %c0_i32_0 = arith.constant 0 : i32
    %c0_i32_1 = arith.constant 0 : i32
    return %c0_i32, %c0_i32_0 : i32, i32
  }
  func.func @transform_3(%arg0: i32) -> (i32, i32) {
    %c0_i32 = arith.constant 0 : i32
    %c0_i32_0 = arith.constant 0 : i32
    return %arg0, %c0_i32 : i32, i32
  }
}

module attributes {stable_mosaic.version = 11 : i64} {
  func.func @_matmul_kernel(%arg0: i32, %arg1: i32, %arg2: i32, %arg3: memref<256x128xbf16, #tpu.memory_space<vmem>>, %arg4: memref<128x128xbf16, #tpu.memory_space<vmem>>, %arg5: memref<1x128xf32, #tpu.memory_space<vmem>>, %arg6: memref<256x128xf32, #tpu.memory_space<vmem>>, %arg7: memref<256x128xf32, #tpu.memory_space<vmem>>) attributes {dimension_semantics = [#tpu.dimension_semantics<parallel>, #tpu.dimension_semantics<parallel>, #tpu.dimension_semantics<arbitrary>], iteration_bounds = array<i64: 3, 1, 1>, scalar_prefetch = 0 : i64, scratch_operands = 1 : i64, tpu.core_type = #tpu.core_type<tc>, window_params = [{transform_indices = @transform_0, window_bounds = array<i64: 256, 128>}, {transform_indices = @transform_1, window_bounds = array<i64: 128, 128>}, {transform_indices = @transform_2, window_bounds = array<i64: 1, 128>}, {transform_indices = @transform_3, window_bounds = array<i64: 256, 128>}]} {
    %c0_i32 = arith.constant 0 : i32
    %0 = arith.cmpi eq, %arg2, %c0_i32 : i32
    %1 = arith.extui %0 : i1 to i32
    %c0_i32_0 = arith.constant 0 : i32
    %2 = arith.cmpi ne, %1, %c0_i32_0 : i32
    scf.if %2 {
      %cst_10 = arith.constant 0.000000e+00 : f32
      %12 = vector.broadcast %cst_10 : f32 to vector<256x128xf32>
      %c0_11 = arith.constant 0 : index
      %c0_12 = arith.constant 0 : index
      %13 = vector.load %arg7[%c0_11, %c0_12] : memref<256x128xf32, #tpu.memory_space<vmem>>, vector<256x128xf32>
      tpu.vector_store %arg7[%c0_11, %c0_12], %12 {strides = array<i32>} : memref<256x128xf32, #tpu.memory_space<vmem>>, vector<256x128xf32>,
    } else {
    }
    %c0 = arith.constant 0 : index
    %c0_1 = arith.constant 0 : index
    %3 = vector.load %arg7[%c0, %c0_1] : memref<256x128xf32, #tpu.memory_space<vmem>>, vector<256x128xf32>
    %c0_2 = arith.constant 0 : index
    %c0_3 = arith.constant 0 : index
    %4 = vector.load %arg3[%c0_2, %c0_3] : memref<256x128xbf16, #tpu.memory_space<vmem>>, vector<256x128xbf16>
    %c0_4 = arith.constant 0 : index
    %c0_5 = arith.constant 0 : index
    %5 = vector.load %arg4[%c0_4, %c0_5] : memref<128x128xbf16, #tpu.memory_space<vmem>>, vector<128x128xbf16>
    %cst = arith.constant dense<0.000000e+00> : vector<256x128xf32>
    %6 = tpu.matmul %4, %5, %cst {dimension_numbers = #tpu.dot_dimension_numbers<[1], [0], [0], [1], [0, 0, 1, 1], [], []>} : vector<256x128xbf16>, vector<128x128xbf16>, vector<256x128xf32> -> vector<256x128xf32>
    %7 = arith.addf %3, %6 : vector<256x128xf32>
    %c0_6 = arith.constant 0 : index
    %c0_7 = arith.constant 0 : index
    %8 = vector.load %arg7[%c0_6, %c0_7] : memref<256x128xf32, #tpu.memory_space<vmem>>, vector<256x128xf32>
    tpu.vector_store %arg7[%c0_6, %c0_7], %7 {strides = array<i32>} : memref<256x128xf32, #tpu.memory_space<vmem>>, vector<256x128xf32>,
    %c0_i32_8 = arith.constant 0 : i32
    %9 = arith.cmpi eq, %arg2, %c0_i32_8 : i32
    %10 = arith.extui %9 : i1 to i32
    %c0_i32_9 = arith.constant 0 : i32
    %11 = arith.cmpi ne, %10, %c0_i32_9 : i32
    scf.if %11 {
      %c0_10 = arith.constant 0 : index
      %c0_11 = arith.constant 0 : index
      %12 = vector.load %arg7[%c0_10, %c0_11] : memref<256x128xf32, #tpu.memory_space<vmem>>, vector<256x128xf32>
      %c0_12 = arith.constant 0 : index
      %c0_13 = arith.constant 0 : index
      %13 = vector.load %arg5[%c0_12, %c0_13] : memref<1x128xf32, #tpu.memory_space<vmem>>, vector<1x128xf32>
      %14 = vector.broadcast %13 : vector<1x128xf32> to vector<256x128xf32>
      %15 = arith.addf %12, %14 : vector<256x128xf32>
      %c0_14 = arith.constant 0 : index
      %c0_15 = arith.constant 0 : index
      %16 = vector.load %arg6[%c0_14, %c0_15] : memref<256x128xf32, #tpu.memory_space<vmem>>, vector<256x128xf32>
      tpu.vector_store %arg6[%c0_14, %c0_15], %15 {strides = array<i32>} : memref<256x128xf32, #tpu.memory_space<vmem>>, vector<256x128xf32>,
    } else {
    }
    return
  }
  func.func @transform_0(%arg0: i32, %arg1: i32, %arg2: i32) -> (i32, i32) {
    %c0_i32 = arith.constant 0 : i32
    return %arg0, %arg2 : i32, i32
  }
  func.func @transform_1(%arg0: i32, %arg1: i32, %arg2: i32) -> (i32, i32) {
    %c0_i32 = arith.constant 0 : i32
    return %arg2, %arg1 : i32, i32
  }
  func.func @transform_2(%arg0: i32, %arg1: i32, %arg2: i32) -> (i32, i32) {
    %c0_i32 = arith.constant 0 : i32
    %c0_i32_0 = arith.constant 0 : i32
    return %c0_i32, %arg1 : i32, i32
  }
  func.func @transform_3(%arg0: i32, %arg1: i32, %arg2: i32) -> (i32, i32) {
    %c0_i32 = arith.constant 0 : i32
    return %arg0, %arg1 : i32, i32
  }
}

module attributes {stable_mosaic.version = 11 : i64} {
  func.func @_bn_stats_kernel(%arg0: i32, %arg1: memref<512x8xf32, #tpu.memory_space<vmem>>, %arg2: memref<1x8xf32, #tpu.memory_space<vmem>>, %arg3: memref<1x8xf32, #tpu.memory_space<vmem>>) attributes {dimension_semantics = [#tpu.dimension_semantics<arbitrary>], iteration_bounds = array<i64: 4>, scalar_prefetch = 0 : i64, scratch_operands = 0 : i64, tpu.core_type = #tpu.core_type<tc>, window_params = [{transform_indices = @transform_0, window_bounds = array<i64: 512, 8>}, {pipeline_mode = #tpu.pipeline_mode<synchronous>, transform_indices = @transform_1, window_bounds = array<i64: 1, 8>}, {pipeline_mode = #tpu.pipeline_mode<synchronous>, transform_indices = @transform_2, window_bounds = array<i64: 1, 8>}]} {
    %c0_i32 = arith.constant 0 : i32
    %0 = arith.cmpi eq, %arg0, %c0_i32 : i32
    %1 = arith.extui %0 : i1 to i32
    %c0_i32_0 = arith.constant 0 : i32
    %2 = arith.cmpi ne, %1, %c0_i32_0 : i32
    scf.if %2 {
      %cst_11 = arith.constant 0.000000e+00 : f32
      %15 = vector.broadcast %cst_11 : f32 to vector<1x8xf32>
      %c0_12 = arith.constant 0 : index
      %c0_13 = arith.constant 0 : index
      %16 = vector.load %arg2[%c0_12, %c0_13] : memref<1x8xf32, #tpu.memory_space<vmem>>, vector<1x8xf32>
      tpu.vector_store %arg2[%c0_12, %c0_13], %15 {strides = array<i32>} : memref<1x8xf32, #tpu.memory_space<vmem>>, vector<1x8xf32>,
      %cst_14 = arith.constant 0.000000e+00 : f32
      %17 = vector.broadcast %cst_14 : f32 to vector<1x8xf32>
      %c0_15 = arith.constant 0 : index
      %c0_16 = arith.constant 0 : index
      %18 = vector.load %arg3[%c0_15, %c0_16] : memref<1x8xf32, #tpu.memory_space<vmem>>, vector<1x8xf32>
      tpu.vector_store %arg3[%c0_15, %c0_16], %17 {strides = array<i32>} : memref<1x8xf32, #tpu.memory_space<vmem>>, vector<1x8xf32>,
    } else {
    }
    %c0 = arith.constant 0 : index
    %c0_1 = arith.constant 0 : index
    %3 = vector.load %arg1[%c0, %c0_1] : memref<512x8xf32, #tpu.memory_space<vmem>>, vector<512x8xf32>
    %c0_2 = arith.constant 0 : index
    %c0_3 = arith.constant 0 : index
    %4 = vector.load %arg2[%c0_2, %c0_3] : memref<1x8xf32, #tpu.memory_space<vmem>>, vector<1x8xf32>
    %cst = arith.constant dense<0.000000e+00> : vector<8xf32>
    %5 = vector.multi_reduction <add>, %3, %cst [0] : vector<512x8xf32> to vector<8xf32>
    %6 = vector.shape_cast %5 : vector<8xf32> to vector<1x8xf32>
    %7 = arith.addf %4, %6 : vector<1x8xf32>
    %c0_4 = arith.constant 0 : index
    %c0_5 = arith.constant 0 : index
    %8 = vector.load %arg2[%c0_4, %c0_5] : memref<1x8xf32, #tpu.memory_space<vmem>>, vector<1x8xf32>
    tpu.vector_store %arg2[%c0_4, %c0_5], %7 {strides = array<i32>} : memref<1x8xf32, #tpu.memory_space<vmem>>, vector<1x8xf32>,
    %c0_6 = arith.constant 0 : index
    %c0_7 = arith.constant 0 : index
    %9 = vector.load %arg3[%c0_6, %c0_7] : memref<1x8xf32, #tpu.memory_space<vmem>>, vector<1x8xf32>
    %10 = arith.mulf %3, %3 : vector<512x8xf32>
    %cst_8 = arith.constant dense<0.000000e+00> : vector<8xf32>
    %11 = vector.multi_reduction <add>, %10, %cst_8 [0] : vector<512x8xf32> to vector<8xf32>
    %12 = vector.shape_cast %11 : vector<8xf32> to vector<1x8xf32>
    %13 = arith.addf %9, %12 : vector<1x8xf32>
    %c0_9 = arith.constant 0 : index
    %c0_10 = arith.constant 0 : index
    %14 = vector.load %arg3[%c0_9, %c0_10] : memref<1x8xf32, #tpu.memory_space<vmem>>, vector<1x8xf32>
    tpu.vector_store %arg3[%c0_9, %c0_10], %13 {strides = array<i32>} : memref<1x8xf32, #tpu.memory_space<vmem>>, vector<1x8xf32>,
    return
  }
  func.func @transform_0(%arg0: i32) -> (i32, i32) {
    %c0_i32 = arith.constant 0 : i32
    %c0_i32_0 = arith.constant 0 : i32
    return %arg0, %c0_i32 : i32, i32
  }
  func.func @transform_1(%arg0: i32) -> (i32, i32) {
    %c0_i32 = arith.constant 0 : i32
    %c0_i32_0 = arith.constant 0 : i32
    %c0_i32_1 = arith.constant 0 : i32
    return %c0_i32, %c0_i32_0 : i32, i32
  }
  func.func @transform_2(%arg0: i32) -> (i32, i32) {
    %c0_i32 = arith.constant 0 : i32
    %c0_i32_0 = arith.constant 0 : i32
    %c0_i32_1 = arith.constant 0 : i32
    return %c0_i32, %c0_i32_0 : i32, i32
  }
}

module attributes {stable_mosaic.version = 11 : i64} {
  func.func @_scale_shift_relu_kernel(%arg0: i32, %arg1: memref<512x8xf32, #tpu.memory_space<vmem>>, %arg2: memref<1x8xf32, #tpu.memory_space<vmem>>, %arg3: memref<1x8xf32, #tpu.memory_space<vmem>>, %arg4: memref<512x8xf32, #tpu.memory_space<vmem>>) attributes {dimension_semantics = [#tpu.dimension_semantics<parallel>], iteration_bounds = array<i64: 4>, scalar_prefetch = 0 : i64, scratch_operands = 0 : i64, tpu.core_type = #tpu.core_type<tc>, window_params = [{transform_indices = @transform_0, window_bounds = array<i64: 512, 8>}, {pipeline_mode = #tpu.pipeline_mode<synchronous>, transform_indices = @transform_1, window_bounds = array<i64: 1, 8>}, {pipeline_mode = #tpu.pipeline_mode<synchronous>, transform_indices = @transform_2, window_bounds = array<i64: 1, 8>}, {transform_indices = @transform_3, window_bounds = array<i64: 512, 8>}]} {
    %c0 = arith.constant 0 : index
    %c0_0 = arith.constant 0 : index
    %0 = vector.load %arg1[%c0, %c0_0] : memref<512x8xf32, #tpu.memory_space<vmem>>, vector<512x8xf32>
    %c0_1 = arith.constant 0 : index
    %c0_2 = arith.constant 0 : index
    %1 = vector.load %arg2[%c0_1, %c0_2] : memref<1x8xf32, #tpu.memory_space<vmem>>, vector<1x8xf32>
    %2 = vector.broadcast %1 : vector<1x8xf32> to vector<512x8xf32>
    %3 = arith.mulf %0, %2 : vector<512x8xf32>
    %c0_3 = arith.constant 0 : index
    %c0_4 = arith.constant 0 : index
    %4 = vector.load %arg3[%c0_3, %c0_4] : memref<1x8xf32, #tpu.memory_space<vmem>>, vector<1x8xf32>
    %5 = vector.broadcast %4 : vector<1x8xf32> to vector<512x8xf32>
    %6 = arith.addf %3, %5 : vector<512x8xf32>
    %cst = arith.constant 0.000000e+00 : f32
    %7 = vector.broadcast %cst : f32 to vector<512x8xf32>
    %8 = arith.maximumf %6, %7 : vector<512x8xf32>
    %c0_5 = arith.constant 0 : index
    %c0_6 = arith.constant 0 : index
    %9 = vector.load %arg4[%c0_5, %c0_6] : memref<512x8xf32, #tpu.memory_space<vmem>>, vector<512x8xf32>
    tpu.vector_store %arg4[%c0_5, %c0_6], %8 {strides = array<i32>} : memref<512x8xf32, #tpu.memory_space<vmem>>, vector<512x8xf32>,
    return
  }
  func.func @transform_0(%arg0: i32) -> (i32, i32) {
    %c0_i32 = arith.constant 0 : i32
    %c0_i32_0 = arith.constant 0 : i32
    return %arg0, %c0_i32 : i32, i32
  }
  func.func @transform_1(%arg0: i32) -> (i32, i32) {
    %c0_i32 = arith.constant 0 : i32
    %c0_i32_0 = arith.constant 0 : i32
    %c0_i32_1 = arith.constant 0 : i32
    return %c0_i32, %c0_i32_0 : i32, i32
  }
  func.func @transform_2(%arg0: i32) -> (i32, i32) {
    %c0_i32 = arith.constant 0 : i32
    %c0_i32_0 = arith.constant 0 : i32
    %c0_i32_1 = arith.constant 0 : i32
    return %c0_i32, %c0_i32_0 : i32, i32
  }
  func.func @transform_3(%arg0: i32) -> (i32, i32) {
    %c0_i32 = arith.constant 0 : i32
    %c0_i32_0 = arith.constant 0 : i32
    return %arg0, %c0_i32 : i32, i32
  }
}

module attributes {stable_mosaic.version = 11 : i64} {
  func.func @_matmul_kernel(%arg0: i32, %arg1: i32, %arg2: i32, %arg3: memref<256x128xbf16, #tpu.memory_space<vmem>>, %arg4: memref<128x128xbf16, #tpu.memory_space<vmem>>, %arg5: memref<1x128xf32, #tpu.memory_space<vmem>>, %arg6: memref<256x128xf32, #tpu.memory_space<vmem>>, %arg7: memref<256x128xf32, #tpu.memory_space<vmem>>) attributes {dimension_semantics = [#tpu.dimension_semantics<parallel>, #tpu.dimension_semantics<parallel>, #tpu.dimension_semantics<arbitrary>], iteration_bounds = array<i64: 9, 1, 1>, scalar_prefetch = 0 : i64, scratch_operands = 1 : i64, tpu.core_type = #tpu.core_type<tc>, window_params = [{transform_indices = @transform_0, window_bounds = array<i64: 256, 128>}, {transform_indices = @transform_1, window_bounds = array<i64: 128, 128>}, {transform_indices = @transform_2, window_bounds = array<i64: 1, 128>}, {transform_indices = @transform_3, window_bounds = array<i64: 256, 128>}]} {
    %c0_i32 = arith.constant 0 : i32
    %0 = arith.cmpi eq, %arg2, %c0_i32 : i32
    %1 = arith.extui %0 : i1 to i32
    %c0_i32_0 = arith.constant 0 : i32
    %2 = arith.cmpi ne, %1, %c0_i32_0 : i32
    scf.if %2 {
      %cst_10 = arith.constant 0.000000e+00 : f32
      %12 = vector.broadcast %cst_10 : f32 to vector<256x128xf32>
      %c0_11 = arith.constant 0 : index
      %c0_12 = arith.constant 0 : index
      %13 = vector.load %arg7[%c0_11, %c0_12] : memref<256x128xf32, #tpu.memory_space<vmem>>, vector<256x128xf32>
      tpu.vector_store %arg7[%c0_11, %c0_12], %12 {strides = array<i32>} : memref<256x128xf32, #tpu.memory_space<vmem>>, vector<256x128xf32>,
    } else {
    }
    %c0 = arith.constant 0 : index
    %c0_1 = arith.constant 0 : index
    %3 = vector.load %arg7[%c0, %c0_1] : memref<256x128xf32, #tpu.memory_space<vmem>>, vector<256x128xf32>
    %c0_2 = arith.constant 0 : index
    %c0_3 = arith.constant 0 : index
    %4 = vector.load %arg3[%c0_2, %c0_3] : memref<256x128xbf16, #tpu.memory_space<vmem>>, vector<256x128xbf16>
    %c0_4 = arith.constant 0 : index
    %c0_5 = arith.constant 0 : index
    %5 = vector.load %arg4[%c0_4, %c0_5] : memref<128x128xbf16, #tpu.memory_space<vmem>>, vector<128x128xbf16>
    %cst = arith.constant dense<0.000000e+00> : vector<256x128xf32>
    %6 = tpu.matmul %4, %5, %cst {dimension_numbers = #tpu.dot_dimension_numbers<[1], [0], [0], [1], [0, 0, 1, 1], [], []>} : vector<256x128xbf16>, vector<128x128xbf16>, vector<256x128xf32> -> vector<256x128xf32>
    %7 = arith.addf %3, %6 : vector<256x128xf32>
    %c0_6 = arith.constant 0 : index
    %c0_7 = arith.constant 0 : index
    %8 = vector.load %arg7[%c0_6, %c0_7] : memref<256x128xf32, #tpu.memory_space<vmem>>, vector<256x128xf32>
    tpu.vector_store %arg7[%c0_6, %c0_7], %7 {strides = array<i32>} : memref<256x128xf32, #tpu.memory_space<vmem>>, vector<256x128xf32>,
    %c0_i32_8 = arith.constant 0 : i32
    %9 = arith.cmpi eq, %arg2, %c0_i32_8 : i32
    %10 = arith.extui %9 : i1 to i32
    %c0_i32_9 = arith.constant 0 : i32
    %11 = arith.cmpi ne, %10, %c0_i32_9 : i32
    scf.if %11 {
      %c0_10 = arith.constant 0 : index
      %c0_11 = arith.constant 0 : index
      %12 = vector.load %arg7[%c0_10, %c0_11] : memref<256x128xf32, #tpu.memory_space<vmem>>, vector<256x128xf32>
      %c0_12 = arith.constant 0 : index
      %c0_13 = arith.constant 0 : index
      %13 = vector.load %arg5[%c0_12, %c0_13] : memref<1x128xf32, #tpu.memory_space<vmem>>, vector<1x128xf32>
      %14 = vector.broadcast %13 : vector<1x128xf32> to vector<256x128xf32>
      %15 = arith.addf %12, %14 : vector<256x128xf32>
      %16 = math.tanh %15 : vector<256x128xf32>
      %c0_14 = arith.constant 0 : index
      %c0_15 = arith.constant 0 : index
      %17 = vector.load %arg6[%c0_14, %c0_15] : memref<256x128xf32, #tpu.memory_space<vmem>>, vector<256x128xf32>
      tpu.vector_store %arg6[%c0_14, %c0_15], %16 {strides = array<i32>} : memref<256x128xf32, #tpu.memory_space<vmem>>, vector<256x128xf32>,
    } else {
    }
    return
  }
  func.func @transform_0(%arg0: i32, %arg1: i32, %arg2: i32) -> (i32, i32) {
    %c0_i32 = arith.constant 0 : i32
    return %arg0, %arg2 : i32, i32
  }
  func.func @transform_1(%arg0: i32, %arg1: i32, %arg2: i32) -> (i32, i32) {
    %c0_i32 = arith.constant 0 : i32
    return %arg2, %arg1 : i32, i32
  }
  func.func @transform_2(%arg0: i32, %arg1: i32, %arg2: i32) -> (i32, i32) {
    %c0_i32 = arith.constant 0 : i32
    %c0_i32_0 = arith.constant 0 : i32
    return %c0_i32, %arg1 : i32, i32
  }
  func.func @transform_3(%arg0: i32, %arg1: i32, %arg2: i32) -> (i32, i32) {
    %c0_i32 = arith.constant 0 : i32
    return %arg0, %arg1 : i32, i32
  }
}

</mosaic_0001>

<llo_original>
// kernel: tile.8
$region0: #{tile.8}
  #allocation0 [shape = 's32[1]{0}', space=sflag, size = 0x4, scoped, tag = 'scoped memory for tile.8']
  %s0 = inlined_call_operand.vmem [shape: f32[32], index: 0, kind: input, shape index: {}]
  %s1 = inlined_call_operand.vmem [shape: f32[4,32], index: 1, kind: output, shape index: {}]
  // Predicated region
  $region2: #{tile.8} parent=0 // pred_check
    _
  $region3: #{tile.8} parent=0 // pred_check_branch
    %3 = sbr.rel (0) target = $region5
  $region4: #{tile.8} parent=0 // pred_region
    _
  $region5: #{tile.8} parent=0 // pred_fallthru
    _
  %v4 = vld [vmem:[%s0] ss:$0 sm:$0xff]
  %5 = vst [vmem:[%s1] sm:$0xf] %v4

// kernel: generator_forward.15
$region0: #{generator_forward.15}
  #allocation0 [shape = 'u32[]', space=smem, size = 0x4, offset = 0x4, fixed_abs, tag = 'smem constant byte address 0x4 - core index']
  #allocation1 [shape = 'u32[144,128]{1,0:T(1,128)}', space=vmem, size = 0x12000, scoped, tag = 'internal scratch']
  %s0 = inlined_call_operand.vmem [shape: f32[32,64], index: 0, kind: input, shape index: {}]
  %s1 = inlined_call_operand.vmem [shape: f32[1,64], index: 1, kind: input, shape index: {}]
  %s2 = inlined_call_operand.vmem [shape: f32[1,64], index: 2, kind: input, shape index: {}]
  %s3 = inlined_call_operand.vmem [shape: f32[32,64], index: 3, kind: output, shape index: {}]
  %s4 = sld [smem:[#allocation0]]
  $region22: #{generator_forward.15} parent=0
    _
  %s6 = ssub.s32 1, %s4
  %s7 = scalar_select 0, %s6, %s4
  // Predicated region
  $region2: #{generator_forward.15} parent=0 // pred_check
    _
  $region3: #{generator_forward.15} parent=0 // pred_check_branch
    %9 = sbr.rel (0) target = $region5
  $region4: #{generator_forward.15} parent=0 // pred_region
    _
  $region5: #{generator_forward.15} parent=0 // pred_fallthru
    _
  // Predicated region
  $region6: #{generator_forward.15} parent=0 // pred_check
    _
  $region7: #{generator_forward.15} parent=0 // pred_check_branch
    %11 = sbr.rel (0) target = $region9
  $region8: #{generator_forward.15} parent=0 // pred_region
    _
  $region9: #{generator_forward.15} parent=0 // pred_fallthru
    _
  // Predicated region
  $region10: #{generator_forward.15} parent=0 // pred_check
    _
  $region11: #{generator_forward.15} parent=0 // pred_check_branch
    %13 = sbr.rel (0) target = $region13
  $region12: #{generator_forward.15} parent=0 // pred_region
    _
  $region13: #{generator_forward.15} parent=0 // pred_fallthru
    _
  %v14 = vld [vmem:[%s0] sm:$0xff]
  %v15 = vld [vmem:[%s0 + $0x8] sm:$0xff]
  %v16 = vld [vmem:[%s0 + $0x10] sm:$0xff]
  %v17 = vld [vmem:[%s0 + $0x18] sm:$0xff]
  %v18 = vld [vmem:[%s1] sm:$0x1]
  %v20 = vlaneseq
  %v21 = vshrl.u32 %v20, 7
  %v22 = vsub.s32 0, %v21
  %v23 = vrot.slane %v18, %v22
  %v25 = vmul.f32 %v14, %v23
  %v26 = vmul.f32 %v15, %v23
  %v27 = vmul.f32 %v16, %v23
  %v28 = vmul.f32 %v17, %v23
  %v29 = vld [vmem:[%s2] sm:$0x1]
  %v31 = vlaneseq
  %v32 = vshrl.u32 %v31, 7
  %v33 = vsub.s32 0, %v32
  %v34 = vrot.slane %v29, %v33
  %v36 = vadd.f32 %v25, %v34
  %v37 = vadd.f32 %v26, %v34
  %v38 = vadd.f32 %v27, %v34
  %v39 = vadd.f32 %v28, %v34
  %v40 = vmax.f32 %v36, 0.0
  %v41 = vmax.f32 %v37, 0.0
  %v42 = vmax.f32 %v38, 0.0
  %v43 = vmax.f32 %v39, 0.0
  %vm44 = vcmask 523264
  %45 = vst.msk [vmem:[%s3] sm:$0xff] %vm44, %v40
  %46 = vst.msk [vmem:[%s3 + $0x8] sm:$0xff] %vm44, %v41
  %47 = vst.msk [vmem:[%s3 + $0x10] sm:$0xff] %vm44, %v42
  %48 = vst.msk [vmem:[%s3 + $0x18] sm:$0xff] %vm44, %v43
  // Predicated region
  $region14: #{generator_forward.15} parent=0 // pred_check
    _
  $region15: #{generator_forward.15} parent=0 // pred_check_branch
    %50 = sbr.rel (0) target = $region17
  $region16: #{generator_forward.15} parent=0 // pred_region
    _
  $region17: #{generator_forward.15} parent=0 // pred_fallthru
    _
  // Predicated region
  $region18: #{generator_forward.15} parent=0 // pred_check
    _
  $region19: #{generator_forward.15} parent=0 // pred_check_branch
    %52 = sbr.rel (0) target = $region21
  $region20: #{generator_forward.15} parent=0 // pred_region
    _
  $region21: #{generator_forward.15} parent=0 // pred_fallthru
    _

// kernel: generator_forward.14
$region0: #{generator_forward.14}
  #allocation0 [shape = 'u32[]', space=smem, size = 0x4, offset = 0x4, fixed_abs, tag = 'smem constant byte address 0x4 - core index']
  #allocation1 [shape = 'u32[144,128]{1,0:T(1,128)}', space=vmem, size = 0x12000, scoped, tag = 'internal scratch']
  %s0 = inlined_call_operand.vmem [shape: f32[32,64], index: 0, kind: input, shape index: {}]
  %s1 = inlined_call_operand.vmem [shape: f32[1,64], index: 1, kind: output, shape index: {0}]
  %s2 = inlined_call_operand.vmem [shape: f32[1,64], index: 2, kind: output, shape index: {1}]
  %3 = xla_tuple %s1, %s2
  %s4 = sld [smem:[#allocation0]]
  $region26: #{generator_forward.14} parent=0
    _
  %s6 = ssub.s32 1, %s4
  %s7 = scalar_select 0, %s6, %s4
  // Predicated region
  $region2: #{generator_forward.14} parent=0 // pred_check
    _
  $region3: #{generator_forward.14} parent=0 // pred_check_branch
    %9 = sbr.rel (0) target = $region5
  $region4: #{generator_forward.14} parent=0 // pred_region
    _
  $region5: #{generator_forward.14} parent=0 // pred_fallthru
    _
  %p10 = scmp.eq.s32.totalorder 0, 0
  // Predicated region
  $region6: #{generator_forward.14} parent=0 // pred_check
    %p11 = pneg %p10
  $region7: #{generator_forward.14} parent=0 // pred_check_branch
    %13 = sbr.rel (%p11) target = $region9
  $region8: #{generator_forward.14} parent=0 // pred_region
    %vm14 = vcmask 516096
    %15 = vst.msk [vmem:[%s1] sm:$0x1] %vm14, 0.0
    %16 = vst.msk [vmem:[%s2] sm:$0x1] %vm14, 0.0
  $region9: #{generator_forward.14} parent=0 // pred_fallthru
    _
  %v17 = vld [vmem:[%s0] sm:$0xff]
  %v18 = vld [vmem:[%s0 + $0x8] sm:$0xff]
  %v19 = vld [vmem:[%s0 + $0x10] sm:$0xff]
  %v20 = vld [vmem:[%s0 + $0x18] sm:$0xff]
  %v21 = vld [vmem:[%s1] sm:$0x1]
  %vm22 = vcmask 523264
  %v23 = vsel %vm22, %v17, 0.0
  %v24 = vsel %vm22, %v18, 0.0
  %v25 = vadd.f32 %v23, %v24
  %v26 = vsel %vm22, %v19, 0.0
  %v27 = vadd.f32 %v25, %v26
  %v28 = vsel %vm22, %v20, 0.0
  %v29 = vadd.f32 %v27, %v28
  %v30 = vrot.slane %v29, 4
  %v31 = vadd.f32 %v29, %v30
  %v32 = vrot.slane %v31, 2
  %v33 = vadd.f32 %v31, %v32
  %v34 = vrot.slane %v33, 1
  %v35 = vadd.f32 %v33, %v34
  %v36 = vadd.f32 %v21, %v35
  %vm37 = vcmask 516096
  %38 = vst.msk [vmem:[%s1] sm:$0x1] %vm37, %v36
  %v39 = vld [vmem:[%s2] sm:$0x1]
  %v40 = vmul.f32 %v17, %v17
  %v41 = vmul.f32 %v18, %v18
  %v42 = vmul.f32 %v19, %v19
  %v43 = vmul.f32 %v20, %v20
  %v44 = vsel %vm22, %v40, 0.0
  %v45 = vsel %vm22, %v41, 0.0
  %v46 = vadd.f32 %v44, %v45
  %v47 = vsel %vm22, %v42, 0.0
  %v48 = vadd.f32 %v46, %v47
  %v49 = vsel %vm22, %v43, 0.0
  %v50 = vadd.f32 %v48, %v49
  %v51 = vrot.slane %v50, 4
  %v52 = vadd.f32 %v50, %v51
  %v53 = vrot.slane %v52, 2
  %v54 = vadd.f32 %v52, %v53
  %v55 = vrot.slane %v54, 1
  %v56 = vadd.f32 %v54, %v55
  %v57 = vadd.f32 %v39, %v56
  %58 = vst.msk [vmem:[%s2] sm:$0x1] %vm37, %v57
  // Predicated region
  $region10: #{generator_forward.14} parent=0 // pred_check
    _
  $region11: #{generator_forward.14} parent=0 // pred_check_branch
    %60 = sbr.rel (0) target = $region13
  $region12: #{generator_forward.14} parent=0 // pred_region
    _
  $region13: #{generator_forward.14} parent=0 // pred_fallthru
    _
  // Predicated region
  $region14: #{generator_forward.14} parent=0 // pred_check
    _
  $region15: #{generator_forward.14} parent=0 // pred_check_branch
    %62 = sbr.rel (0) target = $region17
  $region16: #{generator_forward.14} parent=0 // pred_region
    _
  $region17: #{generator_forward.14} parent=0 // pred_fallthru
    _
  // Predicated region
  $region18: #{generator_forward.14} parent=0 // pred_check
    _
  $region19: #{generator_forward.14} parent=0 // pred_check_branch
    %64 = sbr.rel (0) target = $region21
  $region20: #{generator_forward.14} parent=0 // pred_region
    _
  $region21: #{generator_forward.14} parent=0 // pred_fallthru
    _
  // Predicated region
  $region22: #{generator_forward.14} parent=0 // pred_check
    _
  $region23: #{generator_forward.14} parent=0 // pred_check_branch
    %66 = sbr.rel (0) target = $region25
  $region24: #{generator_forward.14} parent=0 // pred_region
    _
  $region25: #{generator_forward.14} parent=0 // pred_fallthru
    _

// kernel: generator_forward.13
$region0: #{generator_forward.13}
  #allocation0 [shape = 'u32[]', space=smem, size = 0x4, offset = 0x4, fixed_abs, tag = 'smem constant byte address 0x4 - core index']
  #allocation1 [shape = 'u32[144,128]{1,0:T(1,128)}', space=vmem, size = 0x12000, scoped, tag = 'internal scratch']
  #allocation2 [shape = 'f32[8,256]{1,0:T(8,128)}', space=vmem, size = 0x2000, scoped, tag = 'scratch operand']
  %s0 = inlined_call_operand.vmem [shape: bf16[8,128], index: 0, kind: input, shape index: {}]
  %s1 = inlined_call_operand.vmem [shape: bf16[128,256], index: 1, kind: input, shape index: {}]
  %s2 = inlined_call_operand.vmem [shape: f32[1,256], index: 2, kind: input, shape index: {}]
  %s3 = inlined_call_operand.vmem [shape: f32[8,256], index: 3, kind: output, shape index: {}]
  %s4 = sld [smem:[#allocation0]]
  $region30: #{generator_forward.13} parent=0
    _
  %s6 = ssub.s32 1, %s4
  %s7 = scalar_select 0, %s6, %s4
  // Predicated region
  $region2: #{generator_forward.13} parent=0 // pred_check
    _
  $region3: #{generator_forward.13} parent=0 // pred_check_branch
    %9 = sbr.rel (0) target = $region5
  $region4: #{generator_forward.13} parent=0 // pred_region
    _
  $region5: #{generator_forward.13} parent=0 // pred_fallthru
    _
  // Predicated region
  $region6: #{generator_forward.13} parent=0 // pred_check
    _
  $region7: #{generator_forward.13} parent=0 // pred_check_branch
    %11 = sbr.rel (0) target = $region9
  $region8: #{generator_forward.13} parent=0 // pred_region
    _
  $region9: #{generator_forward.13} parent=0 // pred_fallthru
    _
  // Predicated region
  $region10: #{generator_forward.13} parent=0 // pred_check
    _
  $region11: #{generator_forward.13} parent=0 // pred_check_branch
    %13 = sbr.rel (0) target = $region13
  $region12: #{generator_forward.13} parent=0 // pred_region
    _
  $region13: #{generator_forward.13} parent=0 // pred_fallthru
    _
  %p15 = scmp.eq.s32.totalorder 0, 0
  // Predicated region
  $region14: #{generator_forward.13} parent=0 // pred_check
    %p16 = pneg %p15
  $region15: #{generator_forward.13} parent=0 // pred_check_branch
    %18 = sbr.rel (%p16) target = $region17
  $region16: #{generator_forward.13} parent=0 // pred_region
    %19 = vst [vmem:[#allocation2] sm:$0xff] 0.0
    %20 = vst [vmem:[#allocation2 + $0x8] sm:$0xff] 0.0
  $region17: #{generator_forward.13} parent=0 // pred_fallthru
    _
  %v21 = vld [vmem:[#allocation2] sm:$0xff]
  %v22 = vld [vmem:[#allocation2 + $0x8] sm:$0xff]
  %v23 = vld [vmem:[%s0] sm:$0xf]
  %v24 = vld [vmem:[%s1] sm:$0xff]
  %v25 = vld [vmem:[%s1 + $0x8] sm:$0xff]
  %v26 = vld [vmem:[%s1 + $0x10] sm:$0xff]
  %v27 = vld [vmem:[%s1 + $0x18] sm:$0xff]
  %v28 = vld [vmem:[%s1 + $0x20] sm:$0xff]
  %v29 = vld [vmem:[%s1 + $0x28] sm:$0xff]
  %v30 = vld [vmem:[%s1 + $0x30] sm:$0xff]
  %v31 = vld [vmem:[%s1 + $0x38] sm:$0xff]
  %v32 = vld [vmem:[%s1 + $0x40] sm:$0xff]
  %v33 = vld [vmem:[%s1 + $0x48] sm:$0xff]
  %v34 = vld [vmem:[%s1 + $0x50] sm:$0xff]
  %v35 = vld [vmem:[%s1 + $0x58] sm:$0xff]
  %v36 = vld [vmem:[%s1 + $0x60] sm:$0xff]
  %v37 = vld [vmem:[%s1 + $0x68] sm:$0xff]
  %v38 = vld [vmem:[%s1 + $0x70] sm:$0xff]
  %v39 = vld [vmem:[%s1 + $0x78] sm:$0xff]
  %v56 = vunpack.c.l.b16 %v24
  %v57 = vunpack.c.h.b16 %v24
  %v58 = vunpack.c.l.b16 %v25
  %v59 = vunpack.c.h.b16 %v25
  %v60 = vunpack.c.l.b16 %v26
  %v61 = vunpack.c.h.b16 %v26
  %v62 = vunpack.c.l.b16 %v27
  %v63 = vunpack.c.h.b16 %v27
  %v64 = vunpack.c.l.b16 %v28
  %v65 = vunpack.c.h.b16 %v28
  %v66 = vunpack.c.l.b16 %v29
  %v67 = vunpack.c.h.b16 %v29
  %v68 = vunpack.c.l.b16 %v30
  %v69 = vunpack.c.h.b16 %v30
  %v70 = vunpack.c.l.b16 %v31
  %v71 = vunpack.c.h.b16 %v31
  %v72 = vunpack.c.l.b16 %v32
  %v73 = vunpack.c.h.b16 %v32
  %v74 = vunpack.c.l.b16 %v33
  %v75 = vunpack.c.h.b16 %v33
  %v76 = vunpack.c.l.b16 %v34
  %v77 = vunpack.c.h.b16 %v34
  %v78 = vunpack.c.l.b16 %v35
  %v79 = vunpack.c.h.b16 %v35
  %v80 = vunpack.c.l.b16 %v36
  %v81 = vunpack.c.h.b16 %v36
  %v82 = vunpack.c.l.b16 %v37
  %v83 = vunpack.c.h.b16 %v37
  %v84 = vunpack.c.l.b16 %v38
  %v85 = vunpack.c.h.b16 %v38
  %v86 = vunpack.c.l.b16 %v39
  %v87 = vunpack.c.h.b16 %v39
  %v88 = vpack.c.b16 %v58, %v56
  %v89 = vpack.c.b16 %v59, %v57
  %v90 = vpack.c.b16 %v62, %v60
  %v91 = vpack.c.b16 %v63, %v61
  %v92 = vpack.c.b16 %v66, %v64
  %v93 = vpack.c.b16 %v67, %v65
  %v94 = vpack.c.b16 %v70, %v68
  %v95 = vpack.c.b16 %v71, %v69
  %v96 = vpack.c.b16 %v74, %v72
  %v97 = vpack.c.b16 %v75, %v73
  %v98 = vpack.c.b16 %v78, %v76
  %v99 = vpack.c.b16 %v79, %v77
  %v100 = vpack.c.b16 %v82, %v80
  %v101 = vpack.c.b16 %v83, %v81
  %v102 = vpack.c.b16 %v86, %v84
  %v103 = vpack.c.b16 %v87, %v85
  %120 = vmatprep.subr.bf16.mxu0 %v103
  %121 = vmatpush1.bf16.msra.mxu0 %v102
  %122 = vmatprep.subr.bf16.mxu0 %v101
  %123 = vmatpush1.bf16.msra.mxu0 %v100
  %124 = vmatprep.subr.bf16.mxu0 %v99
  %125 = vmatpush1.bf16.msra.mxu0 %v98
  %126 = vmatprep.subr.bf16.mxu0 %v97
  %127 = vmatpush1.bf16.msra.mxu0 %v96
  %128 = vmatprep.subr.bf16.mxu0 %v95
  %129 = vmatpush1.bf16.msra.mxu0 %v94
  %130 = vmatprep.subr.bf16.mxu0 %v93
  %131 = vmatpush1.bf16.msra.mxu0 %v92
  %132 = vmatprep.subr.bf16.mxu0 %v91
  %133 = vmatpush1.bf16.msra.mxu0 %v90
  %134 = vmatprep.subr.bf16.mxu0 %v89
  %135 = vmatpush1.bf16.msra.mxu0 %v88
  %136 = vmatprep.subr.bf16.mxu0 0
  %137 = vmatpush2.bf16.msra.mxu0 0
  %138 = vmatprep.subr.bf16.mxu0 0
  %139 = vmatpush2.bf16.msra.mxu0 0
  %140 = vmatprep.subr.bf16.mxu0 0
  %141 = vmatpush2.bf16.msra.mxu0 0
  %142 = vmatprep.subr.bf16.mxu0 0
  %143 = vmatpush2.bf16.msra.mxu0 0
  %144 = vmatprep.subr.bf16.mxu0 0
  %145 = vmatpush2.bf16.msra.mxu0 0
  %146 = vmatprep.subr.bf16.mxu0 0
  %147 = vmatpush2.bf16.msra.mxu0 0
  %148 = vmatprep.subr.bf16.mxu0 0
  %149 = vmatpush2.bf16.msra.mxu0 0
  %150 = vmatprep.subr.bf16.mxu0 0
  %151 = vmatpush2.bf16.msra.mxu0 0
  %152 = vmatprep.mubr.bf16.mxu0 0
  %153 = vmatmul.mubr.bf16.gmra.mxu0 %v23
  %v154 = vpop.f32.mrf.mxu0
  %v155 = vadd.f32 0.0, %v154
  %v156 = vpop.f32.mrf.mxu0
  %v157 = vadd.f32 0.0, %v156
  %v158 = vpop.f32.mrf.mxu0
  %v159 = vpop.f32.mrf.mxu0
  %160 = vdwg.mxu0
  %v161 = vadd.f32 %v21, %v155
  %v162 = vadd.f32 %v22, %v157
  %163 = vst [vmem:[#allocation2] sm:$0xff] %v161
  %164 = vst [vmem:[#allocation2 + $0x8] sm:$0xff] %v162
  // Predicated region
  $region18: #{generator_forward.13} parent=0 // pred_check
    %p165 = pneg %p15
  $region19: #{generator_forward.13} parent=0 // pred_check_branch
    %167 = sbr.rel (%p165) target = $region21
  $region20: #{generator_forward.13} parent=0 // pred_region
    %v168 = vld [vmem:[#allocation2] sm:$0xff]
    %v169 = vld [vmem:[#allocation2 + $0x8] sm:$0xff]
    %v170 = vld [vmem:[%s2] sm:$0x3]
    %v172 = vlaneseq
    %v173 = vshrl.u32 %v172, 7
    %v174 = vsub.s32 0, %v173
    %v175 = vrot.slane %v170, %v174
    %v176 = vlaneseq
    %v177 = vshrl.u32 %v176, 7
    %v178 = vsub.s32 1, %v177
    %v179 = vrot.slane %v170, %v178
    %v182 = vadd.f32 %v168, %v175
    %v183 = vadd.f32 %v169, %v179
    %184 = vst [vmem:[%s3] sm:$0xff] %v182
    %185 = vst [vmem:[%s3 + $0x8] sm:$0xff] %v183
  $region21: #{generator_forward.13} parent=0 // pred_fallthru
    _
  // Predicated region
  $region22: #{generator_forward.13} parent=0 // pred_check
    _
  $region23: #{generator_forward.13} parent=0 // pred_check_branch
    %187 = sbr.rel (0) target = $region25
  $region24: #{generator_forward.13} parent=0 // pred_region
    _
  $region25: #{generator_forward.13} parent=0 // pred_fallthru
    _
  // Predicated region
  $region26: #{generator_forward.13} parent=0 // pred_check
    _
  $region27: #{generator_forward.13} parent=0 // pred_check_branch
    %189 = sbr.rel (0) target = $region29
  $region28: #{generator_forward.13} parent=0 // pred_region
    _
  $region29: #{generator_forward.13} parent=0 // pred_fallthru
    _

// kernel: generator_forward.16
$region0: #{generator_forward.16}
  #allocation0 [shape = 'u32[]', space=smem, size = 0x4, offset = 0x4, fixed_abs, tag = 'smem constant byte address 0x4 - core index']
  #allocation1 [shape = 'u32[144,128]{1,0:T(1,128)}', space=vmem, size = 0x12000, scoped, tag = 'internal scratch']
  #allocation2 [shape = 'f32[56,128]{1,0:T(8,128)}', space=vmem, size = 0x7000, scoped, tag = 'scratch operand']
  %s0 = inlined_call_operand.vmem [shape: bf16[56,256], index: 0, kind: input, shape index: {}]
  %s1 = inlined_call_operand.vmem [shape: bf16[256,128], index: 1, kind: input, shape index: {}]
  %s2 = inlined_call_operand.vmem [shape: f32[1,128], index: 2, kind: input, shape index: {}]
  %s3 = inlined_call_operand.vmem [shape: f32[56,128], index: 3, kind: output, shape index: {}]
  %s4 = sld [smem:[#allocation0]]
  $region30: #{generator_forward.16} parent=0
    _
  %s6 = ssub.s32 1, %s4
  %s7 = scalar_select 0, %s6, %s4
  // Predicated region
  $region2: #{generator_forward.16} parent=0 // pred_check
    _
  $region3: #{generator_forward.16} parent=0 // pred_check_branch
    %9 = sbr.rel (0) target = $region5
  $region4: #{generator_forward.16} parent=0 // pred_region
    _
  $region5: #{generator_forward.16} parent=0 // pred_fallthru
    _
  // Predicated region
  $region6: #{generator_forward.16} parent=0 // pred_check
    _
  $region7: #{generator_forward.16} parent=0 // pred_check_branch
    %11 = sbr.rel (0) target = $region9
  $region8: #{generator_forward.16} parent=0 // pred_region
    _
  $region9: #{generator_forward.16} parent=0 // pred_fallthru
    _
  // Predicated region
  $region10: #{generator_forward.16} parent=0 // pred_check
    _
  $region11: #{generator_forward.16} parent=0 // pred_check_branch
    %13 = sbr.rel (0) target = $region13
  $region12: #{generator_forward.16} parent=0 // pred_region
    _
  $region13: #{generator_forward.16} parent=0 // pred_fallthru
    _
  %p15 = scmp.eq.s32.totalorder 0, 0
  // Predicated region
  $region14: #{generator_forward.16} parent=0 // pred_check
    %p16 = pneg %p15
  $region15: #{generator_forward.16} parent=0 // pred_check_branch
    %18 = sbr.rel (%p16) target = $region17
  $region16: #{generator_forward.16} parent=0 // pred_region
    %19 = vst [vmem:[#allocation2] sm:$0xff] 0.0
    %20 = vst [vmem:[#allocation2 + $0x8] sm:$0xff] 0.0
    %21 = vst [vmem:[#allocation2 + $0x10] sm:$0xff] 0.0
    %22 = vst [vmem:[#allocation2 + $0x18] sm:$0xff] 0.0
    %23 = vst [vmem:[#allocation2 + $0x20] sm:$0xff] 0.0
    %24 = vst [vmem:[#allocation2 + $0x28] sm:$0xff] 0.0
    %25 = vst [vmem:[#allocation2 + $0x30] sm:$0xff] 0.0
  $region17: #{generator_forward.16} parent=0 // pred_fallthru
    _
  %v26 = vld [vmem:[#allocation2] sm:$0xff]
  %v27 = vld [vmem:[#allocation2 + $0x8] sm:$0xff]
  %v28 = vld [vmem:[#allocation2 + $0x10] sm:$0xff]
  %v29 = vld [vmem:[#allocation2 + $0x18] sm:$0xff]
  %v30 = vld [vmem:[#allocation2 + $0x20] sm:$0xff]
  %v31 = vld [vmem:[#allocation2 + $0x28] sm:$0xff]
  %v32 = vld [vmem:[#allocation2 + $0x30] sm:$0xff]
  %v33 = vld [vmem:[%s0] sm:$0xff]
  %v34 = vld [vmem:[%s0 + $0x8] sm:$0xff]
  %v35 = vld [vmem:[%s0 + $0x10] sm:$0xff]
  %v36 = vld [vmem:[%s0 + $0x18] sm:$0xff]
  %v37 = vld [vmem:[%s0 + $0x20] sm:$0xff]
  %v38 = vld [vmem:[%s0 + $0x28] sm:$0xff]
  %v39 = vld [vmem:[%s0 + $0x30] sm:$0xff]
  %v40 = vld [vmem:[%s1] sm:$0xf]
  %v41 = vld [vmem:[%s1 + $0x4] sm:$0xf]
  %v42 = vld [vmem:[%s1 + $0x8] sm:$0xf]
  %v43 = vld [vmem:[%s1 + $0xc] sm:$0xf]
  %v44 = vld [vmem:[%s1 + $0x10] sm:$0xf]
  %v45 = vld [vmem:[%s1 + $0x14] sm:$0xf]
  %v46 = vld [vmem:[%s1 + $0x18] sm:$0xf]
  %v47 = vld [vmem:[%s1 + $0x1c] sm:$0xf]
  %v48 = vld [vmem:[%s1 + $0x20] sm:$0xf]
  %v49 = vld [vmem:[%s1 + $0x24] sm:$0xf]
  %v50 = vld [vmem:[%s1 + $0x28] sm:$0xf]
  %v51 = vld [vmem:[%s1 + $0x2c] sm:$0xf]
  %v52 = vld [vmem:[%s1 + $0x30] sm:$0xf]
  %v53 = vld [vmem:[%s1 + $0x34] sm:$0xf]
  %v54 = vld [vmem:[%s1 + $0x38] sm:$0xf]
  %v55 = vld [vmem:[%s1 + $0x3c] sm:$0xf]
  %v56 = vld [vmem:[%s1 + $0x40] sm:$0xf]
  %v57 = vld [vmem:[%s1 + $0x44] sm:$0xf]
  %v58 = vld [vmem:[%s1 + $0x48] sm:$0xf]
  %v59 = vld [vmem:[%s1 + $0x4c] sm:$0xf]
  %v60 = vld [vmem:[%s1 + $0x50] sm:$0xf]
  %v61 = vld [vmem:[%s1 + $0x54] sm:$0xf]
  %v62 = vld [vmem:[%s1 + $0x58] sm:$0xf]
  %v63 = vld [vmem:[%s1 + $0x5c] sm:$0xf]
  %v64 = vld [vmem:[%s1 + $0x60] sm:$0xf]
  %v65 = vld [vmem:[%s1 + $0x64] sm:$0xf]
  %v66 = vld [vmem:[%s1 + $0x68] sm:$0xf]
  %v67 = vld [vmem:[%s1 + $0x6c] sm:$0xf]
  %v68 = vld [vmem:[%s1 + $0x70] sm:$0xf]
  %v69 = vld [vmem:[%s1 + $0x74] sm:$0xf]
  %v70 = vld [vmem:[%s1 + $0x78] sm:$0xf]
  %v71 = vld [vmem:[%s1 + $0x7c] sm:$0xf]
  %v79 = vunpack.c.l.b16 %v33
  %v80 = vunpack.c.h.b16 %v33
  %v81 = vunpack.c.l.b16 %v34
  %v82 = vunpack.c.h.b16 %v34
  %v83 = vunpack.c.l.b16 %v35
  %v84 = vunpack.c.h.b16 %v35
  %v85 = vunpack.c.l.b16 %v36
  %v86 = vunpack.c.h.b16 %v36
  %v87 = vunpack.c.l.b16 %v37
  %v88 = vunpack.c.h.b16 %v37
  %v89 = vunpack.c.l.b16 %v38
  %v90 = vunpack.c.h.b16 %v38
  %v91 = vunpack.c.l.b16 %v39
  %v92 = vunpack.c.h.b16 %v39
  %v93 = vpack.c.b16 %v81, %v79
  %v94 = vpack.c.b16 %v82, %v80
  %v95 = vpack.c.b16 %v85, %v83
  %v96 = vpack.c.b16 %v86, %v84
  %v97 = vpack.c.b16 %v89, %v87
  %v98 = vpack.c.b16 %v90, %v88
  %v99 = vpack.c.b16 %v91, %v91
  %v100 = vpack.c.b16 %v92, %v92
  %v141 = vunpack.c.l.b16 %v40
  %v142 = vunpack.c.l.b16 %v41
  %v143 = vunpack.c.l.b16 %v42
  %v144 = vunpack.c.l.b16 %v43
  %v145 = vunpack.c.l.b16 %v44
  %v146 = vunpack.c.l.b16 %v45
  %v147 = vunpack.c.l.b16 %v46
  %v148 = vunpack.c.l.b16 %v47
  %v149 = vunpack.c.l.b16 %v48
  %v150 = vunpack.c.l.b16 %v49
  %v151 = vunpack.c.l.b16 %v50
  %v152 = vunpack.c.l.b16 %v51
  %v153 = vunpack.c.l.b16 %v52
  %v154 = vunpack.c.l.b16 %v53
  %v155 = vunpack.c.l.b16 %v54
  %v156 = vunpack.c.l.b16 %v55
  %v157 = vunpack.c.l.b16 %v56
  %v158 = vunpack.c.l.b16 %v57
  %v159 = vunpack.c.l.b16 %v58
  %v160 = vunpack.c.l.b16 %v59
  %v161 = vunpack.c.l.b16 %v60
  %v162 = vunpack.c.l.b16 %v61
  %v163 = vunpack.c.l.b16 %v62
  %v164 = vunpack.c.l.b16 %v63
  %v165 = vunpack.c.l.b16 %v64
  %v166 = vunpack.c.l.b16 %v65
  %v167 = vunpack.c.l.b16 %v66
  %v168 = vunpack.c.l.b16 %v67
  %v169 = vunpack.c.l.b16 %v68
  %v170 = vunpack.c.l.b16 %v69
  %v171 = vunpack.c.l.b16 %v70
  %v172 = vunpack.c.l.b16 %v71
  %v173 = vpack.c.b16 %v142, %v141
  %v174 = vpack.c.b16 %v144, %v143
  %v175 = vpack.c.b16 %v146, %v145
  %v176 = vpack.c.b16 %v148, %v147
  %v177 = vpack.c.b16 %v150, %v149
  %v178 = vpack.c.b16 %v152, %v151
  %v179 = vpack.c.b16 %v154, %v153
  %v180 = vpack.c.b16 %v156, %v155
  %v181 = vpack.c.b16 %v158, %v157
  %v182 = vpack.c.b16 %v160, %v159
  %v183 = vpack.c.b16 %v162, %v161
  %v184 = vpack.c.b16 %v164, %v163
  %v185 = vpack.c.b16 %v166, %v165
  %v186 = vpack.c.b16 %v168, %v167
  %v187 = vpack.c.b16 %v170, %v169
  %v188 = vpack.c.b16 %v172, %v171
  %205 = vmatprep.subr.bf16.mxu0 0
  %206 = vmatpush1.bf16.msra.mxu0 %v180
  %207 = vmatprep.subr.bf16.mxu0 0
  %208 = vmatpush1.bf16.msra.mxu0 %v179
  %209 = vmatprep.subr.bf16.mxu0 0
  %210 = vmatpush1.bf16.msra.mxu0 %v178
  %211 = vmatprep.subr.bf16.mxu0 0
  %212 = vmatpush1.bf16.msra.mxu0 %v177
  %213 = vmatprep.subr.bf16.mxu0 0
  %214 = vmatpush1.bf16.msra.mxu0 %v176
  %215 = vmatprep.subr.bf16.mxu0 0
  %216 = vmatpush1.bf16.msra.mxu0 %v175
  %217 = vmatprep.subr.bf16.mxu0 0
  %218 = vmatpush1.bf16.msra.mxu0 %v174
  %219 = vmatprep.subr.bf16.mxu0 0
  %220 = vmatpush1.bf16.msra.mxu0 %v173
  %221 = vmatprep.subr.bf16.mxu0 0
  %222 = vmatpush2.bf16.msra.mxu0 %v188
  %223 = vmatprep.subr.bf16.mxu0 0
  %224 = vmatpush2.bf16.msra.mxu0 %v187
  %225 = vmatprep.subr.bf16.mxu0 0
  %226 = vmatpush2.bf16.msra.mxu0 %v186
  %227 = vmatprep.subr.bf16.mxu0 0
  %228 = vmatpush2.bf16.msra.mxu0 %v185
  %229 = vmatprep.subr.bf16.mxu0 0
  %230 = vmatpush2.bf16.msra.mxu0 %v184
  %231 = vmatprep.subr.bf16.mxu0 0
  %232 = vmatpush2.bf16.msra.mxu0 %v183
  %233 = vmatprep.subr.bf16.mxu0 0
  %234 = vmatpush2.bf16.msra.mxu0 %v182
  %235 = vmatprep.subr.bf16.mxu0 0
  %236 = vmatpush2.bf16.msra.mxu0 %v181
  %237 = vmatprep.mubr.bf16.mxu0 %v94
  %238 = vmatmul.mubr.bf16.gmra.mxu0 %v93
  %v239 = vpop.f32.mrf.mxu0
  %v240 = vadd.f32 0.0, %v239
  %v241 = vpop.f32.mrf.mxu0
  %v242 = vpop.f32.mrf.mxu0
  %v243 = vadd.f32 0.0, %v242
  %v244 = vpop.f32.mrf.mxu0
  %245 = vmatprep.mubr.bf16.mxu0 %v96
  %246 = vmatmul.mubr.bf16.gmra.mxu0 %v95
  %v247 = vpop.f32.mrf.mxu0
  %v248 = vadd.f32 0.0, %v247
  %v249 = vpop.f32.mrf.mxu0
  %v250 = vpop.f32.mrf.mxu0
  %v251 = vadd.f32 0.0, %v250
  %v252 = vpop.f32.mrf.mxu0
  %253 = vmatprep.mubr.bf16.mxu0 %v98
  %254 = vmatmul.mubr.bf16.gmra.mxu0 %v97
  %v255 = vpop.f32.mrf.mxu0
  %v256 = vadd.f32 0.0, %v255
  %v257 = vpop.f32.mrf.mxu0
  %v258 = vpop.f32.mrf.mxu0
  %v259 = vadd.f32 0.0, %v258
  %v260 = vpop.f32.mrf.mxu0
  %261 = vmatprep.mubr.bf16.mxu0 %v100
  %262 = vmatmul.mubr.bf16.gmra.mxu0 %v99
  %v263 = vpop.f32.mrf.mxu0
  %v264 = vadd.f32 0.0, %v263
  %v265 = vpop.f32.mrf.mxu0
  %v266 = vpop.f32.mrf.mxu0
  %v267 = vpop.f32.mrf.mxu0
  %268 = vdwg.mxu0
  %v269 = vadd.f32 %v26, %v240
  %v270 = vadd.f32 %v27, %v243
  %v271 = vadd.f32 %v28, %v248
  %v272 = vadd.f32 %v29, %v251
  %v273 = vadd.f32 %v30, %v256
  %v274 = vadd.f32 %v31, %v259
  %v275 = vadd.f32 %v32, %v264
  %276 = vst [vmem:[#allocation2] sm:$0xff] %v269
  %277 = vst [vmem:[#allocation2 + $0x8] sm:$0xff] %v270
  %278 = vst [vmem:[#allocation2 + $0x10] sm:$0xff] %v271
  %279 = vst [vmem:[#allocation2 + $0x18] sm:$0xff] %v272
  %280 = vst [vmem:[#allocation2 + $0x20] sm:$0xff] %v273
  %281 = vst [vmem:[#allocation2 + $0x28] sm:$0xff] %v274
  %282 = vst [vmem:[#allocation2 + $0x30] sm:$0xff] %v275
  // Predicated region
  $region18: #{generator_forward.16} parent=0 // pred_check
    %p283 = pneg %p15
  $region19: #{generator_forward.16} parent=0 // pred_check_branch
    %285 = sbr.rel (%p283) target = $region21
  $region20: #{generator_forward.16} parent=0 // pred_region
    %v286 = vld [vmem:[#allocation2] sm:$0xff]
    %v287 = vld [vmem:[#allocation2 + $0x8] sm:$0xff]
    %v288 = vld [vmem:[#allocation2 + $0x10] sm:$0xff]
    %v289 = vld [vmem:[#allocation2 + $0x18] sm:$0xff]
    %v290 = vld [vmem:[#allocation2 + $0x20] sm:$0xff]
    %v291 = vld [vmem:[#allocation2 + $0x28] sm:$0xff]
    %v292 = vld [vmem:[#allocation2 + $0x30] sm:$0xff]
    %v293 = vld [vmem:[%s2] sm:$0x1]
    %v295 = vlaneseq
    %v296 = vshrl.u32 %v295, 7
    %v297 = vsub.s32 0, %v296
    %v298 = vrot.slane %v293, %v297
    %v300 = vadd.f32 %v286, %v298
    %v301 = vadd.f32 %v287, %v298
    %v302 = vadd.f32 %v288, %v298
    %v303 = vadd.f32 %v289, %v298
    %v304 = vadd.f32 %v290, %v298
    %v305 = vadd.f32 %v291, %v298
    %v306 = vadd.f32 %v292, %v298
    %307 = vst [vmem:[%s3] sm:$0xff] %v300
    %308 = vst [vmem:[%s3 + $0x8] sm:$0xff] %v301
    %309 = vst [vmem:[%s3 + $0x10] sm:$0xff] %v302
    %310 = vst [vmem:[%s3 + $0x18] sm:$0xff] %v303
    %311 = vst [vmem:[%s3 + $0x20] sm:$0xff] %v304
    %312 = vst [vmem:[%s3 + $0x28] sm:$0xff] %v305
    %313 = vst [vmem:[%s3 + $0x30] sm:$0xff] %v306
  $region21: #{generator_forward.16} parent=0 // pred_fallthru
    _
  // Predicated region
  $region22: #{generator_forward.16} parent=0 // pred_check
    _
  $region23: #{generator_forward.16} parent=0 // pred_check_branch
    %315 = sbr.rel (0) target = $region25
  $region24: #{generator_forward.16} parent=0 // pred_region
    _
  $region25: #{generator_forward.16} parent=0 // pred_fallthru
    _
  // Predicated region
  $region26: #{generator_forward.16} parent=0 // pred_check
    _
  $region27: #{generator_forward.16} parent=0 // pred_check_branch
    %317 = sbr.rel (0) target = $region29
  $region28: #{generator_forward.16} parent=0 // pred_region
    _
  $region29: #{generator_forward.16} parent=0 // pred_fallthru
    _

// kernel: generator_forward.17
$region0: #{generator_forward.17}
  #allocation0 [shape = 'u32[]', space=smem, size = 0x4, offset = 0x4, fixed_abs, tag = 'smem constant byte address 0x4 - core index']
  #allocation1 [shape = 'u32[144,128]{1,0:T(1,128)}', space=vmem, size = 0x12000, scoped, tag = 'internal scratch']
  %s0 = inlined_call_operand.vmem [shape: f32[128,32], index: 0, kind: input, shape index: {}]
  %s1 = inlined_call_operand.vmem [shape: f32[1,32], index: 1, kind: output, shape index: {0}]
  %s2 = inlined_call_operand.vmem [shape: f32[1,32], index: 2, kind: output, shape index: {1}]
  %3 = xla_tuple %s1, %s2
  %s4 = sld [smem:[#allocation0]]
  $region26: #{generator_forward.17} parent=0
    _
  %s6 = ssub.s32 1, %s4
  %s7 = scalar_select 0, %s6, %s4
  // Predicated region
  $region2: #{generator_forward.17} parent=0 // pred_check
    _
  $region3: #{generator_forward.17} parent=0 // pred_check_branch
    %9 = sbr.rel (0) target = $region5
  $region4: #{generator_forward.17} parent=0 // pred_region
    _
  $region5: #{generator_forward.17} parent=0 // pred_fallthru
    _
  %p10 = scmp.eq.s32.totalorder 0, 0
  // Predicated region
  $region6: #{generator_forward.17} parent=0 // pred_check
    %p11 = pneg %p10
  $region7: #{generator_forward.17} parent=0 // pred_check_branch
    %13 = sbr.rel (%p11) target = $region9
  $region8: #{generator_forward.17} parent=0 // pred_region
    %vm14 = vcmask 253952
    %15 = vst.msk [vmem:[%s1] sm:$0x1] %vm14, 0.0
    %16 = vst.msk [vmem:[%s2] sm:$0x1] %vm14, 0.0
  $region9: #{generator_forward.17} parent=0 // pred_fallthru
    _
  %v17 = vld [vmem:[%s0] sm:$0xff]
  %v18 = vld [vmem:[%s0 + $0x8] sm:$0xff]
  %v19 = vld [vmem:[%s0 + $0x10] sm:$0xff]
  %v20 = vld [vmem:[%s0 + $0x18] sm:$0xff]
  %v21 = vld [vmem:[%s0 + $0x20] sm:$0xff]
  %v22 = vld [vmem:[%s0 + $0x28] sm:$0xff]
  %v23 = vld [vmem:[%s0 + $0x30] sm:$0xff]
  %v24 = vld [vmem:[%s0 + $0x38] sm:$0xff]
  %v25 = vld [vmem:[%s0 + $0x40] sm:$0xff]
  %v26 = vld [vmem:[%s0 + $0x48] sm:$0xff]
  %v27 = vld [vmem:[%s0 + $0x50] sm:$0xff]
  %v28 = vld [vmem:[%s0 + $0x58] sm:$0xff]
  %v29 = vld [vmem:[%s0 + $0x60] sm:$0xff]
  %v30 = vld [vmem:[%s0 + $0x68] sm:$0xff]
  %v31 = vld [vmem:[%s0 + $0x70] sm:$0xff]
  %v32 = vld [vmem:[%s0 + $0x78] sm:$0xff]
  %v33 = vld [vmem:[%s1] sm:$0x1]
  %vm34 = vcmask 261120
  %v35 = vsel %vm34, %v17, 0.0
  %v36 = vsel %vm34, %v18, 0.0
  %v37 = vadd.f32 %v35, %v36
  %v38 = vsel %vm34, %v19, 0.0
  %v39 = vadd.f32 %v37, %v38
  %v40 = vsel %vm34, %v20, 0.0
  %v41 = vadd.f32 %v39, %v40
  %v42 = vsel %vm34, %v21, 0.0
  %v43 = vadd.f32 %v41, %v42
  %v44 = vsel %vm34, %v22, 0.0
  %v45 = vadd.f32 %v43, %v44
  %v46 = vsel %vm34, %v23, 0.0
  %v47 = vadd.f32 %v45, %v46
  %v48 = vsel %vm34, %v24, 0.0
  %v49 = vadd.f32 %v47, %v48
  %v50 = vsel %vm34, %v25, 0.0
  %v51 = vadd.f32 %v49, %v50
  %v52 = vsel %vm34, %v26, 0.0
  %v53 = vadd.f32 %v51, %v52
  %v54 = vsel %vm34, %v27, 0.0
  %v55 = vadd.f32 %v53, %v54
  %v56 = vsel %vm34, %v28, 0.0
  %v57 = vadd.f32 %v55, %v56
  %v58 = vsel %vm34, %v29, 0.0
  %v59 = vadd.f32 %v57, %v58
  %v60 = vsel %vm34, %v30, 0.0
  %v61 = vadd.f32 %v59, %v60
  %v62 = vsel %vm34, %v31, 0.0
  %v63 = vadd.f32 %v61, %v62
  %v64 = vsel %vm34, %v32, 0.0
  %v65 = vadd.f32 %v63, %v64
  %v66 = vrot.slane %v65, 4
  %v67 = vadd.f32 %v65, %v66
  %v68 = vrot.slane %v67, 2
  %v69 = vadd.f32 %v67, %v68
  %v70 = vrot.slane %v69, 1
  %v71 = vadd.f32 %v69, %v70
  %v72 = vadd.f32 %v33, %v71
  %vm73 = vcmask 253952
  %74 = vst.msk [vmem:[%s1] sm:$0x1] %vm73, %v72
  %v75 = vld [vmem:[%s2] sm:$0x1]
  %v76 = vmul.f32 %v17, %v17
  %v77 = vmul.f32 %v18, %v18
  %v78 = vmul.f32 %v19, %v19
  %v79 = vmul.f32 %v20, %v20
  %v80 = vmul.f32 %v21, %v21
  %v81 = vmul.f32 %v22, %v22
  %v82 = vmul.f32 %v23, %v23
  %v83 = vmul.f32 %v24, %v24
  %v84 = vmul.f32 %v25, %v25
  %v85 = vmul.f32 %v26, %v26
  %v86 = vmul.f32 %v27, %v27
  %v87 = vmul.f32 %v28, %v28
  %v88 = vmul.f32 %v29, %v29
  %v89 = vmul.f32 %v30, %v30
  %v90 = vmul.f32 %v31, %v31
  %v91 = vmul.f32 %v32, %v32
  %v92 = vsel %vm34, %v76, 0.0
  %v93 = vsel %vm34, %v77, 0.0
  %v94 = vadd.f32 %v92, %v93
  %v95 = vsel %vm34, %v78, 0.0
  %v96 = vadd.f32 %v94, %v95
  %v97 = vsel %vm34, %v79, 0.0
  %v98 = vadd.f32 %v96, %v97
  %v99 = vsel %vm34, %v80, 0.0
  %v100 = vadd.f32 %v98, %v99
  %v101 = vsel %vm34, %v81, 0.0
  %v102 = vadd.f32 %v100, %v101
  %v103 = vsel %vm34, %v82, 0.0
  %v104 = vadd.f32 %v102, %v103
  %v105 = vsel %vm34, %v83, 0.0
  %v106 = vadd.f32 %v104, %v105
  %v107 = vsel %vm34, %v84, 0.0
  %v108 = vadd.f32 %v106, %v107
  %v109 = vsel %vm34, %v85, 0.0
  %v110 = vadd.f32 %v108, %v109
  %v111 = vsel %vm34, %v86, 0.0
  %v112 = vadd.f32 %v110, %v111
  %v113 = vsel %vm34, %v87, 0.0
  %v114 = vadd.f32 %v112, %v113
  %v115 = vsel %vm34, %v88, 0.0
  %v116 = vadd.f32 %v114, %v115
  %v117 = vsel %vm34, %v89, 0.0
  %v118 = vadd.f32 %v116, %v117
  %v119 = vsel %vm34, %v90, 0.0
  %v120 = vadd.f32 %v118, %v119
  %v121 = vsel %vm34, %v91, 0.0
  %v122 = vadd.f32 %v120, %v121
  %v123 = vrot.slane %v122, 4
  %v124 = vadd.f32 %v122, %v123
  %v125 = vrot.slane %v124, 2
  %v126 = vadd.f32 %v124, %v125
  %v127 = vrot.slane %v126, 1
  %v128 = vadd.f32 %v126, %v127
  %v129 = vadd.f32 %v75, %v128
  %130 = vst.msk [vmem:[%s2] sm:$0x1] %vm73, %v129
  // Predicated region
  $region10: #{generator_forward.17} parent=0 // pred_check
    _
  $region11: #{generator_forward.17} parent=0 // pred_check_branch
    %132 = sbr.rel (0) target = $region13
  $region12: #{generator_forward.17} parent=0 // pred_region
    _
  $region13: #{generator_forward.17} parent=0 // pred_fallthru
    _
  // Predicated region
  $region14: #{generator_forward.17} parent=0 // pred_check
    _
  $region15: #{generator_forward.17} parent=0 // pred_check_branch
    %134 = sbr.rel (0) target = $region17
  $region16: #{generator_forward.17} parent=0 // pred_region
    _
  $region17: #{generator_forward.17} parent=0 // pred_fallthru
    _
  // Predicated region
  $region18: #{generator_forward.17} parent=0 // pred_check
    _
  $region19: #{generator_forward.17} parent=0 // pred_check_branch
    %136 = sbr.rel (0) target = $region21
  $region20: #{generator_forward.17} parent=0 // pred_region
    _
  $region21: #{generator_forward.17} parent=0 // pred_fallthru
    _
  // Predicated region
  $region22: #{generator_forward.17} parent=0 // pred_check
    _
  $region23: #{generator_forward.17} parent=0 // pred_check_branch
    %138 = sbr.rel (0) target = $region25
  $region24: #{generator_forward.17} parent=0 // pred_region
    _
  $region25: #{generator_forward.17} parent=0 // pred_fallthru
    _

// kernel: generator_forward.18
$region0: #{generator_forward.18}
  #allocation0 [shape = 'u32[]', space=smem, size = 0x4, offset = 0x4, fixed_abs, tag = 'smem constant byte address 0x4 - core index']
  #allocation1 [shape = 'u32[144,128]{1,0:T(1,128)}', space=vmem, size = 0x12000, scoped, tag = 'internal scratch']
  %s0 = inlined_call_operand.vmem [shape: f32[128,32], index: 0, kind: input, shape index: {}]
  %s1 = inlined_call_operand.vmem [shape: f32[1,32], index: 1, kind: input, shape index: {}]
  %s2 = inlined_call_operand.vmem [shape: f32[1,32], index: 2, kind: input, shape index: {}]
  %s3 = inlined_call_operand.vmem [shape: f32[128,32], index: 3, kind: output, shape index: {}]
  %s4 = sld [smem:[#allocation0]]
  $region22: #{generator_forward.18} parent=0
    _
  %s6 = ssub.s32 1, %s4
  %s7 = scalar_select 0, %s6, %s4
  // Predicated region
  $region2: #{generator_forward.18} parent=0 // pred_check
    _
  $region3: #{generator_forward.18} parent=0 // pred_check_branch
    %9 = sbr.rel (0) target = $region5
  $region4: #{generator_forward.18} parent=0 // pred_region
    _
  $region5: #{generator_forward.18} parent=0 // pred_fallthru
    _
  // Predicated region
  $region6: #{generator_forward.18} parent=0 // pred_check
    _
  $region7: #{generator_forward.18} parent=0 // pred_check_branch
    %11 = sbr.rel (0) target = $region9
  $region8: #{generator_forward.18} parent=0 // pred_region
    _
  $region9: #{generator_forward.18} parent=0 // pred_fallthru
    _
  // Predicated region
  $region10: #{generator_forward.18} parent=0 // pred_check
    _
  $region11: #{generator_forward.18} parent=0 // pred_check_branch
    %13 = sbr.rel (0) target = $region13
  $region12: #{generator_forward.18} parent=0 // pred_region
    _
  $region13: #{generator_forward.18} parent=0 // pred_fallthru
    _
  %v14 = vld [vmem:[%s0] sm:$0xff]
  %v15 = vld [vmem:[%s0 + $0x8] sm:$0xff]
  %v16 = vld [vmem:[%s0 + $0x10] sm:$0xff]
  %v17 = vld [vmem:[%s0 + $0x18] sm:$0xff]
  %v18 = vld [vmem:[%s0 + $0x20] sm:$0xff]
  %v19 = vld [vmem:[%s0 + $0x28] sm:$0xff]
  %v20 = vld [vmem:[%s0 + $0x30] sm:$0xff]
  %v21 = vld [vmem:[%s0 + $0x38] sm:$0xff]
  %v22 = vld [vmem:[%s0 + $0x40] sm:$0xff]
  %v23 = vld [vmem:[%s0 + $0x48] sm:$0xff]
  %v24 = vld [vmem:[%s0 + $0x50] sm:$0xff]
  %v25 = vld [vmem:[%s0 + $0x58] sm:$0xff]
  %v26 = vld [vmem:[%s0 + $0x60] sm:$0xff]
  %v27 = vld [vmem:[%s0 + $0x68] sm:$0xff]
  %v28 = vld [vmem:[%s0 + $0x70] sm:$0xff]
  %v29 = vld [vmem:[%s0 + $0x78] sm:$0xff]
  %v30 = vld [vmem:[%s1] sm:$0x1]
  %v32 = vlaneseq
  %v33 = vshrl.u32 %v32, 7
  %v34 = vsub.s32 0, %v33
  %v35 = vrot.slane %v30, %v34
  %v37 = vmul.f32 %v14, %v35
  %v38 = vmul.f32 %v15, %v35
  %v39 = vmul.f32 %v16, %v35
  %v40 = vmul.f32 %v17, %v35
  %v41 = vmul.f32 %v18, %v35
  %v42 = vmul.f32 %v19, %v35
  %v43 = vmul.f32 %v20, %v35
  %v44 = vmul.f32 %v21, %v35
  %v45 = vmul.f32 %v22, %v35
  %v46 = vmul.f32 %v23, %v35
  %v47 = vmul.f32 %v24, %v35
  %v48 = vmul.f32 %v25, %v35
  %v49 = vmul.f32 %v26, %v35
  %v50 = vmul.f32 %v27, %v35
  %v51 = vmul.f32 %v28, %v35
  %v52 = vmul.f32 %v29, %v35
  %v53 = vld [vmem:[%s2] sm:$0x1]
  %v55 = vlaneseq
  %v56 = vshrl.u32 %v55, 7
  %v57 = vsub.s32 0, %v56
  %v58 = vrot.slane %v53, %v57
  %v60 = vadd.f32 %v37, %v58
  %v61 = vadd.f32 %v38, %v58
  %v62 = vadd.f32 %v39, %v58
  %v63 = vadd.f32 %v40, %v58
  %v64 = vadd.f32 %v41, %v58
  %v65 = vadd.f32 %v42, %v58
  %v66 = vadd.f32 %v43, %v58
  %v67 = vadd.f32 %v44, %v58
  %v68 = vadd.f32 %v45, %v58
  %v69 = vadd.f32 %v46, %v58
  %v70 = vadd.f32 %v47, %v58
  %v71 = vadd.f32 %v48, %v58
  %v72 = vadd.f32 %v49, %v58
  %v73 = vadd.f32 %v50, %v58
  %v74 = vadd.f32 %v51, %v58
  %v75 = vadd.f32 %v52, %v58
  %v76 = vmax.f32 %v60, 0.0
  %v77 = vmax.f32 %v61, 0.0
  %v78 = vmax.f32 %v62, 0.0
  %v79 = vmax.f32 %v63, 0.0
  %v80 = vmax.f32 %v64, 0.0
  %v81 = vmax.f32 %v65, 0.0
  %v82 = vmax.f32 %v66, 0.0
  %v83 = vmax.f32 %v67, 0.0
  %v84 = vmax.f32 %v68, 0.0
  %v85 = vmax.f32 %v69, 0.0
  %v86 = vmax.f32 %v70, 0.0
  %v87 = vmax.f32 %v71, 0.0
  %v88 = vmax.f32 %v72, 0.0
  %v89 = vmax.f32 %v73, 0.0
  %v90 = vmax.f32 %v74, 0.0
  %v91 = vmax.f32 %v75, 0.0
  %vm92 = vcmask 261120
  %93 = vst.msk [vmem:[%s3] sm:$0xff] %vm92, %v76
  %94 = vst.msk [vmem:[%s3 + $0x8] sm:$0xff] %vm92, %v77
  %95 = vst.msk [vmem:[%s3 + $0x10] sm:$0xff] %vm92, %v78
  %96 = vst.msk [vmem:[%s3 + $0x18] sm:$0xff] %vm92, %v79
  %97 = vst.msk [vmem:[%s3 + $0x20] sm:$0xff] %vm92, %v80
  %98 = vst.msk [vmem:[%s3 + $0x28] sm:$0xff] %vm92, %v81
  %99 = vst.msk [vmem:[%s3 + $0x30] sm:$0xff] %vm92, %v82
  %100 = vst.msk [vmem:[%s3 + $0x38] sm:$0xff] %vm92, %v83
  %101 = vst.msk [vmem:[%s3 + $0x40] sm:$0xff] %vm92, %v84
  %102 = vst.msk [vmem:[%s3 + $0x48] sm:$0xff] %vm92, %v85
  %103 = vst.msk [vmem:[%s3 + $0x50] sm:$0xff] %vm92, %v86
  %104 = vst.msk [vmem:[%s3 + $0x58] sm:$0xff] %vm92, %v87
  %105 = vst.msk [vmem:[%s3 + $0x60] sm:$0xff] %vm92, %v88
  %106 = vst.msk [vmem:[%s3 + $0x68] sm:$0xff] %vm92, %v89
  %107 = vst.msk [vmem:[%s3 + $0x70] sm:$0xff] %vm92, %v90
  %108 = vst.msk [vmem:[%s3 + $0x78] sm:$0xff] %vm92, %v91
  // Predicated region
  $region14: #{generator_forward.18} parent=0 // pred_check
    _
  $region15: #{generator_forward.18} parent=0 // pred_check_branch
    %110 = sbr.rel (0) target = $region17
  $region16: #{generator_forward.18} parent=0 // pred_region
    _
  $region17: #{generator_forward.18} parent=0 // pred_fallthru
    _
  // Predicated region
  $region18: #{generator_forward.18} parent=0 // pred_check
    _
  $region19: #{generator_forward.18} parent=0 // pred_check_branch
    %112 = sbr.rel (0) target = $region21
  $region20: #{generator_forward.18} parent=0 // pred_region
    _
  $region21: #{generator_forward.18} parent=0 // pred_fallthru
    _

// kernel: generator_forward.19
$region0: #{generator_forward.19}
  #allocation0 [shape = 'u32[]', space=smem, size = 0x4, offset = 0x4, fixed_abs, tag = 'smem constant byte address 0x4 - core index']
  #allocation1 [shape = 'u32[144,128]{1,0:T(1,128)}', space=vmem, size = 0x12000, scoped, tag = 'internal scratch']
  #allocation2 [shape = 'f32[168,128]{1,0:T(8,128)}', space=vmem, size = 0x15000, scoped, tag = 'scratch operand']
  %s0 = inlined_call_operand.vmem [shape: bf16[168,128], index: 0, kind: input, shape index: {}]
  %s1 = inlined_call_operand.vmem [shape: bf16[128,128], index: 1, kind: input, shape index: {}]
  %s2 = inlined_call_operand.vmem [shape: f32[1,128], index: 2, kind: input, shape index: {}]
  %s3 = inlined_call_operand.vmem [shape: f32[168,128], index: 3, kind: output, shape index: {}]
  %s4 = sld [smem:[#allocation0]]
  $region30: #{generator_forward.19} parent=0
    _
  %s6 = ssub.s32 1, %s4
  %s7 = scalar_select 0, %s6, %s4
  // Predicated region
  $region2: #{generator_forward.19} parent=0 // pred_check
    _
  $region3: #{generator_forward.19} parent=0 // pred_check_branch
    %9 = sbr.rel (0) target = $region5
  $region4: #{generator_forward.19} parent=0 // pred_region
    _
  $region5: #{generator_forward.19} parent=0 // pred_fallthru
    _
  // Predicated region
  $region6: #{generator_forward.19} parent=0 // pred_check
    _
  $region7: #{generator_forward.19} parent=0 // pred_check_branch
    %11 = sbr.rel (0) target = $region9
  $region8: #{generator_forward.19} parent=0 // pred_region
    _
  $region9: #{generator_forward.19} parent=0 // pred_fallthru
    _
  // Predicated region
  $region10: #{generator_forward.19} parent=0 // pred_check
    _
  $region11: #{generator_forward.19} parent=0 // pred_check_branch
    %13 = sbr.rel (0) target = $region13
  $region12: #{generator_forward.19} parent=0 // pred_region
    _
  $region13: #{generator_forward.19} parent=0 // pred_fallthru
    _
  %p15 = scmp.eq.s32.totalorder 0, 0
  // Predicated region
  $region14: #{generator_forward.19} parent=0 // pred_check
    %p16 = pneg %p15
  $region15: #{generator_forward.19} parent=0 // pred_check_branch
    %18 = sbr.rel (%p16) target = $region17
  $region16: #{generator_forward.19} parent=0 // pred_region
    %19 = vst [vmem:[#allocation2] sm:$0xff] 0.0
    %20 = vst [vmem:[#allocation2 + $0x8] sm:$0xff] 0.0
    %21 = vst [vmem:[#allocation2 + $0x10] sm:$0xff] 0.0
    %22 = vst [vmem:[#allocation2 + $0x18] sm:$0xff] 0.0
    %23 = vst [vmem:[#allocation2 + $0x20] sm:$0xff] 0.0
    %24 = vst [vmem:[#allocation2 + $0x28] sm:$0xff] 0.0
    %25 = vst [vmem:[#allocation2 + $0x30] sm:$0xff] 0.0
    %26 = vst [vmem:[#allocation2 + $0x38] sm:$0xff] 0.0
    %27 = vst [vmem:[#allocation2 + $0x40] sm:$0xff] 0.0
    %28 = vst [vmem:[#allocation2 + $0x48] sm:$0xff] 0.0
    %29 = vst [vmem:[#allocation2 + $0x50] sm:$0xff] 0.0
    %30 = vst [vmem:[#allocation2 + $0x58] sm:$0xff] 0.0
    %31 = vst [vmem:[#allocation2 + $0x60] sm:$0xff] 0.0
    %32 = vst [vmem:[#allocation2 + $0x68] sm:$0xff] 0.0
    %33 = vst [vmem:[#allocation2 + $0x70] sm:$0xff] 0.0
    %34 = vst [vmem:[#allocation2 + $0x78] sm:$0xff] 0.0
    %35 = vst [vmem:[#allocation2 + $0x80] sm:$0xff] 0.0
    %36 = vst [vmem:[#allocation2 + $0x88] sm:$0xff] 0.0
    %37 = vst [vmem:[#allocation2 + $0x90] sm:$0xff] 0.0
    %38 = vst [vmem:[#allocation2 + $0x98] sm:$0xff] 0.0
    %39 = vst [vmem:[#allocation2 + $0xa0] sm:$0xff] 0.0
  $region17: #{generator_forward.19} parent=0 // pred_fallthru
    _
  %v40 = vld [vmem:[#allocation2] sm:$0xff]
  %v41 = vld [vmem:[#allocation2 + $0x8] sm:$0xff]
  %v42 = vld [vmem:[#allocation2 + $0x10] sm:$0xff]
  %v43 = vld [vmem:[#allocation2 + $0x18] sm:$0xff]
  %v44 = vld [vmem:[#allocation2 + $0x20] sm:$0xff]
  %v45 = vld [vmem:[#allocation2 + $0x28] sm:$0xff]
  %v46 = vld [vmem:[#allocation2 + $0x30] sm:$0xff]
  %v47 = vld [vmem:[#allocation2 + $0x38] sm:$0xff]
  %v48 = vld [vmem:[#allocation2 + $0x40] sm:$0xff]
  %v49 = vld [vmem:[#allocation2 + $0x48] sm:$0xff]
  %v50 = vld [vmem:[#allocation2 + $0x50] sm:$0xff]
  %v51 = vld [vmem:[#allocation2 + $0x58] sm:$0xff]
  %v52 = vld [vmem:[#allocation2 + $0x60] sm:$0xff]
  %v53 = vld [vmem:[#allocation2 + $0x68] sm:$0xff]
  %v54 = vld [vmem:[#allocation2 + $0x70] sm:$0xff]
  %v55 = vld [vmem:[#allocation2 + $0x78] sm:$0xff]
  %v56 = vld [vmem:[#allocation2 + $0x80] sm:$0xff]
  %v57 = vld [vmem:[#allocation2 + $0x88] sm:$0xff]
  %v58 = vld [vmem:[#allocation2 + $0x90] sm:$0xff]
  %v59 = vld [vmem:[#allocation2 + $0x98] sm:$0xff]
  %v60 = vld [vmem:[#allocation2 + $0xa0] sm:$0xff]
  %v61 = vld [vmem:[%s0] sm:$0xf]
  %v62 = vld [vmem:[%s0 + $0x4] sm:$0xf]
  %v63 = vld [vmem:[%s0 + $0x8] sm:$0xf]
  %v64 = vld [vmem:[%s0 + $0xc] sm:$0xf]
  %v65 = vld [vmem:[%s0 + $0x10] sm:$0xf]
  %v66 = vld [vmem:[%s0 + $0x14] sm:$0xf]
  %v67 = vld [vmem:[%s0 + $0x18] sm:$0xf]
  %v68 = vld [vmem:[%s0 + $0x1c] sm:$0xf]
  %v69 = vld [vmem:[%s0 + $0x20] sm:$0xf]
  %v70 = vld [vmem:[%s0 + $0x24] sm:$0xf]
  %v71 = vld [vmem:[%s0 + $0x28] sm:$0xf]
  %v72 = vld [vmem:[%s0 + $0x2c] sm:$0xf]
  %v73 = vld [vmem:[%s0 + $0x30] sm:$0xf]
  %v74 = vld [vmem:[%s0 + $0x34] sm:$0xf]
  %v75 = vld [vmem:[%s0 + $0x38] sm:$0xf]
  %v76 = vld [vmem:[%s0 + $0x3c] sm:$0xf]
  %v77 = vld [vmem:[%s0 + $0x40] sm:$0xf]
  %v78 = vld [vmem:[%s0 + $0x44] sm:$0xf]
  %v79 = vld [vmem:[%s0 + $0x48] sm:$0xf]
  %v80 = vld [vmem:[%s0 + $0x4c] sm:$0xf]
  %v81 = vld [vmem:[%s0 + $0x50] sm:$0xf]
  %v82 = vld [vmem:[%s1] sm:$0xf]
  %v83 = vld [vmem:[%s1 + $0x4] sm:$0xf]
  %v84 = vld [vmem:[%s1 + $0x8] sm:$0xf]
  %v85 = vld [vmem:[%s1 + $0xc] sm:$0xf]
  %v86 = vld [vmem:[%s1 + $0x10] sm:$0xf]
  %v87 = vld [vmem:[%s1 + $0x14] sm:$0xf]
  %v88 = vld [vmem:[%s1 + $0x18] sm:$0xf]
  %v89 = vld [vmem:[%s1 + $0x1c] sm:$0xf]
  %v90 = vld [vmem:[%s1 + $0x20] sm:$0xf]
  %v91 = vld [vmem:[%s1 + $0x24] sm:$0xf]
  %v92 = vld [vmem:[%s1 + $0x28] sm:$0xf]
  %v93 = vld [vmem:[%s1 + $0x2c] sm:$0xf]
  %v94 = vld [vmem:[%s1 + $0x30] sm:$0xf]
  %v95 = vld [vmem:[%s1 + $0x34] sm:$0xf]
  %v96 = vld [vmem:[%s1 + $0x38] sm:$0xf]
  %v97 = vld [vmem:[%s1 + $0x3c] sm:$0xf]
  %v119 = vunpack.c.l.b16 %v61
  %v120 = vunpack.c.l.b16 %v62
  %v121 = vunpack.c.l.b16 %v63
  %v122 = vunpack.c.l.b16 %v64
  %v123 = vunpack.c.l.b16 %v65
  %v124 = vunpack.c.l.b16 %v66
  %v125 = vunpack.c.l.b16 %v67
  %v126 = vunpack.c.l.b16 %v68
  %v127 = vunpack.c.l.b16 %v69
  %v128 = vunpack.c.l.b16 %v70
  %v129 = vunpack.c.l.b16 %v71
  %v130 = vunpack.c.l.b16 %v72
  %v131 = vunpack.c.l.b16 %v73
  %v132 = vunpack.c.l.b16 %v74
  %v133 = vunpack.c.l.b16 %v75
  %v134 = vunpack.c.l.b16 %v76
  %v135 = vunpack.c.l.b16 %v77
  %v136 = vunpack.c.l.b16 %v78
  %v137 = vunpack.c.l.b16 %v79
  %v138 = vunpack.c.l.b16 %v80
  %v139 = vunpack.c.l.b16 %v81
  %v140 = vpack.c.b16 %v120, %v119
  %v141 = vpack.c.b16 %v122, %v121
  %v142 = vpack.c.b16 %v124, %v123
  %v143 = vpack.c.b16 %v126, %v125
  %v144 = vpack.c.b16 %v128, %v127
  %v145 = vpack.c.b16 %v130, %v129
  %v146 = vpack.c.b16 %v132, %v131
  %v147 = vpack.c.b16 %v134, %v133
  %v148 = vpack.c.b16 %v136, %v135
  %v149 = vpack.c.b16 %v138, %v137
  %v150 = vpack.c.b16 %v139, %v139
  %v178 = vunpack.c.l.b16 %v82
  %v179 = vunpack.c.l.b16 %v83
  %v180 = vunpack.c.l.b16 %v84
  %v181 = vunpack.c.l.b16 %v85
  %v182 = vunpack.c.l.b16 %v86
  %v183 = vunpack.c.l.b16 %v87
  %v184 = vunpack.c.l.b16 %v88
  %v185 = vunpack.c.l.b16 %v89
  %v186 = vunpack.c.l.b16 %v90
  %v187 = vunpack.c.l.b16 %v91
  %v188 = vunpack.c.l.b16 %v92
  %v189 = vunpack.c.l.b16 %v93
  %v190 = vunpack.c.l.b16 %v94
  %v191 = vunpack.c.l.b16 %v95
  %v192 = vunpack.c.l.b16 %v96
  %v193 = vunpack.c.l.b16 %v97
  %v194 = vpack.c.b16 %v179, %v178
  %v195 = vpack.c.b16 %v181, %v180
  %v196 = vpack.c.b16 %v183, %v182
  %v197 = vpack.c.b16 %v185, %v184
  %v198 = vpack.c.b16 %v187, %v186
  %v199 = vpack.c.b16 %v189, %v188
  %v200 = vpack.c.b16 %v191, %v190
  %v201 = vpack.c.b16 %v193, %v192
  %210 = vmatprep.subr.bf16.mxu0 0
  %211 = vmatpush1.bf16.msra.mxu0 %v201
  %212 = vmatprep.subr.bf16.mxu0 0
  %213 = vmatpush1.bf16.msra.mxu0 %v200
  %214 = vmatprep.subr.bf16.mxu0 0
  %215 = vmatpush1.bf16.msra.mxu0 %v199
  %216 = vmatprep.subr.bf16.mxu0 0
  %217 = vmatpush1.bf16.msra.mxu0 %v198
  %218 = vmatprep.subr.bf16.mxu0 0
  %219 = vmatpush1.bf16.msra.mxu0 %v197
  %220 = vmatprep.subr.bf16.mxu0 0
  %221 = vmatpush1.bf16.msra.mxu0 %v196
  %222 = vmatprep.subr.bf16.mxu0 0
  %223 = vmatpush1.bf16.msra.mxu0 %v195
  %224 = vmatprep.subr.bf16.mxu0 0
  %225 = vmatpush1.bf16.msra.mxu0 %v194
  %226 = vmatprep.subr.bf16.mxu0 0
  %227 = vmatpush2.bf16.msra.mxu0 0
  %228 = vmatprep.subr.bf16.mxu0 0
  %229 = vmatpush2.bf16.msra.mxu0 0
  %230 = vmatprep.subr.bf16.mxu0 0
  %231 = vmatpush2.bf16.msra.mxu0 0
  %232 = vmatprep.subr.bf16.mxu0 0
  %233 = vmatpush2.bf16.msra.mxu0 0
  %234 = vmatprep.subr.bf16.mxu0 0
  %235 = vmatpush2.bf16.msra.mxu0 0
  %236 = vmatprep.subr.bf16.mxu0 0
  %237 = vmatpush2.bf16.msra.mxu0 0
  %238 = vmatprep.subr.bf16.mxu0 0
  %239 = vmatpush2.bf16.msra.mxu0 0
  %240 = vmatprep.subr.bf16.mxu0 0
  %241 = vmatpush2.bf16.msra.mxu0 0
  %242 = vmatprep.mubr.bf16.mxu0 0
  %243 = vmatmul.mubr.bf16.gmra.mxu0 %v140
  %v244 = vpop.f32.mrf.mxu0
  %v245 = vadd.f32 0.0, %v244
  %v246 = vpop.f32.mrf.mxu0
  %v247 = vpop.f32.mrf.mxu0
  %v248 = vadd.f32 0.0, %v247
  %v249 = vpop.f32.mrf.mxu0
  %250 = vmatprep.mubr.bf16.mxu0 0
  %251 = vmatmul.mubr.bf16.gmra.mxu0 %v141
  %v252 = vpop.f32.mrf.mxu0
  %v253 = vadd.f32 0.0, %v252
  %v254 = vpop.f32.mrf.mxu0
  %v255 = vpop.f32.mrf.mxu0
  %v256 = vadd.f32 0.0, %v255
  %v257 = vpop.f32.mrf.mxu0
  %258 = vmatprep.mubr.bf16.mxu0 0
  %259 = vmatmul.mubr.bf16.gmra.mxu0 %v142
  %v260 = vpop.f32.mrf.mxu0
  %v261 = vadd.f32 0.0, %v260
  %v262 = vpop.f32.mrf.mxu0
  %v263 = vpop.f32.mrf.mxu0
  %v264 = vadd.f32 0.0, %v263
  %v265 = vpop.f32.mrf.mxu0
  %266 = vmatprep.mubr.bf16.mxu0 0
  %267 = vmatmul.mubr.bf16.gmra.mxu0 %v143
  %v268 = vpop.f32.mrf.mxu0
  %v269 = vadd.f32 0.0, %v268
  %v270 = vpop.f32.mrf.mxu0
  %v271 = vpop.f32.mrf.mxu0
  %v272 = vadd.f32 0.0, %v271
  %v273 = vpop.f32.mrf.mxu0
  %274 = vmatprep.mubr.bf16.mxu0 0
  %275 = vmatmul.mubr.bf16.gmra.mxu0 %v144
  %v276 = vpop.f32.mrf.mxu0
  %v277 = vadd.f32 0.0, %v276
  %v278 = vpop.f32.mrf.mxu0
  %v279 = vpop.f32.mrf.mxu0
  %v280 = vadd.f32 0.0, %v279
  %v281 = vpop.f32.mrf.mxu0
  %282 = vmatprep.mubr.bf16.mxu0 0
  %283 = vmatmul.mubr.bf16.gmra.mxu0 %v145
  %v284 = vpop.f32.mrf.mxu0
  %v285 = vadd.f32 0.0, %v284
  %v286 = vpop.f32.mrf.mxu0
  %v287 = vpop.f32.mrf.mxu0
  %v288 = vadd.f32 0.0, %v287
  %v289 = vpop.f32.mrf.mxu0
  %290 = vmatprep.mubr.bf16.mxu0 0
  %291 = vmatmul.mubr.bf16.gmra.mxu0 %v146
  %v292 = vpop.f32.mrf.mxu0
  %v293 = vadd.f32 0.0, %v292
  %v294 = vpop.f32.mrf.mxu0
  %v295 = vpop.f32.mrf.mxu0
  %v296 = vadd.f32 0.0, %v295
  %v297 = vpop.f32.mrf.mxu0
  %298 = vmatprep.mubr.bf16.mxu0 0
  %299 = vmatmul.mubr.bf16.gmra.mxu0 %v147
  %v300 = vpop.f32.mrf.mxu0
  %v301 = vadd.f32 0.0, %v300
  %v302 = vpop.f32.mrf.mxu0
  %v303 = vpop.f32.mrf.mxu0
  %v304 = vadd.f32 0.0, %v303
  %v305 = vpop.f32.mrf.mxu0
  %306 = vmatprep.mubr.bf16.mxu0 0
  %307 = vmatmul.mubr.bf16.gmra.mxu0 %v148
  %v308 = vpop.f32.mrf.mxu0
  %v309 = vadd.f32 0.0, %v308
  %v310 = vpop.f32.mrf.mxu0
  %v311 = vpop.f32.mrf.mxu0
  %v312 = vadd.f32 0.0, %v311
  %v313 = vpop.f32.mrf.mxu0
  %314 = vmatprep.mubr.bf16.mxu0 0
  %315 = vmatmul.mubr.bf16.gmra.mxu0 %v149
  %v316 = vpop.f32.mrf.mxu0
  %v317 = vadd.f32 0.0, %v316
  %v318 = vpop.f32.mrf.mxu0
  %v319 = vpop.f32.mrf.mxu0
  %v320 = vadd.f32 0.0, %v319
  %v321 = vpop.f32.mrf.mxu0
  %322 = vmatprep.mubr.bf16.mxu0 0
  %323 = vmatmul.mubr.bf16.gmra.mxu0 %v150
  %v324 = vpop.f32.mrf.mxu0
  %v325 = vadd.f32 0.0, %v324
  %v326 = vpop.f32.mrf.mxu0
  %v327 = vpop.f32.mrf.mxu0
  %v328 = vpop.f32.mrf.mxu0
  %329 = vdwg.mxu0
  %v330 = vadd.f32 %v40, %v245
  %v331 = vadd.f32 %v41, %v248
  %v332 = vadd.f32 %v42, %v253
  %v333 = vadd.f32 %v43, %v256
  %v334 = vadd.f32 %v44, %v261
  %v335 = vadd.f32 %v45, %v264
  %v336 = vadd.f32 %v46, %v269
  %v337 = vadd.f32 %v47, %v272
  %v338 = vadd.f32 %v48, %v277
  %v339 = vadd.f32 %v49, %v280
  %v340 = vadd.f32 %v50, %v285
  %v341 = vadd.f32 %v51, %v288
  %v342 = vadd.f32 %v52, %v293
  %v343 = vadd.f32 %v53, %v296
  %v344 = vadd.f32 %v54, %v301
  %v345 = vadd.f32 %v55, %v304
  %v346 = vadd.f32 %v56, %v309
  %v347 = vadd.f32 %v57, %v312
  %v348 = vadd.f32 %v58, %v317
  %v349 = vadd.f32 %v59, %v320
  %v350 = vadd.f32 %v60, %v325
  %351 = vst [vmem:[#allocation2] sm:$0xff] %v330
  %352 = vst [vmem:[#allocation2 + $0x8] sm:$0xff] %v331
  %353 = vst [vmem:[#allocation2 + $0x10] sm:$0xff] %v332
  %354 = vst [vmem:[#allocation2 + $0x18] sm:$0xff] %v333
  %355 = vst [vmem:[#allocation2 + $0x20] sm:$0xff] %v334
  %356 = vst [vmem:[#allocation2 + $0x28] sm:$0xff] %v335
  %357 = vst [vmem:[#allocation2 + $0x30] sm:$0xff] %v336
  %358 = vst [vmem:[#allocation2 + $0x38] sm:$0xff] %v337
  %359 = vst [vmem:[#allocation2 + $0x40] sm:$0xff] %v338
  %360 = vst [vmem:[#allocation2 + $0x48] sm:$0xff] %v339
  %361 = vst [vmem:[#allocation2 + $0x50] sm:$0xff] %v340
  %362 = vst [vmem:[#allocation2 + $0x58] sm:$0xff] %v341
  %363 = vst [vmem:[#allocation2 + $0x60] sm:$0xff] %v342
  %364 = vst [vmem:[#allocation2 + $0x68] sm:$0xff] %v343
  %365 = vst [vmem:[#allocation2 + $0x70] sm:$0xff] %v344
  %366 = vst [vmem:[#allocation2 + $0x78] sm:$0xff] %v345
  %367 = vst [vmem:[#allocation2 + $0x80] sm:$0xff] %v346
  %368 = vst [vmem:[#allocation2 + $0x88] sm:$0xff] %v347
  %369 = vst [vmem:[#allocation2 + $0x90] sm:$0xff] %v348
  %370 = vst [vmem:[#allocation2 + $0x98] sm:$0xff] %v349
  %371 = vst [vmem:[#allocation2 + $0xa0] sm:$0xff] %v350
  // Predicated region
  $region18: #{generator_forward.19} parent=0 // pred_check
    %p372 = pneg %p15
  $region19: #{generator_forward.19} parent=0 // pred_check_branch
    %374 = sbr.rel (%p372) target = $region21
  $region20: #{generator_forward.19} parent=0 // pred_region
    %v375 = vld [vmem:[#allocation2] sm:$0xff]
    %v376 = vld [vmem:[#allocation2 + $0x8] sm:$0xff]
    %v377 = vld [vmem:[#allocation2 + $0x10] sm:$0xff]
    %v378 = vld [vmem:[#allocation2 + $0x18] sm:$0xff]
    %v379 = vld [vmem:[#allocation2 + $0x20] sm:$0xff]
    %v380 = vld [vmem:[#allocation2 + $0x28] sm:$0xff]
    %v381 = vld [vmem:[#allocation2 + $0x30] sm:$0xff]
    %v382 = vld [vmem:[#allocation2 + $0x38] sm:$0xff]
    %v383 = vld [vmem:[#allocation2 + $0x40] sm:$0xff]
    %v384 = vld [vmem:[#allocation2 + $0x48] sm:$0xff]
    %v385 = vld [vmem:[#allocation2 + $0x50] sm:$0xff]
    %v386 = vld [vmem:[#allocation2 + $0x58] sm:$0xff]
    %v387 = vld [vmem:[#allocation2 + $0x60] sm:$0xff]
    %v388 = vld [vmem:[#allocation2 + $0x68] sm:$0xff]
    %v389 = vld [vmem:[#allocation2 + $0x70] sm:$0xff]
    %v390 = vld [vmem:[#allocation2 + $0x78] sm:$0xff]
    %v391 = vld [vmem:[#allocation2 + $0x80] sm:$0xff]
    %v392 = vld [vmem:[#allocation2 + $0x88] sm:$0xff]
    %v393 = vld [vmem:[#allocation2 + $0x90] sm:$0xff]
    %v394 = vld [vmem:[#allocation2 + $0x98] sm:$0xff]
    %v395 = vld [vmem:[#allocation2 + $0xa0] sm:$0xff]
    %v396 = vld [vmem:[%s2] sm:$0x1]
    %v398 = vlaneseq
    %v399 = vshrl.u32 %v398, 7
    %v400 = vsub.s32 0, %v399
    %v401 = vrot.slane %v396, %v400
    %v403 = vadd.f32 %v375, %v401
    %v404 = vadd.f32 %v376, %v401
    %v405 = vadd.f32 %v377, %v401
    %v406 = vadd.f32 %v378, %v401
    %v407 = vadd.f32 %v379, %v401
    %v408 = vadd.f32 %v380, %v401
    %v409 = vadd.f32 %v381, %v401
    %v410 = vadd.f32 %v382, %v401
    %v411 = vadd.f32 %v383, %v401
    %v412 = vadd.f32 %v384, %v401
    %v413 = vadd.f32 %v385, %v401
    %v414 = vadd.f32 %v386, %v401
    %v415 = vadd.f32 %v387, %v401
    %v416 = vadd.f32 %v388, %v401
    %v417 = vadd.f32 %v389, %v401
    %v418 = vadd.f32 %v390, %v401
    %v419 = vadd.f32 %v391, %v401
    %v420 = vadd.f32 %v392, %v401
    %v421 = vadd.f32 %v393, %v401
    %v422 = vadd.f32 %v394, %v401
    %v423 = vadd.f32 %v395, %v401
    %424 = vst [vmem:[%s3] sm:$0xff] %v403
    %425 = vst [vmem:[%s3 + $0x8] sm:$0xff] %v404
    %426 = vst [vmem:[%s3 + $0x10] sm:$0xff] %v405
    %427 = vst [vmem:[%s3 + $0x18] sm:$0xff] %v406
    %428 = vst [vmem:[%s3 + $0x20] sm:$0xff] %v407
    %429 = vst [vmem:[%s3 + $0x28] sm:$0xff] %v408
    %430 = vst [vmem:[%s3 + $0x30] sm:$0xff] %v409
    %431 = vst [vmem:[%s3 + $0x38] sm:$0xff] %v410
    %432 = vst [vmem:[%s3 + $0x40] sm:$0xff] %v411
    %433 = vst [vmem:[%s3 + $0x48] sm:$0xff] %v412
    %434 = vst [vmem:[%s3 + $0x50] sm:$0xff] %v413
    %435 = vst [vmem:[%s3 + $0x58] sm:$0xff] %v414
    %436 = vst [vmem:[%s3 + $0x60] sm:$0xff] %v415
    %437 = vst [vmem:[%s3 + $0x68] sm:$0xff] %v416
    %438 = vst [vmem:[%s3 + $0x70] sm:$0xff] %v417
    %439 = vst [vmem:[%s3 + $0x78] sm:$0xff] %v418
    %440 = vst [vmem:[%s3 + $0x80] sm:$0xff] %v419
    %441 = vst [vmem:[%s3 + $0x88] sm:$0xff] %v420
    %442 = vst [vmem:[%s3 + $0x90] sm:$0xff] %v421
    %443 = vst [vmem:[%s3 + $0x98] sm:$0xff] %v422
    %444 = vst [vmem:[%s3 + $0xa0] sm:$0xff] %v423
  $region21: #{generator_forward.19} parent=0 // pred_fallthru
    _
  // Predicated region
  $region22: #{generator_forward.19} parent=0 // pred_check
    _
  $region23: #{generator_forward.19} parent=0 // pred_check_branch
    %446 = sbr.rel (0) target = $region25
  $region24: #{generator_forward.19} parent=0 // pred_region
    _
  $region25: #{generator_forward.19} parent=0 // pred_fallthru
    _
  // Predicated region
  $region26: #{generator_forward.19} parent=0 // pred_check
    _
  $region27: #{generator_forward.19} parent=0 // pred_check_branch
    %448 = sbr.rel (0) target = $region29
  $region28: #{generator_forward.19} parent=0 // pred_region
    _
  $region29: #{generator_forward.19} parent=0 // pred_fallthru
    _

// kernel: generator_forward.20
$region0: #{generator_forward.20}
  #allocation0 [shape = 'u32[]', space=smem, size = 0x4, offset = 0x4, fixed_abs, tag = 'smem constant byte address 0x4 - core index']
  #allocation1 [shape = 'u32[144,128]{1,0:T(1,128)}', space=vmem, size = 0x12000, scoped, tag = 'internal scratch']
  %s0 = inlined_call_operand.vmem [shape: f32[512,16], index: 0, kind: input, shape index: {}]
  %s1 = inlined_call_operand.vmem [shape: f32[1,16], index: 1, kind: output, shape index: {0}]
  %s2 = inlined_call_operand.vmem [shape: f32[1,16], index: 2, kind: output, shape index: {1}]
  %3 = xla_tuple %s1, %s2
  %s4 = sld [smem:[#allocation0]]
  $region26: #{generator_forward.20} parent=0
    _
  %s6 = ssub.s32 1, %s4
  %s7 = scalar_select 0, %s6, %s4
  // Predicated region
  $region2: #{generator_forward.20} parent=0 // pred_check
    _
  $region3: #{generator_forward.20} parent=0 // pred_check_branch
    %9 = sbr.rel (0) target = $region5
  $region4: #{generator_forward.20} parent=0 // pred_region
    _
  $region5: #{generator_forward.20} parent=0 // pred_fallthru
    _
  %p10 = scmp.eq.s32.totalorder 0, 0
  // Predicated region
  $region6: #{generator_forward.20} parent=0 // pred_check
    %p11 = pneg %p10
  $region7: #{generator_forward.20} parent=0 // pred_check_branch
    %13 = sbr.rel (%p11) target = $region9
  $region8: #{generator_forward.20} parent=0 // pred_region
    %vm14 = vcmask 122880
    %15 = vst.msk [vmem:[%s1] sm:$0x1] %vm14, 0.0
    %16 = vst.msk [vmem:[%s2] sm:$0x1] %vm14, 0.0
  $region9: #{generator_forward.20} parent=0 // pred_fallthru
    _
  %v17 = vld [vmem:[%s0] sm:$0xff]
  %v18 = vld [vmem:[%s0 + $0x8] sm:$0xff]
  %v19 = vld [vmem:[%s0 + $0x10] sm:$0xff]
  %v20 = vld [vmem:[%s0 + $0x18] sm:$0xff]
  %v21 = vld [vmem:[%s0 + $0x20] sm:$0xff]
  %v22 = vld [vmem:[%s0 + $0x28] sm:$0xff]
  %v23 = vld [vmem:[%s0 + $0x30] sm:$0xff]
  %v24 = vld [vmem:[%s0 + $0x38] sm:$0xff]
  %v25 = vld [vmem:[%s0 + $0x40] sm:$0xff]
  %v26 = vld [vmem:[%s0 + $0x48] sm:$0xff]
  %v27 = vld [vmem:[%s0 + $0x50] sm:$0xff]
  %v28 = vld [vmem:[%s0 + $0x58] sm:$0xff]
  %v29 = vld [vmem:[%s0 + $0x60] sm:$0xff]
  %v30 = vld [vmem:[%s0 + $0x68] sm:$0xff]
  %v31 = vld [vmem:[%s0 + $0x70] sm:$0xff]
  %v32 = vld [vmem:[%s0 + $0x78] sm:$0xff]
  %v33 = vld [vmem:[%s0 + $0x80] sm:$0xff]
  %v34 = vld [vmem:[%s0 + $0x88] sm:$0xff]
  %v35 = vld [vmem:[%s0 + $0x90] sm:$0xff]
  %v36 = vld [vmem:[%s0 + $0x98] sm:$0xff]
  %v37 = vld [vmem:[%s0 + $0xa0] sm:$0xff]
  %v38 = vld [vmem:[%s0 + $0xa8] sm:$0xff]
  %v39 = vld [vmem:[%s0 + $0xb0] sm:$0xff]
  %v40 = vld [vmem:[%s0 + $0xb8] sm:$0xff]
  %v41 = vld [vmem:[%s0 + $0xc0] sm:$0xff]
  %v42 = vld [vmem:[%s0 + $0xc8] sm:$0xff]
  %v43 = vld [vmem:[%s0 + $0xd0] sm:$0xff]
  %v44 = vld [vmem:[%s0 + $0xd8] sm:$0xff]
  %v45 = vld [vmem:[%s0 + $0xe0] sm:$0xff]
  %v46 = vld [vmem:[%s0 + $0xe8] sm:$0xff]
  %v47 = vld [vmem:[%s0 + $0xf0] sm:$0xff]
  %v48 = vld [vmem:[%s0 + $0xf8] sm:$0xff]
  %v49 = vld [vmem:[%s0 + $0x100] sm:$0xff]
  %v50 = vld [vmem:[%s0 + $0x108] sm:$0xff]
  %v51 = vld [vmem:[%s0 + $0x110] sm:$0xff]
  %v52 = vld [vmem:[%s0 + $0x118] sm:$0xff]
  %v53 = vld [vmem:[%s0 + $0x120] sm:$0xff]
  %v54 = vld [vmem:[%s0 + $0x128] sm:$0xff]
  %v55 = vld [vmem:[%s0 + $0x130] sm:$0xff]
  %v56 = vld [vmem:[%s0 + $0x138] sm:$0xff]
  %v57 = vld [vmem:[%s0 + $0x140] sm:$0xff]
  %v58 = vld [vmem:[%s0 + $0x148] sm:$0xff]
  %v59 = vld [vmem:[%s0 + $0x150] sm:$0xff]
  %v60 = vld [vmem:[%s0 + $0x158] sm:$0xff]
  %v61 = vld [vmem:[%s0 + $0x160] sm:$0xff]
  %v62 = vld [vmem:[%s0 + $0x168] sm:$0xff]
  %v63 = vld [vmem:[%s0 + $0x170] sm:$0xff]
  %v64 = vld [vmem:[%s0 + $0x178] sm:$0xff]
  %v65 = vld [vmem:[%s0 + $0x180] sm:$0xff]
  %v66 = vld [vmem:[%s0 + $0x188] sm:$0xff]
  %v67 = vld [vmem:[%s0 + $0x190] sm:$0xff]
  %v68 = vld [vmem:[%s0 + $0x198] sm:$0xff]
  %v69 = vld [vmem:[%s0 + $0x1a0] sm:$0xff]
  %v70 = vld [vmem:[%s0 + $0x1a8] sm:$0xff]
  %v71 = vld [vmem:[%s0 + $0x1b0] sm:$0xff]
  %v72 = vld [vmem:[%s0 + $0x1b8] sm:$0xff]
  %v73 = vld [vmem:[%s0 + $0x1c0] sm:$0xff]
  %v74 = vld [vmem:[%s0 + $0x1c8] sm:$0xff]
  %v75 = vld [vmem:[%s0 + $0x1d0] sm:$0xff]
  %v76 = vld [vmem:[%s0 + $0x1d8] sm:$0xff]
  %v77 = vld [vmem:[%s0 + $0x1e0] sm:$0xff]
  %v78 = vld [vmem:[%s0 + $0x1e8] sm:$0xff]
  %v79 = vld [vmem:[%s0 + $0x1f0] sm:$0xff]
  %v80 = vld [vmem:[%s0 + $0x1f8] sm:$0xff]
  %v81 = vld [vmem:[%s1] sm:$0x1]
  %vm82 = vcmask 130048
  %v83 = vsel %vm82, %v17, 0.0
  %v84 = vsel %vm82, %v18, 0.0
  %v85 = vadd.f32 %v83, %v84
  %v86 = vsel %vm82, %v19, 0.0
  %v87 = vadd.f32 %v85, %v86
  %v88 = vsel %vm82, %v20, 0.0
  %v89 = vadd.f32 %v87, %v88
  %v90 = vsel %vm82, %v21, 0.0
  %v91 = vadd.f32 %v89, %v90
  %v92 = vsel %vm82, %v22, 0.0
  %v93 = vadd.f32 %v91, %v92
  %v94 = vsel %vm82, %v23, 0.0
  %v95 = vadd.f32 %v93, %v94
  %v96 = vsel %vm82, %v24, 0.0
  %v97 = vadd.f32 %v95, %v96
  %v98 = vsel %vm82, %v25, 0.0
  %v99 = vadd.f32 %v97, %v98
  %v100 = vsel %vm82, %v26, 0.0
  %v101 = vadd.f32 %v99, %v100
  %v102 = vsel %vm82, %v27, 0.0
  %v103 = vadd.f32 %v101, %v102
  %v104 = vsel %vm82, %v28, 0.0
  %v105 = vadd.f32 %v103, %v104
  %v106 = vsel %vm82, %v29, 0.0
  %v107 = vadd.f32 %v105, %v106
  %v108 = vsel %vm82, %v30, 0.0
  %v109 = vadd.f32 %v107, %v108
  %v110 = vsel %vm82, %v31, 0.0
  %v111 = vadd.f32 %v109, %v110
  %v112 = vsel %vm82, %v32, 0.0
  %v113 = vadd.f32 %v111, %v112
  %v114 = vsel %vm82, %v33, 0.0
  %v115 = vadd.f32 %v113, %v114
  %v116 = vsel %vm82, %v34, 0.0
  %v117 = vadd.f32 %v115, %v116
  %v118 = vsel %vm82, %v35, 0.0
  %v119 = vadd.f32 %v117, %v118
  %v120 = vsel %vm82, %v36, 0.0
  %v121 = vadd.f32 %v119, %v120
  %v122 = vsel %vm82, %v37, 0.0
  %v123 = vadd.f32 %v121, %v122
  %v124 = vsel %vm82, %v38, 0.0
  %v125 = vadd.f32 %v123, %v124
  %v126 = vsel %vm82, %v39, 0.0
  %v127 = vadd.f32 %v125, %v126
  %v128 = vsel %vm82, %v40, 0.0
  %v129 = vadd.f32 %v127, %v128
  %v130 = vsel %vm82, %v41, 0.0
  %v131 = vadd.f32 %v129, %v130
  %v132 = vsel %vm82, %v42, 0.0
  %v133 = vadd.f32 %v131, %v132
  %v134 = vsel %vm82, %v43, 0.0
  %v135 = vadd.f32 %v133, %v134
  %v136 = vsel %vm82, %v44, 0.0
  %v137 = vadd.f32 %v135, %v136
  %v138 = vsel %vm82, %v45, 0.0
  %v139 = vadd.f32 %v137, %v138
  %v140 = vsel %vm82, %v46, 0.0
  %v141 = vadd.f32 %v139, %v140
  %v142 = vsel %vm82, %v47, 0.0
  %v143 = vadd.f32 %v141, %v142
  %v144 = vsel %vm82, %v48, 0.0
  %v145 = vadd.f32 %v143, %v144
  %v146 = vsel %vm82, %v49, 0.0
  %v147 = vadd.f32 %v145, %v146
  %v148 = vsel %vm82, %v50, 0.0
  %v149 = vadd.f32 %v147, %v148
  %v150 = vsel %vm82, %v51, 0.0
  %v151 = vadd.f32 %v149, %v150
  %v152 = vsel %vm82, %v52, 0.0
  %v153 = vadd.f32 %v151, %v152
  %v154 = vsel %vm82, %v53, 0.0
  %v155 = vadd.f32 %v153, %v154
  %v156 = vsel %vm82, %v54, 0.0
  %v157 = vadd.f32 %v155, %v156
  %v158 = vsel %vm82, %v55, 0.0
  %v159 = vadd.f32 %v157, %v158
  %v160 = vsel %vm82, %v56, 0.0
  %v161 = vadd.f32 %v159, %v160
  %v162 = vsel %vm82, %v57, 0.0
  %v163 = vadd.f32 %v161, %v162
  %v164 = vsel %vm82, %v58, 0.0
  %v165 = vadd.f32 %v163, %v164
  %v166 = vsel %vm82, %v59, 0.0
  %v167 = vadd.f32 %v165, %v166
  %v168 = vsel %vm82, %v60, 0.0
  %v169 = vadd.f32 %v167, %v168
  %v170 = vsel %vm82, %v61, 0.0
  %v171 = vadd.f32 %v169, %v170
  %v172 = vsel %vm82, %v62, 0.0
  %v173 = vadd.f32 %v171, %v172
  %v174 = vsel %vm82, %v63, 0.0
  %v175 = vadd.f32 %v173, %v174
  %v176 = vsel %vm82, %v64, 0.0
  %v177 = vadd.f32 %v175, %v176
  %v178 = vsel %vm82, %v65, 0.0
  %v179 = vadd.f32 %v177, %v178
  %v180 = vsel %vm82, %v66, 0.0
  %v181 = vadd.f32 %v179, %v180
  %v182 = vsel %vm82, %v67, 0.0
  %v183 = vadd.f32 %v181, %v182
  %v184 = vsel %vm82, %v68, 0.0
  %v185 = vadd.f32 %v183, %v184
  %v186 = vsel %vm82, %v69, 0.0
  %v187 = vadd.f32 %v185, %v186
  %v188 = vsel %vm82, %v70, 0.0
  %v189 = vadd.f32 %v187, %v188
  %v190 = vsel %vm82, %v71, 0.0
  %v191 = vadd.f32 %v189, %v190
  %v192 = vsel %vm82, %v72, 0.0
  %v193 = vadd.f32 %v191, %v192
  %v194 = vsel %vm82, %v73, 0.0
  %v195 = vadd.f32 %v193, %v194
  %v196 = vsel %vm82, %v74, 0.0
  %v197 = vadd.f32 %v195, %v196
  %v198 = vsel %vm82, %v75, 0.0
  %v199 = vadd.f32 %v197, %v198
  %v200 = vsel %vm82, %v76, 0.0
  %v201 = vadd.f32 %v199, %v200
  %v202 = vsel %vm82, %v77, 0.0
  %v203 = vadd.f32 %v201, %v202
  %v204 = vsel %vm82, %v78, 0.0
  %v205 = vadd.f32 %v203, %v204
  %v206 = vsel %vm82, %v79, 0.0
  %v207 = vadd.f32 %v205, %v206
  %v208 = vsel %vm82, %v80, 0.0
  %v209 = vadd.f32 %v207, %v208
  %v210 = vrot.slane %v209, 4
  %v211 = vadd.f32 %v209, %v210
  %v212 = vrot.slane %v211, 2
  %v213 = vadd.f32 %v211, %v212
  %v214 = vrot.slane %v213, 1
  %v215 = vadd.f32 %v213, %v214
  %v216 = vadd.f32 %v81, %v215
  %vm217 = vcmask 122880
  %218 = vst.msk [vmem:[%s1] sm:$0x1] %vm217, %v216
  %v219 = vld [vmem:[%s2] sm:$0x1]
  %v220 = vmul.f32 %v17, %v17
  %v221 = vmul.f32 %v18, %v18
  %v222 = vmul.f32 %v19, %v19
  %v223 = vmul.f32 %v20, %v20
  %v224 = vmul.f32 %v21, %v21
  %v225 = vmul.f32 %v22, %v22
  %v226 = vmul.f32 %v23, %v23
  %v227 = vmul.f32 %v24, %v24
  %v228 = vmul.f32 %v25, %v25
  %v229 = vmul.f32 %v26, %v26
  %v230 = vmul.f32 %v27, %v27
  %v231 = vmul.f32 %v28, %v28
  %v232 = vmul.f32 %v29, %v29
  %v233 = vmul.f32 %v30, %v30
  %v234 = vmul.f32 %v31, %v31
  %v235 = vmul.f32 %v32, %v32
  %v236 = vmul.f32 %v33, %v33
  %v237 = vmul.f32 %v34, %v34
  %v238 = vmul.f32 %v35, %v35
  %v239 = vmul.f32 %v36, %v36
  %v240 = vmul.f32 %v37, %v37
  %v241 = vmul.f32 %v38, %v38
  %v242 = vmul.f32 %v39, %v39
  %v243 = vmul.f32 %v40, %v40
  %v244 = vmul.f32 %v41, %v41
  %v245 = vmul.f32 %v42, %v42
  %v246 = vmul.f32 %v43, %v43
  %v247 = vmul.f32 %v44, %v44
  %v248 = vmul.f32 %v45, %v45
  %v249 = vmul.f32 %v46, %v46
  %v250 = vmul.f32 %v47, %v47
  %v251 = vmul.f32 %v48, %v48
  %v252 = vmul.f32 %v49, %v49
  %v253 = vmul.f32 %v50, %v50
  %v254 = vmul.f32 %v51, %v51
  %v255 = vmul.f32 %v52, %v52
  %v256 = vmul.f32 %v53, %v53
  %v257 = vmul.f32 %v54, %v54
  %v258 = vmul.f32 %v55, %v55
  %v259 = vmul.f32 %v56, %v56
  %v260 = vmul.f32 %v57, %v57
  %v261 = vmul.f32 %v58, %v58
  %v262 = vmul.f32 %v59, %v59
  %v263 = vmul.f32 %v60, %v60
  %v264 = vmul.f32 %v61, %v61
  %v265 = vmul.f32 %v62, %v62
  %v266 = vmul.f32 %v63, %v63
  %v267 = vmul.f32 %v64, %v64
  %v268 = vmul.f32 %v65, %v65
  %v269 = vmul.f32 %v66, %v66
  %v270 = vmul.f32 %v67, %v67
  %v271 = vmul.f32 %v68, %v68
  %v272 = vmul.f32 %v69, %v69
  %v273 = vmul.f32 %v70, %v70
  %v274 = vmul.f32 %v71, %v71
  %v275 = vmul.f32 %v72, %v72
  %v276 = vmul.f32 %v73, %v73
  %v277 = vmul.f32 %v74, %v74
  %v278 = vmul.f32 %v75, %v75
  %v279 = vmul.f32 %v76, %v76
  %v280 = vmul.f32 %v77, %v77
  %v281 = vmul.f32 %v78, %v78
  %v282 = vmul.f32 %v79, %v79
  %v283 = vmul.f32 %v80, %v80
  %v284 = vsel %vm82, %v220, 0.0
  %v285 = vsel %vm82, %v221, 0.0
  %v286 = vadd.f32 %v284, %v285
  %v287 = vsel %vm82, %v222, 0.0
  %v288 = vadd.f32 %v286, %v287
  %v289 = vsel %vm82, %v223, 0.0
  %v290 = vadd.f32 %v288, %v289
  %v291 = vsel %vm82, %v224, 0.0
  %v292 = vadd.f32 %v290, %v291
  %v293 = vsel %vm82, %v225, 0.0
  %v294 = vadd.f32 %v292, %v293
  %v295 = vsel %vm82, %v226, 0.0
  %v296 = vadd.f32 %v294, %v295
  %v297 = vsel %vm82, %v227, 0.0
  %v298 = vadd.f32 %v296, %v297
  %v299 = vsel %vm82, %v228, 0.0
  %v300 = vadd.f32 %v298, %v299
  %v301 = vsel %vm82, %v229, 0.0
  %v302 = vadd.f32 %v300, %v301
  %v303 = vsel %vm82, %v230, 0.0
  %v304 = vadd.f32 %v302, %v303
  %v305 = vsel %vm82, %v231, 0.0
  %v306 = vadd.f32 %v304, %v305
  %v307 = vsel %vm82, %v232, 0.0
  %v308 = vadd.f32 %v306, %v307
  %v309 = vsel %vm82, %v233, 0.0
  %v310 = vadd.f32 %v308, %v309
  %v311 = vsel %vm82, %v234, 0.0
  %v312 = vadd.f32 %v310, %v311
  %v313 = vsel %vm82, %v235, 0.0
  %v314 = vadd.f32 %v312, %v313
  %v315 = vsel %vm82, %v236, 0.0
  %v316 = vadd.f32 %v314, %v315
  %v317 = vsel %vm82, %v237, 0.0
  %v318 = vadd.f32 %v316, %v317
  %v319 = vsel %vm82, %v238, 0.0
  %v320 = vadd.f32 %v318, %v319
  %v321 = vsel %vm82, %v239, 0.0
  %v322 = vadd.f32 %v320, %v321
  %v323 = vsel %vm82, %v240, 0.0
  %v324 = vadd.f32 %v322, %v323
  %v325 = vsel %vm82, %v241, 0.0
  %v326 = vadd.f32 %v324, %v325
  %v327 = vsel %vm82, %v242, 0.0
  %v328 = vadd.f32 %v326, %v327
  %v329 = vsel %vm82, %v243, 0.0
  %v330 = vadd.f32 %v328, %v329
  %v331 = vsel %vm82, %v244, 0.0
  %v332 = vadd.f32 %v330, %v331
  %v333 = vsel %vm82, %v245, 0.0
  %v334 = vadd.f32 %v332, %v333
  %v335 = vsel %vm82, %v246, 0.0
  %v336 = vadd.f32 %v334, %v335
  %v337 = vsel %vm82, %v247, 0.0
  %v338 = vadd.f32 %v336, %v337
  %v339 = vsel %vm82, %v248, 0.0
  %v340 = vadd.f32 %v338, %v339
  %v341 = vsel %vm82, %v249, 0.0
  %v342 = vadd.f32 %v340, %v341
  %v343 = vsel %vm82, %v250, 0.0
  %v344 = vadd.f32 %v342, %v343
  %v345 = vsel %vm82, %v251, 0.0
  %v346 = vadd.f32 %v344, %v345
  %v347 = vsel %vm82, %v252, 0.0
  %v348 = vadd.f32 %v346, %v347
  %v349 = vsel %vm82, %v253, 0.0
  %v350 = vadd.f32 %v348, %v349
  %v351 = vsel %vm82, %v254, 0.0
  %v352 = vadd.f32 %v350, %v351
  %v353 = vsel %vm82, %v255, 0.0
  %v354 = vadd.f32 %v352, %v353
  %v355 = vsel %vm82, %v256, 0.0
  %v356 = vadd.f32 %v354, %v355
  %v357 = vsel %vm82, %v257, 0.0
  %v358 = vadd.f32 %v356, %v357
  %v359 = vsel %vm82, %v258, 0.0
  %v360 = vadd.f32 %v358, %v359
  %v361 = vsel %vm82, %v259, 0.0
  %v362 = vadd.f32 %v360, %v361
  %v363 = vsel %vm82, %v260, 0.0
  %v364 = vadd.f32 %v362, %v363
  %v365 = vsel %vm82, %v261, 0.0
  %v366 = vadd.f32 %v364, %v365
  %v367 = vsel %vm82, %v262, 0.0
  %v368 = vadd.f32 %v366, %v367
  %v369 = vsel %vm82, %v263, 0.0
  %v370 = vadd.f32 %v368, %v369
  %v371 = vsel %vm82, %v264, 0.0
  %v372 = vadd.f32 %v370, %v371
  %v373 = vsel %vm82, %v265, 0.0
  %v374 = vadd.f32 %v372, %v373
  %v375 = vsel %vm82, %v266, 0.0
  %v376 = vadd.f32 %v374, %v375
  %v377 = vsel %vm82, %v267, 0.0
  %v378 = vadd.f32 %v376, %v377
  %v379 = vsel %vm82, %v268, 0.0
  %v380 = vadd.f32 %v378, %v379
  %v381 = vsel %vm82, %v269, 0.0
  %v382 = vadd.f32 %v380, %v381
  %v383 = vsel %vm82, %v270, 0.0
  %v384 = vadd.f32 %v382, %v383
  %v385 = vsel %vm82, %v271, 0.0
  %v386 = vadd.f32 %v384, %v385
  %v387 = vsel %vm82, %v272, 0.0
  %v388 = vadd.f32 %v386, %v387
  %v389 = vsel %vm82, %v273, 0.0
  %v390 = vadd.f32 %v388, %v389
  %v391 = vsel %vm82, %v274, 0.0
  %v392 = vadd.f32 %v390, %v391
  %v393 = vsel %vm82, %v275, 0.0
  %v394 = vadd.f32 %v392, %v393
  %v395 = vsel %vm82, %v276, 0.0
  %v396 = vadd.f32 %v394, %v395
  %v397 = vsel %vm82, %v277, 0.0
  %v398 = vadd.f32 %v396, %v397
  %v399 = vsel %vm82, %v278, 0.0
  %v400 = vadd.f32 %v398, %v399
  %v401 = vsel %vm82, %v279, 0.0
  %v402 = vadd.f32 %v400, %v401
  %v403 = vsel %vm82, %v280, 0.0
  %v404 = vadd.f32 %v402, %v403
  %v405 = vsel %vm82, %v281, 0.0
  %v406 = vadd.f32 %v404, %v405
  %v407 = vsel %vm82, %v282, 0.0
  %v408 = vadd.f32 %v406, %v407
  %v409 = vsel %vm82, %v283, 0.0
  %v410 = vadd.f32 %v408, %v409
  %v411 = vrot.slane %v410, 4
  %v412 = vadd.f32 %v410, %v411
  %v413 = vrot.slane %v412, 2
  %v414 = vadd.f32 %v412, %v413
  %v415 = vrot.slane %v414, 1
  %v416 = vadd.f32 %v414, %v415
  %v417 = vadd.f32 %v219, %v416
  %418 = vst.msk [vmem:[%s2] sm:$0x1] %vm217, %v417
  // Predicated region
  $region10: #{generator_forward.20} parent=0 // pred_check
    _
  $region11: #{generator_forward.20} parent=0 // pred_check_branch
    %420 = sbr.rel (0) target = $region13
  $region12: #{generator_forward.20} parent=0 // pred_region
    _
  $region13: #{generator_forward.20} parent=0 // pred_fallthru
    _
  // Predicated region
  $region14: #{generator_forward.20} parent=0 // pred_check
    _
  $region15: #{generator_forward.20} parent=0 // pred_check_branch
    %422 = sbr.rel (0) target = $region17
  $region16: #{generator_forward.20} parent=0 // pred_region
    _
  $region17: #{generator_forward.20} parent=0 // pred_fallthru
    _
  // Predicated region
  $region18: #{generator_forward.20} parent=0 // pred_check
    _
  $region19: #{generator_forward.20} parent=0 // pred_check_branch
    %424 = sbr.rel (0) target = $region21
  $region20: #{generator_forward.20} parent=0 // pred_region
    _
  $region21: #{generator_forward.20} parent=0 // pred_fallthru
    _
  // Predicated region
  $region22: #{generator_forward.20} parent=0 // pred_check
    _
  $region23: #{generator_forward.20} parent=0 // pred_check_branch
    %426 = sbr.rel (0) target = $region25
  $region24: #{generator_forward.20} parent=0 // pred_region
    _
  $region25: #{generator_forward.20} parent=0 // pred_fallthru
    _

// kernel: generator_forward.21
$region0: #{generator_forward.21}
  #allocation0 [shape = 'u32[]', space=smem, size = 0x4, offset = 0x4, fixed_abs, tag = 'smem constant byte address 0x4 - core index']
  #allocation1 [shape = 'u32[144,128]{1,0:T(1,128)}', space=vmem, size = 0x12000, scoped, tag = 'internal scratch']
  %s0 = inlined_call_operand.vmem [shape: f32[512,16], index: 0, kind: input, shape index: {}]
  %s1 = inlined_call_operand.vmem [shape: f32[1,16], index: 1, kind: input, shape index: {}]
  %s2 = inlined_call_operand.vmem [shape: f32[1,16], index: 2, kind: input, shape index: {}]
  %s3 = inlined_call_operand.vmem [shape: f32[512,16], index: 3, kind: output, shape index: {}]
  %s4 = sld [smem:[#allocation0]]
  $region22: #{generator_forward.21} parent=0
    _
  %s6 = ssub.s32 1, %s4
  %s7 = scalar_select 0, %s6, %s4
  // Predicated region
  $region2: #{generator_forward.21} parent=0 // pred_check
    _
  $region3: #{generator_forward.21} parent=0 // pred_check_branch
    %9 = sbr.rel (0) target = $region5
  $region4: #{generator_forward.21} parent=0 // pred_region
    _
  $region5: #{generator_forward.21} parent=0 // pred_fallthru
    _
  // Predicated region
  $region6: #{generator_forward.21} parent=0 // pred_check
    _
  $region7: #{generator_forward.21} parent=0 // pred_check_branch
    %11 = sbr.rel (0) target = $region9
  $region8: #{generator_forward.21} parent=0 // pred_region
    _
  $region9: #{generator_forward.21} parent=0 // pred_fallthru
    _
  // Predicated region
  $region10: #{generator_forward.21} parent=0 // pred_check
    _
  $region11: #{generator_forward.21} parent=0 // pred_check_branch
    %13 = sbr.rel (0) target = $region13
  $region12: #{generator_forward.21} parent=0 // pred_region
    _
  $region13: #{generator_forward.21} parent=0 // pred_fallthru
    _
  %v14 = vld [vmem:[%s0] sm:$0xff]
  %v15 = vld [vmem:[%s0 + $0x8] sm:$0xff]
  %v16 = vld [vmem:[%s0 + $0x10] sm:$0xff]
  %v17 = vld [vmem:[%s0 + $0x18] sm:$0xff]
  %v18 = vld [vmem:[%s0 + $0x20] sm:$0xff]
  %v19 = vld [vmem:[%s0 + $0x28] sm:$0xff]
  %v20 = vld [vmem:[%s0 + $0x30] sm:$0xff]
  %v21 = vld [vmem:[%s0 + $0x38] sm:$0xff]
  %v22 = vld [vmem:[%s0 + $0x40] sm:$0xff]
  %v23 = vld [vmem:[%s0 + $0x48] sm:$0xff]
  %v24 = vld [vmem:[%s0 + $0x50] sm:$0xff]
  %v25 = vld [vmem:[%s0 + $0x58] sm:$0xff]
  %v26 = vld [vmem:[%s0 + $0x60] sm:$0xff]
  %v27 = vld [vmem:[%s0 + $0x68] sm:$0xff]
  %v28 = vld [vmem:[%s0 + $0x70] sm:$0xff]
  %v29 = vld [vmem:[%s0 + $0x78] sm:$0xff]
  %v30 = vld [vmem:[%s0 + $0x80] sm:$0xff]
  %v31 = vld [vmem:[%s0 + $0x88] sm:$0xff]
  %v32 = vld [vmem:[%s0 + $0x90] sm:$0xff]
  %v33 = vld [vmem:[%s0 + $0x98] sm:$0xff]
  %v34 = vld [vmem:[%s0 + $0xa0] sm:$0xff]
  %v35 = vld [vmem:[%s0 + $0xa8] sm:$0xff]
  %v36 = vld [vmem:[%s0 + $0xb0] sm:$0xff]
  %v37 = vld [vmem:[%s0 + $0xb8] sm:$0xff]
  %v38 = vld [vmem:[%s0 + $0xc0] sm:$0xff]
  %v39 = vld [vmem:[%s0 + $0xc8] sm:$0xff]
  %v40 = vld [vmem:[%s0 + $0xd0] sm:$0xff]
  %v41 = vld [vmem:[%s0 + $0xd8] sm:$0xff]
  %v42 = vld [vmem:[%s0 + $0xe0] sm:$0xff]
  %v43 = vld [vmem:[%s0 + $0xe8] sm:$0xff]
  %v44 = vld [vmem:[%s0 + $0xf0] sm:$0xff]
  %v45 = vld [vmem:[%s0 + $0xf8] sm:$0xff]
  %v46 = vld [vmem:[%s0 + $0x100] sm:$0xff]
  %v47 = vld [vmem:[%s0 + $0x108] sm:$0xff]
  %v48 = vld [vmem:[%s0 + $0x110] sm:$0xff]
  %v49 = vld [vmem:[%s0 + $0x118] sm:$0xff]
  %v50 = vld [vmem:[%s0 + $0x120] sm:$0xff]
  %v51 = vld [vmem:[%s0 + $0x128] sm:$0xff]
  %v52 = vld [vmem:[%s0 + $0x130] sm:$0xff]
  %v53 = vld [vmem:[%s0 + $0x138] sm:$0xff]
  %v54 = vld [vmem:[%s0 + $0x140] sm:$0xff]
  %v55 = vld [vmem:[%s0 + $0x148] sm:$0xff]
  %v56 = vld [vmem:[%s0 + $0x150] sm:$0xff]
  %v57 = vld [vmem:[%s0 + $0x158] sm:$0xff]
  %v58 = vld [vmem:[%s0 + $0x160] sm:$0xff]
  %v59 = vld [vmem:[%s0 + $0x168] sm:$0xff]
  %v60 = vld [vmem:[%s0 + $0x170] sm:$0xff]
  %v61 = vld [vmem:[%s0 + $0x178] sm:$0xff]
  %v62 = vld [vmem:[%s0 + $0x180] sm:$0xff]
  %v63 = vld [vmem:[%s0 + $0x188] sm:$0xff]
  %v64 = vld [vmem:[%s0 + $0x190] sm:$0xff]
  %v65 = vld [vmem:[%s0 + $0x198] sm:$0xff]
  %v66 = vld [vmem:[%s0 + $0x1a0] sm:$0xff]
  %v67 = vld [vmem:[%s0 + $0x1a8] sm:$0xff]
  %v68 = vld [vmem:[%s0 + $0x1b0] sm:$0xff]
  %v69 = vld [vmem:[%s0 + $0x1b8] sm:$0xff]
  %v70 = vld [vmem:[%s0 + $0x1c0] sm:$0xff]
  %v71 = vld [vmem:[%s0 + $0x1c8] sm:$0xff]
  %v72 = vld [vmem:[%s0 + $0x1d0] sm:$0xff]
  %v73 = vld [vmem:[%s0 + $0x1d8] sm:$0xff]
  %v74 = vld [vmem:[%s0 + $0x1e0] sm:$0xff]
  %v75 = vld [vmem:[%s0 + $0x1e8] sm:$0xff]
  %v76 = vld [vmem:[%s0 + $0x1f0] sm:$0xff]
  %v77 = vld [vmem:[%s0 + $0x1f8] sm:$0xff]
  %v78 = vld [vmem:[%s1] sm:$0x1]
  %v80 = vlaneseq
  %v81 = vshrl.u32 %v80, 7
  %v82 = vsub.s32 0, %v81
  %v83 = vrot.slane %v78, %v82
  %v85 = vmul.f32 %v14, %v83
  %v86 = vmul.f32 %v15, %v83
  %v87 = vmul.f32 %v16, %v83
  %v88 = vmul.f32 %v17, %v83
  %v89 = vmul.f32 %v18, %v83
  %v90 = vmul.f32 %v19, %v83
  %v91 = vmul.f32 %v20, %v83
  %v92 = vmul.f32 %v21, %v83
  %v93 = vmul.f32 %v22, %v83
  %v94 = vmul.f32 %v23, %v83
  %v95 = vmul.f32 %v24, %v83
  %v96 = vmul.f32 %v25, %v83
  %v97 = vmul.f32 %v26, %v83
  %v98 = vmul.f32 %v27, %v83
  %v99 = vmul.f32 %v28, %v83
  %v100 = vmul.f32 %v29, %v83
  %v101 = vmul.f32 %v30, %v83
  %v102 = vmul.f32 %v31, %v83
  %v103 = vmul.f32 %v32, %v83
  %v104 = vmul.f32 %v33, %v83
  %v105 = vmul.f32 %v34, %v83
  %v106 = vmul.f32 %v35, %v83
  %v107 = vmul.f32 %v36, %v83
  %v108 = vmul.f32 %v37, %v83
  %v109 = vmul.f32 %v38, %v83
  %v110 = vmul.f32 %v39, %v83
  %v111 = vmul.f32 %v40, %v83
  %v112 = vmul.f32 %v41, %v83
  %v113 = vmul.f32 %v42, %v83
  %v114 = vmul.f32 %v43, %v83
  %v115 = vmul.f32 %v44, %v83
  %v116 = vmul.f32 %v45, %v83
  %v117 = vmul.f32 %v46, %v83
  %v118 = vmul.f32 %v47, %v83
  %v119 = vmul.f32 %v48, %v83
  %v120 = vmul.f32 %v49, %v83
  %v121 = vmul.f32 %v50, %v83
  %v122 = vmul.f32 %v51, %v83
  %v123 = vmul.f32 %v52, %v83
  %v124 = vmul.f32 %v53, %v83
  %v125 = vmul.f32 %v54, %v83
  %v126 = vmul.f32 %v55, %v83
  %v127 = vmul.f32 %v56, %v83
  %v128 = vmul.f32 %v57, %v83
  %v129 = vmul.f32 %v58, %v83
  %v130 = vmul.f32 %v59, %v83
  %v131 = vmul.f32 %v60, %v83
  %v132 = vmul.f32 %v61, %v83
  %v133 = vmul.f32 %v62, %v83
  %v134 = vmul.f32 %v63, %v83
  %v135 = vmul.f32 %v64, %v83
  %v136 = vmul.f32 %v65, %v83
  %v137 = vmul.f32 %v66, %v83
  %v138 = vmul.f32 %v67, %v83
  %v139 = vmul.f32 %v68, %v83
  %v140 = vmul.f32 %v69, %v83
  %v141 = vmul.f32 %v70, %v83
  %v142 = vmul.f32 %v71, %v83
  %v143 = vmul.f32 %v72, %v83
  %v144 = vmul.f32 %v73, %v83
  %v145 = vmul.f32 %v74, %v83
  %v146 = vmul.f32 %v75, %v83
  %v147 = vmul.f32 %v76, %v83
  %v148 = vmul.f32 %v77, %v83
  %v149 = vld [vmem:[%s2] sm:$0x1]
  %v151 = vlaneseq
  %v152 = vshrl.u32 %v151, 7
  %v153 = vsub.s32 0, %v152
  %v154 = vrot.slane %v149, %v153
  %v156 = vadd.f32 %v85, %v154
  %v157 = vadd.f32 %v86, %v154
  %v158 = vadd.f32 %v87, %v154
  %v159 = vadd.f32 %v88, %v154
  %v160 = vadd.f32 %v89, %v154
  %v161 = vadd.f32 %v90, %v154
  %v162 = vadd.f32 %v91, %v154
  %v163 = vadd.f32 %v92, %v154
  %v164 = vadd.f32 %v93, %v154
  %v165 = vadd.f32 %v94, %v154
  %v166 = vadd.f32 %v95, %v154
  %v167 = vadd.f32 %v96, %v154
  %v168 = vadd.f32 %v97, %v154
  %v169 = vadd.f32 %v98, %v154
  %v170 = vadd.f32 %v99, %v154
  %v171 = vadd.f32 %v100, %v154
  %v172 = vadd.f32 %v101, %v154
  %v173 = vadd.f32 %v102, %v154
  %v174 = vadd.f32 %v103, %v154
  %v175 = vadd.f32 %v104, %v154
  %v176 = vadd.f32 %v105, %v154
  %v177 = vadd.f32 %v106, %v154
  %v178 = vadd.f32 %v107, %v154
  %v179 = vadd.f32 %v108, %v154
  %v180 = vadd.f32 %v109, %v154
  %v181 = vadd.f32 %v110, %v154
  %v182 = vadd.f32 %v111, %v154
  %v183 = vadd.f32 %v112, %v154
  %v184 = vadd.f32 %v113, %v154
  %v185 = vadd.f32 %v114, %v154
  %v186 = vadd.f32 %v115, %v154
  %v187 = vadd.f32 %v116, %v154
  %v188 = vadd.f32 %v117, %v154
  %v189 = vadd.f32 %v118, %v154
  %v190 = vadd.f32 %v119, %v154
  %v191 = vadd.f32 %v120, %v154
  %v192 = vadd.f32 %v121, %v154
  %v193 = vadd.f32 %v122, %v154
  %v194 = vadd.f32 %v123, %v154
  %v195 = vadd.f32 %v124, %v154
  %v196 = vadd.f32 %v125, %v154
  %v197 = vadd.f32 %v126, %v154
  %v198 = vadd.f32 %v127, %v154
  %v199 = vadd.f32 %v128, %v154
  %v200 = vadd.f32 %v129, %v154
  %v201 = vadd.f32 %v130, %v154
  %v202 = vadd.f32 %v131, %v154
  %v203 = vadd.f32 %v132, %v154
  %v204 = vadd.f32 %v133, %v154
  %v205 = vadd.f32 %v134, %v154
  %v206 = vadd.f32 %v135, %v154
  %v207 = vadd.f32 %v136, %v154
  %v208 = vadd.f32 %v137, %v154
  %v209 = vadd.f32 %v138, %v154
  %v210 = vadd.f32 %v139, %v154
  %v211 = vadd.f32 %v140, %v154
  %v212 = vadd.f32 %v141, %v154
  %v213 = vadd.f32 %v142, %v154
  %v214 = vadd.f32 %v143, %v154
  %v215 = vadd.f32 %v144, %v154
  %v216 = vadd.f32 %v145, %v154
  %v217 = vadd.f32 %v146, %v154
  %v218 = vadd.f32 %v147, %v154
  %v219 = vadd.f32 %v148, %v154
  %v220 = vmax.f32 %v156, 0.0
  %v221 = vmax.f32 %v157, 0.0
  %v222 = vmax.f32 %v158, 0.0
  %v223 = vmax.f32 %v159, 0.0
  %v224 = vmax.f32 %v160, 0.0
  %v225 = vmax.f32 %v161, 0.0
  %v226 = vmax.f32 %v162, 0.0
  %v227 = vmax.f32 %v163, 0.0
  %v228 = vmax.f32 %v164, 0.0
  %v229 = vmax.f32 %v165, 0.0
  %v230 = vmax.f32 %v166, 0.0
  %v231 = vmax.f32 %v167, 0.0
  %v232 = vmax.f32 %v168, 0.0
  %v233 = vmax.f32 %v169, 0.0
  %v234 = vmax.f32 %v170, 0.0
  %v235 = vmax.f32 %v171, 0.0
  %v236 = vmax.f32 %v172, 0.0
  %v237 = vmax.f32 %v173, 0.0
  %v238 = vmax.f32 %v174, 0.0
  %v239 = vmax.f32 %v175, 0.0
  %v240 = vmax.f32 %v176, 0.0
  %v241 = vmax.f32 %v177, 0.0
  %v242 = vmax.f32 %v178, 0.0
  %v243 = vmax.f32 %v179, 0.0
  %v244 = vmax.f32 %v180, 0.0
  %v245 = vmax.f32 %v181, 0.0
  %v246 = vmax.f32 %v182, 0.0
  %v247 = vmax.f32 %v183, 0.0
  %v248 = vmax.f32 %v184, 0.0
  %v249 = vmax.f32 %v185, 0.0
  %v250 = vmax.f32 %v186, 0.0
  %v251 = vmax.f32 %v187, 0.0
  %v252 = vmax.f32 %v188, 0.0
  %v253 = vmax.f32 %v189, 0.0
  %v254 = vmax.f32 %v190, 0.0
  %v255 = vmax.f32 %v191, 0.0
  %v256 = vmax.f32 %v192, 0.0
  %v257 = vmax.f32 %v193, 0.0
  %v258 = vmax.f32 %v194, 0.0
  %v259 = vmax.f32 %v195, 0.0
  %v260 = vmax.f32 %v196, 0.0
  %v261 = vmax.f32 %v197, 0.0
  %v262 = vmax.f32 %v198, 0.0
  %v263 = vmax.f32 %v199, 0.0
  %v264 = vmax.f32 %v200, 0.0
  %v265 = vmax.f32 %v201, 0.0
  %v266 = vmax.f32 %v202, 0.0
  %v267 = vmax.f32 %v203, 0.0
  %v268 = vmax.f32 %v204, 0.0
  %v269 = vmax.f32 %v205, 0.0
  %v270 = vmax.f32 %v206, 0.0
  %v271 = vmax.f32 %v207, 0.0
  %v272 = vmax.f32 %v208, 0.0
  %v273 = vmax.f32 %v209, 0.0
  %v274 = vmax.f32 %v210, 0.0
  %v275 = vmax.f32 %v211, 0.0
  %v276 = vmax.f32 %v212, 0.0
  %v277 = vmax.f32 %v213, 0.0
  %v278 = vmax.f32 %v214, 0.0
  %v279 = vmax.f32 %v215, 0.0
  %v280 = vmax.f32 %v216, 0.0
  %v281 = vmax.f32 %v217, 0.0
  %v282 = vmax.f32 %v218, 0.0
  %v283 = vmax.f32 %v219, 0.0
  %vm284 = vcmask 130048
  %285 = vst.msk [vmem:[%s3] sm:$0xff] %vm284, %v220
  %286 = vst.msk [vmem:[%s3 + $0x8] sm:$0xff] %vm284, %v221
  %287 = vst.msk [vmem:[%s3 + $0x10] sm:$0xff] %vm284, %v222
  %288 = vst.msk [vmem:[%s3 + $0x18] sm:$0xff] %vm284, %v223
  %289 = vst.msk [vmem:[%s3 + $0x20] sm:$0xff] %vm284, %v224
  %290 = vst.msk [vmem:[%s3 + $0x28] sm:$0xff] %vm284, %v225
  %291 = vst.msk [vmem:[%s3 + $0x30] sm:$0xff] %vm284, %v226
  %292 = vst.msk [vmem:[%s3 + $0x38] sm:$0xff] %vm284, %v227
  %293 = vst.msk [vmem:[%s3 + $0x40] sm:$0xff] %vm284, %v228
  %294 = vst.msk [vmem:[%s3 + $0x48] sm:$0xff] %vm284, %v229
  %295 = vst.msk [vmem:[%s3 + $0x50] sm:$0xff] %vm284, %v230
  %296 = vst.msk [vmem:[%s3 + $0x58] sm:$0xff] %vm284, %v231
  %297 = vst.msk [vmem:[%s3 + $0x60] sm:$0xff] %vm284, %v232
  %298 = vst.msk [vmem:[%s3 + $0x68] sm:$0xff] %vm284, %v233
  %299 = vst.msk [vmem:[%s3 + $0x70] sm:$0xff] %vm284, %v234
  %300 = vst.msk [vmem:[%s3 + $0x78] sm:$0xff] %vm284, %v235
  %301 = vst.msk [vmem:[%s3 + $0x80] sm:$0xff] %vm284, %v236
  %302 = vst.msk [vmem:[%s3 + $0x88] sm:$0xff] %vm284, %v237
  %303 = vst.msk [vmem:[%s3 + $0x90] sm:$0xff] %vm284, %v238
  %304 = vst.msk [vmem:[%s3 + $0x98] sm:$0xff] %vm284, %v239
  %305 = vst.msk [vmem:[%s3 + $0xa0] sm:$0xff] %vm284, %v240
  %306 = vst.msk [vmem:[%s3 + $0xa8] sm:$0xff] %vm284, %v241
  %307 = vst.msk [vmem:[%s3 + $0xb0] sm:$0xff] %vm284, %v242
  %308 = vst.msk [vmem:[%s3 + $0xb8] sm:$0xff] %vm284, %v243
  %309 = vst.msk [vmem:[%s3 + $0xc0] sm:$0xff] %vm284, %v244
  %310 = vst.msk [vmem:[%s3 + $0xc8] sm:$0xff] %vm284, %v245
  %311 = vst.msk [vmem:[%s3 + $0xd0] sm:$0xff] %vm284, %v246
  %312 = vst.msk [vmem:[%s3 + $0xd8] sm:$0xff] %vm284, %v247
  %313 = vst.msk [vmem:[%s3 + $0xe0] sm:$0xff] %vm284, %v248
  %314 = vst.msk [vmem:[%s3 + $0xe8] sm:$0xff] %vm284, %v249
  %315 = vst.msk [vmem:[%s3 + $0xf0] sm:$0xff] %vm284, %v250
  %316 = vst.msk [vmem:[%s3 + $0xf8] sm:$0xff] %vm284, %v251
  %317 = vst.msk [vmem:[%s3 + $0x100] sm:$0xff] %vm284, %v252
  %318 = vst.msk [vmem:[%s3 + $0x108] sm:$0xff] %vm284, %v253
  %319 = vst.msk [vmem:[%s3 + $0x110] sm:$0xff] %vm284, %v254
  %320 = vst.msk [vmem:[%s3 + $0x118] sm:$0xff] %vm284, %v255
  %321 = vst.msk [vmem:[%s3 + $0x120] sm:$0xff] %vm284, %v256
  %322 = vst.msk [vmem:[%s3 + $0x128] sm:$0xff] %vm284, %v257
  %323 = vst.msk [vmem:[%s3 + $0x130] sm:$0xff] %vm284, %v258
  %324 = vst.msk [vmem:[%s3 + $0x138] sm:$0xff] %vm284, %v259
  %325 = vst.msk [vmem:[%s3 + $0x140] sm:$0xff] %vm284, %v260
  %326 = vst.msk [vmem:[%s3 + $0x148] sm:$0xff] %vm284, %v261
  %327 = vst.msk [vmem:[%s3 + $0x150] sm:$0xff] %vm284, %v262
  %328 = vst.msk [vmem:[%s3 + $0x158] sm:$0xff] %vm284, %v263
  %329 = vst.msk [vmem:[%s3 + $0x160] sm:$0xff] %vm284, %v264
  %330 = vst.msk [vmem:[%s3 + $0x168] sm:$0xff] %vm284, %v265
  %331 = vst.msk [vmem:[%s3 + $0x170] sm:$0xff] %vm284, %v266
  %332 = vst.msk [vmem:[%s3 + $0x178] sm:$0xff] %vm284, %v267
  %333 = vst.msk [vmem:[%s3 + $0x180] sm:$0xff] %vm284, %v268
  %334 = vst.msk [vmem:[%s3 + $0x188] sm:$0xff] %vm284, %v269
  %335 = vst.msk [vmem:[%s3 + $0x190] sm:$0xff] %vm284, %v270
  %336 = vst.msk [vmem:[%s3 + $0x198] sm:$0xff] %vm284, %v271
  %337 = vst.msk [vmem:[%s3 + $0x1a0] sm:$0xff] %vm284, %v272
  %338 = vst.msk [vmem:[%s3 + $0x1a8] sm:$0xff] %vm284, %v273
  %339 = vst.msk [vmem:[%s3 + $0x1b0] sm:$0xff] %vm284, %v274
  %340 = vst.msk [vmem:[%s3 + $0x1b8] sm:$0xff] %vm284, %v275
  %341 = vst.msk [vmem:[%s3 + $0x1c0] sm:$0xff] %vm284, %v276
  %342 = vst.msk [vmem:[%s3 + $0x1c8] sm:$0xff] %vm284, %v277
  %343 = vst.msk [vmem:[%s3 + $0x1d0] sm:$0xff] %vm284, %v278
  %344 = vst.msk [vmem:[%s3 + $0x1d8] sm:$0xff] %vm284, %v279
  %345 = vst.msk [vmem:[%s3 + $0x1e0] sm:$0xff] %vm284, %v280
  %346 = vst.msk [vmem:[%s3 + $0x1e8] sm:$0xff] %vm284, %v281
  %347 = vst.msk [vmem:[%s3 + $0x1f0] sm:$0xff] %vm284, %v282
  %348 = vst.msk [vmem:[%s3 + $0x1f8] sm:$0xff] %vm284, %v283
  // Predicated region
  $region14: #{generator_forward.21} parent=0 // pred_check
    _
  $region15: #{generator_forward.21} parent=0 // pred_check_branch
    %350 = sbr.rel (0) target = $region17
  $region16: #{generator_forward.21} parent=0 // pred_region
    _
  $region17: #{generator_forward.21} parent=0 // pred_fallthru
    _
  // Predicated region
  $region18: #{generator_forward.21} parent=0 // pred_check
    _
  $region19: #{generator_forward.21} parent=0 // pred_check_branch
    %352 = sbr.rel (0) target = $region21
  $region20: #{generator_forward.21} parent=0 // pred_region
    _
  $region21: #{generator_forward.21} parent=0 // pred_fallthru
    _

// kernel: generator_forward.22
$region0: #{generator_forward.22}
  #allocation0 [shape = 'u32[]', space=smem, size = 0x4, offset = 0x4, fixed_abs, tag = 'smem constant byte address 0x4 - core index']
  #allocation1 [shape = 'u32[144,128]{1,0:T(1,128)}', space=vmem, size = 0x12000, scoped, tag = 'internal scratch']
  #allocation2 [shape = 'f32[256,128]{1,0:T(8,128)}', space=vmem, size = 0x20000, scoped, tag = 'scratch operand']
  %s0 = inlined_call_operand.vmem [shape: bf16[768,128], index: 0, kind: input, shape index: {}]
  %s1 = inlined_call_operand.vmem [shape: bf16[128,128], index: 1, kind: input, shape index: {}]
  %s2 = inlined_call_operand.vmem [shape: f32[1,128], index: 2, kind: input, shape index: {}]
  %s3 = inlined_call_operand.vmem [shape: f32[768,128], index: 3, kind: output, shape index: {}]
  %s4 = sld [smem:[#allocation0]]
  $region53: #{generator_forward.22} parent=0
    _
  %s6 = ssub.s32 1, %s4
  %s7 = scalar_select 0, %s6, %s4
  loop: start=0, step=1, limit=5
  $region2: #{generator_forward.22} parent=0 // loop_pre_header
    _
  $region3: #{generator_forward.22} parent=0 // loop_header
    %s9 = sphi 0, %s13
    %p10 = scmp.ge.s32.totalorder %s9, 5
    %s16 = sphi 0, %s35
    %s17 = sphi 0, %s31
    %s18 = sphi 0, %s27
    %s19 = sphi 0, %s16
    %s20 = sphi 0, %s17
    %s21 = sphi 0, %s18
    %s22 = sphi 0, %s19
    %s23 = sphi 0, %s20
    %s24 = sphi 0, %s21
    %s40 = sphi 0, %s42
    %s43 = sphi 0, %s40
    %s44 = sphi 0, %s43
    %s60 = sphi 0, %s44
    %s68 = sphi 0, %s70
    %s71 = sphi 0, %s68
    %s72 = sphi 0, %s71
    %s88 = sphi 0, %s72
    %s94 = sphi 0, %s96
    %s97 = sphi 0, %s94
    %s98 = sphi 0, %s97
    %s114 = sphi 0, %s98
    %s122 = sphi 0, %s124
    %s125 = sphi 0, %s122
    %s126 = sphi 0, %s125
    %s142 = sphi 0, %s126
  $region4: #{generator_forward.22} parent=0 // loop_header_branch
    %12 = sbr.rel (%p10) target = $region8
  $region5: #{generator_forward.22} parent=0 // loop_body
    %s14 = ssub.s32 %s9, 1
    %s15 = ssub.s32 %s9, 2
    %s25 = sadd.s32 1, %s18
    %p26 = scmp.ge.s32.totalorder %s25, 1
    %s27 = scalar_select %p26, 0, %s25
    %s28 = sadd.s32 1, %s17
    %s29 = scalar_select %p26, %s28, %s17
    %p30 = scmp.ge.s32.totalorder %s29, 1
    %s31 = scalar_select %p30, 0, %s29
    %s32 = sadd.s32 1, %s16
    %s33 = scalar_select %p30, %s32, %s16
    %p34 = scmp.ge.s32.totalorder %s33, 3
    %s35 = scalar_select %p34, 0, %s33
    %s36 = ssub.s32 %s16, %s35
    %s37 = ssub.s32 %s18, %s27
    %s38 = sor.u32 %s36, %s37
    %p39 = scmp.eq.s32.totalorder %s38, 0
    %s41 = sadd.s32 %s40, 1
    %s42 = scalar_select %p39, %s40, %s41
    %p45 = pneg %p39
    %p46 = scmp.eq.s32.totalorder %s9, 2
    %p47 = por %p45, %p46
    %p48 = scmp.ne.s32.totalorder %s40, %s43
    %p49 = scmp.eq.s32.totalorder %s9, 0
    %p50 = por %p48, %p49
    %p51 = scmp.ne.s32.totalorder %s40, %s43
    %p52 = scmp.eq.s32.totalorder %s14, 2
    %p53 = por %p51, %p52
    %p54 = scmp.ne.s32.totalorder %s43, %s44
    %p55 = scmp.eq.s32.totalorder %s14, 0
    %p56 = por %p54, %p55
    %p57 = scmp.ne.s32.totalorder %s43, %s44
    %p58 = scmp.eq.s32.totalorder %s15, 2
    %p59 = por %p57, %p58
    %p61 = scmp.ne.s32.totalorder %s44, %s60
    %p62 = scmp.eq.s32.totalorder %s15, 0
    %p63 = por %p61, %p62
    %s64 = ssub.s32 %s18, %s27
    %s65 = ssub.s32 %s17, %s31
    %s66 = sor.u32 %s64, %s65
    %p67 = scmp.eq.s32.totalorder %s66, 0
    %s69 = sadd.s32 %s68, 1
    %s70 = scalar_select %p67, %s68, %s69
    %p73 = pneg %p67
    %p74 = scmp.eq.s32.totalorder %s9, 2
    %p75 = por %p73, %p74
    %p76 = scmp.ne.s32.totalorder %s68, %s71
    %p77 = scmp.eq.s32.totalorder %s9, 0
    %p78 = por %p76, %p77
    %p79 = scmp.ne.s32.totalorder %s68, %s71
    %p80 = scmp.eq.s32.totalorder %s14, 2
    %p81 = por %p79, %p80
    %p82 = scmp.ne.s32.totalorder %s71, %s72
    %p83 = scmp.eq.s32.totalorder %s14, 0
    %p84 = por %p82, %p83
    %p85 = scmp.ne.s32.totalorder %s71, %s72
    %p86 = scmp.eq.s32.totalorder %s15, 2
    %p87 = por %p85, %p86
    %p89 = scmp.ne.s32.totalorder %s72, %s88
    %p90 = scmp.eq.s32.totalorder %s15, 0
    %p91 = por %p89, %p90
    %s92 = ssub.s32 %s17, %s31
    %p93 = scmp.eq.s32.totalorder %s92, 0
    %s95 = sadd.s32 %s94, 1
    %s96 = scalar_select %p93, %s94, %s95
    %p99 = pneg %p93
    %p100 = scmp.eq.s32.totalorder %s9, 2
    %p101 = por %p99, %p100
    %p102 = scmp.ne.s32.totalorder %s94, %s97
    %p103 = scmp.eq.s32.totalorder %s9, 0
    %p104 = por %p102, %p103
    %p105 = scmp.ne.s32.totalorder %s94, %s97
    %p106 = scmp.eq.s32.totalorder %s14, 2
    %p107 = por %p105, %p106
    %p108 = scmp.ne.s32.totalorder %s97, %s98
    %p109 = scmp.eq.s32.totalorder %s14, 0
    %p110 = por %p108, %p109
    %p111 = scmp.ne.s32.totalorder %s97, %s98
    %p112 = scmp.eq.s32.totalorder %s15, 2
    %p113 = por %p111, %p112
    %p115 = scmp.ne.s32.totalorder %s98, %s114
    %p116 = scmp.eq.s32.totalorder %s15, 0
    %p117 = por %p115, %p116
    %s118 = ssub.s32 %s16, %s35
    %s119 = ssub.s32 %s17, %s31
    %s120 = sor.u32 %s118, %s119
    %p121 = scmp.eq.s32.totalorder %s120, 0
    %s123 = sadd.s32 %s122, 1
    %s124 = scalar_select %p121, %s122, %s123
    %p127 = pneg %p121
    %p128 = scmp.eq.s32.totalorder %s9, 2
    %p129 = por %p127, %p128
    %p130 = scmp.ne.s32.totalorder %s122, %s125
    %p131 = scmp.eq.s32.totalorder %s9, 0
    %p132 = por %p130, %p131
    %p133 = scmp.ne.s32.totalorder %s122, %s125
    %p134 = scmp.eq.s32.totalorder %s14, 2
    %p135 = por %p133, %p134
    %p136 = scmp.ne.s32.totalorder %s125, %s126
    %p137 = scmp.eq.s32.totalorder %s14, 0
    %p138 = por %p136, %p137
    %p139 = scmp.ne.s32.totalorder %s125, %s126
    %p140 = scmp.eq.s32.totalorder %s15, 2
    %p141 = por %p139, %p140
    %p143 = scmp.ne.s32.totalorder %s126, %s142
    %p144 = scmp.eq.s32.totalorder %s15, 0
    %p145 = por %p143, %p144
    %p146 = scmp.le.s32.totalorder 1, %s9
    %p147 = scmp.lt.s32.totalorder %s9, 4
    %p148 = pnand %p146, %p147
    %p149 = pneg %p148
    // Predicated region
    $region9: #{generator_forward.22} parent=5 // pred_check
      _
    $region10: #{generator_forward.22} parent=5 // pred_check_branch
      %151 = sbr.rel (%p148) target = $region12
    $region11: #{generator_forward.22} parent=5 // pred_region
      %s152 = ssub.s32 %s9, 1
      // Predicated region
      $region13: #{generator_forward.22} parent=11 // pred_check
        %p153 = pneg %p84
      $region14: #{generator_forward.22} parent=11 // pred_check_branch
        %155 = sbr.rel (%p153) target = $region16
      $region15: #{generator_forward.22} parent=11 // pred_region
        %s156 = smul.u32 16, %s21
        %p157 = scmp.lt.s32.totalorder %s156, 15
        %s158 = scalar_select %p157, %s156, 15
        %p159 = scmp.lt.s32.totalorder %s20, 0
        %s160 = scalar_select %p159, %s20, 0
        %s161 = sadd.s32 %s160, %s158
        %s162 = smul.addr %s161, 4
        %s163 = scalar_lea.vmem %s1, %s162
        %s164 = smul.u32 16, %s21
      $region16: #{generator_forward.22} parent=11 // pred_fallthru
        _
      // Predicated region
      $region17: #{generator_forward.22} parent=11 // pred_check
        %p165 = pneg %p110
      $region18: #{generator_forward.22} parent=11 // pred_check_branch
        %167 = sbr.rel (%p165) target = $region20
      $region19: #{generator_forward.22} parent=11 // pred_region
        %p168 = scmp.lt.s32.totalorder %s20, 0
        %s169 = scalar_select %p168, %s20, 0
        %s170 = scalar_lea.vmem %s2, %s169
      $region20: #{generator_forward.22} parent=11 // pred_fallthru
        _
    $region12: #{generator_forward.22} parent=5 // pred_fallthru
      _
    %p171 = scmp.lt.s32.totalorder %s9, 3
    // Predicated region
    $region21: #{generator_forward.22} parent=5 // pred_check
      %p172 = pneg %p171
    $region22: #{generator_forward.22} parent=5 // pred_check_branch
      %174 = sbr.rel (%p172) target = $region24
    $region23: #{generator_forward.22} parent=5 // pred_region
      // Predicated region
      $region25: #{generator_forward.22} parent=23 // pred_check
        %p175 = pneg %p50
      $region26: #{generator_forward.22} parent=23 // pred_check_branch
        %177 = sbr.rel (%p175) target = $region28
      $region27: #{generator_forward.22} parent=23 // pred_region
        %s178 = smul.u32 32, %s16
        %p179 = scmp.lt.s32.totalorder %s178, 95
        %s180 = scalar_select %p179, %s178, 95
        %p181 = scmp.lt.s32.totalorder %s18, 0
        %s182 = scalar_select %p181, %s18, 0
        %s183 = sadd.s32 %s182, %s180
        %s184 = smul.addr %s183, 4
        %s185 = scalar_lea.vmem %s0, %s184
        %s186 = smul.u32 32, %s16
      $region28: #{generator_forward.22} parent=23 // pred_fallthru
        _
    $region24: #{generator_forward.22} parent=5 // pred_fallthru
      _
    %p187 = scmp.le.s32.totalorder 1, %s9
    %p188 = scmp.lt.s32.totalorder %s9, 4
    %p189 = pnand %p187, %p188
    %p190 = pneg %p189
    // Predicated region
    $region29: #{generator_forward.22} parent=5 // pred_check
      _
    $region30: #{generator_forward.22} parent=5 // pred_check_branch
      %192 = sbr.rel (%p189) target = $region32
    $region31: #{generator_forward.22} parent=5 // pred_region
      %s193 = ssub.s32 %s9, 1
      %s194 = smul.u32 32, %s19
      %p195 = scmp.lt.s32.totalorder %s194, 95
      %s196 = scalar_select %p195, %s194, 95
      %p197 = scmp.lt.s32.totalorder %s21, 0
      %s198 = scalar_select %p197, %s21, 0
      %s199 = sadd.s32 %s198, %s196
      %s200 = smul.addr %s199, 4
      %s201 = scalar_lea.vmem %s0, %s200
      %p202 = pneg %p56
      %p203 = pneg %p53
      %s204 = smul.u32 16, %s21
      %p205 = scmp.lt.s32.totalorder %s204, 15
      %s206 = scalar_select %p205, %s204, 15
      %p207 = scmp.lt.s32.totalorder %s20, 0
      %s208 = scalar_select %p207, %s20, 0
      %s209 = sadd.s32 %s208, %s206
      %s210 = smul.addr %s209, 4
      %s211 = scalar_lea.vmem %s1, %s210
      %p212 = pneg %p84
      %p213 = pneg %p81
      %p214 = scmp.lt.s32.totalorder %s20, 0
      %s215 = scalar_select %p214, %s20, 0
      %s216 = scalar_lea.vmem %s2, %s215
      %p217 = pneg %p110
      %p218 = pneg %p107
      %p219 = pneg %p138
      %p220 = pneg %p135
      %s221 = smul.u32 32, %s19
      %p222 = scmp.lt.s32.totalorder %s221, 95
      %s223 = scalar_select %p222, %s221, 95
      %p224 = scmp.lt.s32.totalorder %s20, 0
      %s225 = scalar_select %p224, %s20, 0
      %s226 = sadd.s32 %s225, %s223
      %s227 = smul.addr %s226, 8
      %s228 = scalar_lea.vmem %s3, %s227
      %s229 = smul.u32 32, %s19
      %p230 = scmp.lt.s32.totalorder %s229, 95
      %s231 = scalar_select %p230, %s229, 95
      %p232 = scmp.lt.s32.totalorder %s21, 0
      %s233 = scalar_select %p232, %s21, 0
      %s234 = sadd.s32 %s233, %s231
      %s235 = smul.addr %s234, 4
      %s236 = scalar_lea.vmem %s0, %s235
      %s237 = smul.u32 32, %s19
      %s238 = smul.u32 16, %s21
      %p239 = scmp.lt.s32.totalorder %s238, 15
      %s240 = scalar_select %p239, %s238, 15
      %p241 = scmp.lt.s32.totalorder %s20, 0
      %s242 = scalar_select %p241, %s20, 0
      %s243 = sadd.s32 %s242, %s240
      %s244 = smul.addr %s243, 4
      %s245 = scalar_lea.vmem %s1, %s244
      %s246 = smul.u32 16, %s21
      %p247 = scmp.lt.s32.totalorder %s20, 0
      %s248 = scalar_select %p247, %s20, 0
      %s249 = scalar_lea.vmem %s2, %s248
      %s250 = smul.u32 32, %s19
      %p251 = scmp.lt.s32.totalorder %s250, 95
      %s252 = scalar_select %p251, %s250, 95
      %p253 = scmp.lt.s32.totalorder %s20, 0
      %s254 = scalar_select %p253, %s20, 0
      %s255 = sadd.s32 %s254, %s252
      %s256 = smul.addr %s255, 8
      %s257 = scalar_lea.vmem %s3, %s256
      %s258 = smul.u32 32, %s19
      %p260 = scmp.eq.s32.totalorder %s21, 0
      // Predicated region
      $region33: #{generator_forward.22} parent=31 // pred_check
        %p261 = pneg %p260
      $region34: #{generator_forward.22} parent=31 // pred_check_branch
        %263 = sbr.rel (%p261) target = $region36
      $region35: #{generator_forward.22} parent=31 // pred_region
        %264 = vst [vmem:[#allocation2] sm:$0xff] 0.0
        %265 = vst [vmem:[#allocation2 + $0x8] sm:$0xff] 0.0
        %266 = vst [vmem:[#allocation2 + $0x10] sm:$0xff] 0.0
        %267 = vst [vmem:[#allocation2 + $0x18] sm:$0xff] 0.0
        %268 = vst [vmem:[#allocation2 + $0x20] sm:$0xff] 0.0
        %269 = vst [vmem:[#allocation2 + $0x28] sm:$0xff] 0.0
        %270 = vst [vmem:[#allocation2 + $0x30] sm:$0xff] 0.0
        %271 = vst [vmem:[#allocation2 + $0x38] sm:$0xff] 0.0
        %272 = vst [vmem:[#allocation2 + $0x40] sm:$0xff] 0.0
        %273 = vst [vmem:[#allocation2 + $0x48] sm:$0xff] 0.0
        %274 = vst [vmem:[#allocation2 + $0x50] sm:$0xff] 0.0
        %275 = vst [vmem:[#allocation2 + $0x58] sm:$0xff] 0.0
        %276 = vst [vmem:[#allocation2 + $0x60] sm:$0xff] 0.0
        %277 = vst [vmem:[#allocation2 + $0x68] sm:$0xff] 0.0
        %278 = vst [vmem:[#allocation2 + $0x70] sm:$0xff] 0.0
        %279 = vst [vmem:[#allocation2 + $0x78] sm:$0xff] 0.0
        %280 = vst [vmem:[#allocation2 + $0x80] sm:$0xff] 0.0
        %281 = vst [vmem:[#allocation2 + $0x88] sm:$0xff] 0.0
        %282 = vst [vmem:[#allocation2 + $0x90] sm:$0xff] 0.0
        %283 = vst [vmem:[#allocation2 + $0x98] sm:$0xff] 0.0
        %284 = vst [vmem:[#allocation2 + $0xa0] sm:$0xff] 0.0
        %285 = vst [vmem:[#allocation2 + $0xa8] sm:$0xff] 0.0
        %286 = vst [vmem:[#allocation2 + $0xb0] sm:$0xff] 0.0
        %287 = vst [vmem:[#allocation2 + $0xb8] sm:$0xff] 0.0
        %288 = vst [vmem:[#allocation2 + $0xc0] sm:$0xff] 0.0
        %289 = vst [vmem:[#allocation2 + $0xc8] sm:$0xff] 0.0
        %290 = vst [vmem:[#allocation2 + $0xd0] sm:$0xff] 0.0
        %291 = vst [vmem:[#allocation2 + $0xd8] sm:$0xff] 0.0
        %292 = vst [vmem:[#allocation2 + $0xe0] sm:$0xff] 0.0
        %293 = vst [vmem:[#allocation2 + $0xe8] sm:$0xff] 0.0
        %294 = vst [vmem:[#allocation2 + $0xf0] sm:$0xff] 0.0
        %295 = vst [vmem:[#allocation2 + $0xf8] sm:$0xff] 0.0
      $region36: #{generator_forward.22} parent=31 // pred_fallthru
        _
      %v296 = vld [vmem:[#allocation2] sm:$0xff]
      %v297 = vld [vmem:[#allocation2 + $0x8] sm:$0xff]
      %v298 = vld [vmem:[#allocation2 + $0x10] sm:$0xff]
      %v299 = vld [vmem:[#allocation2 + $0x18] sm:$0xff]
      %v300 = vld [vmem:[#allocation2 + $0x20] sm:$0xff]
      %v301 = vld [vmem:[#allocation2 + $0x28] sm:$0xff]
      %v302 = vld [vmem:[#allocation2 + $0x30] sm:$0xff]
      %v303 = vld [vmem:[#allocation2 + $0x38] sm:$0xff]
      %v304 = vld [vmem:[#allocation2 + $0x40] sm:$0xff]
      %v305 = vld [vmem:[#allocation2 + $0x48] sm:$0xff]
      %v306 = vld [vmem:[#allocation2 + $0x50] sm:$0xff]
      %v307 = vld [vmem:[#allocation2 + $0x58] sm:$0xff]
      %v308 = vld [vmem:[#allocation2 + $0x60] sm:$0xff]
      %v309 = vld [vmem:[#allocation2 + $0x68] sm:$0xff]
      %v310 = vld [vmem:[#allocation2 + $0x70] sm:$0xff]
      %v311 = vld [vmem:[#allocation2 + $0x78] sm:$0xff]
      %v312 = vld [vmem:[#allocation2 + $0x80] sm:$0xff]
      %v313 = vld [vmem:[#allocation2 + $0x88] sm:$0xff]
      %v314 = vld [vmem:[#allocation2 + $0x90] sm:$0xff]
      %v315 = vld [vmem:[#allocation2 + $0x98] sm:$0xff]
      %v316 = vld [vmem:[#allocation2 + $0xa0] sm:$0xff]
      %v317 = vld [vmem:[#allocation2 + $0xa8] sm:$0xff]
      %v318 = vld [vmem:[#allocation2 + $0xb0] sm:$0xff]
      %v319 = vld [vmem:[#allocation2 + $0xb8] sm:$0xff]
      %v320 = vld [vmem:[#allocation2 + $0xc0] sm:$0xff]
      %v321 = vld [vmem:[#allocation2 + $0xc8] sm:$0xff]
      %v322 = vld [vmem:[#allocation2 + $0xd0] sm:$0xff]
      %v323 = vld [vmem:[#allocation2 + $0xd8] sm:$0xff]
      %v324 = vld [vmem:[#allocation2 + $0xe0] sm:$0xff]
      %v325 = vld [vmem:[#allocation2 + $0xe8] sm:$0xff]
      %v326 = vld [vmem:[#allocation2 + $0xf0] sm:$0xff]
      %v327 = vld [vmem:[#allocation2 + $0xf8] sm:$0xff]
      %v328 = vld [vmem:[%s236] sm:$0xf]
      %v329 = vld [vmem:[%s236 + $0x4] sm:$0xf]
      %v330 = vld [vmem:[%s236 + $0x8] sm:$0xf]
      %v331 = vld [vmem:[%s236 + $0xc] sm:$0xf]
      %v332 = vld [vmem:[%s236 + $0x10] sm:$0xf]
      %v333 = vld [vmem:[%s236 + $0x14] sm:$0xf]
      %v334 = vld [vmem:[%s236 + $0x18] sm:$0xf]
      %v335 = vld [vmem:[%s236 + $0x1c] sm:$0xf]
      %v336 = vld [vmem:[%s236 + $0x20] sm:$0xf]
      %v337 = vld [vmem:[%s236 + $0x24] sm:$0xf]
      %v338 = vld [vmem:[%s236 + $0x28] sm:$0xf]
      %v339 = vld [vmem:[%s236 + $0x2c] sm:$0xf]
      %v340 = vld [vmem:[%s236 + $0x30] sm:$0xf]
      %v341 = vld [vmem:[%s236 + $0x34] sm:$0xf]
      %v342 = vld [vmem:[%s236 + $0x38] sm:$0xf]
      %v343 = vld [vmem:[%s236 + $0x3c] sm:$0xf]
      %v344 = vld [vmem:[%s236 + $0x40] sm:$0xf]
      %v345 = vld [vmem:[%s236 + $0x44] sm:$0xf]
      %v346 = vld [vmem:[%s236 + $0x48] sm:$0xf]
      %v347 = vld [vmem:[%s236 + $0x4c] sm:$0xf]
      %v348 = vld [vmem:[%s236 + $0x50] sm:$0xf]
      %v349 = vld [vmem:[%s236 + $0x54] sm:$0xf]
      %v350 = vld [vmem:[%s236 + $0x58] sm:$0xf]
      %v351 = vld [vmem:[%s236 + $0x5c] sm:$0xf]
      %v352 = vld [vmem:[%s236 + $0x60] sm:$0xf]
      %v353 = vld [vmem:[%s236 + $0x64] sm:$0xf]
      %v354 = vld [vmem:[%s236 + $0x68] sm:$0xf]
      %v355 = vld [vmem:[%s236 + $0x6c] sm:$0xf]
      %v356 = vld [vmem:[%s236 + $0x70] sm:$0xf]
      %v357 = vld [vmem:[%s236 + $0x74] sm:$0xf]
      %v358 = vld [vmem:[%s236 + $0x78] sm:$0xf]
      %v359 = vld [vmem:[%s236 + $0x7c] sm:$0xf]
      %v360 = vld [vmem:[%s245] sm:$0xf]
      %v361 = vld [vmem:[%s245 + $0x4] sm:$0xf]
      %v362 = vld [vmem:[%s245 + $0x8] sm:$0xf]
      %v363 = vld [vmem:[%s245 + $0xc] sm:$0xf]
      %v364 = vld [vmem:[%s245 + $0x10] sm:$0xf]
      %v365 = vld [vmem:[%s245 + $0x14] sm:$0xf]
      %v366 = vld [vmem:[%s245 + $0x18] sm:$0xf]
      %v367 = vld [vmem:[%s245 + $0x1c] sm:$0xf]
      %v368 = vld [vmem:[%s245 + $0x20] sm:$0xf]
      %v369 = vld [vmem:[%s245 + $0x24] sm:$0xf]
      %v370 = vld [vmem:[%s245 + $0x28] sm:$0xf]
      %v371 = vld [vmem:[%s245 + $0x2c] sm:$0xf]
      %v372 = vld [vmem:[%s245 + $0x30] sm:$0xf]
      %v373 = vld [vmem:[%s245 + $0x34] sm:$0xf]
      %v374 = vld [vmem:[%s245 + $0x38] sm:$0xf]
      %v375 = vld [vmem:[%s245 + $0x3c] sm:$0xf]
      %v408 = vunpack.c.l.b16 %v328
      %v409 = vunpack.c.l.b16 %v329
      %v410 = vunpack.c.l.b16 %v330
      %v411 = vunpack.c.l.b16 %v331
      %v412 = vunpack.c.l.b16 %v332
      %v413 = vunpack.c.l.b16 %v333
      %v414 = vunpack.c.l.b16 %v334
      %v415 = vunpack.c.l.b16 %v335
      %v416 = vunpack.c.l.b16 %v336
      %v417 = vunpack.c.l.b16 %v337
      %v418 = vunpack.c.l.b16 %v338
      %v419 = vunpack.c.l.b16 %v339
      %v420 = vunpack.c.l.b16 %v340
      %v421 = vunpack.c.l.b16 %v341
      %v422 = vunpack.c.l.b16 %v342
      %v423 = vunpack.c.l.b16 %v343
      %v424 = vunpack.c.l.b16 %v344
      %v425 = vunpack.c.l.b16 %v345
      %v426 = vunpack.c.l.b16 %v346
      %v427 = vunpack.c.l.b16 %v347
      %v428 = vunpack.c.l.b16 %v348
      %v429 = vunpack.c.l.b16 %v349
      %v430 = vunpack.c.l.b16 %v350
      %v431 = vunpack.c.l.b16 %v351
      %v432 = vunpack.c.l.b16 %v352
      %v433 = vunpack.c.l.b16 %v353
      %v434 = vunpack.c.l.b16 %v354
      %v435 = vunpack.c.l.b16 %v355
      %v436 = vunpack.c.l.b16 %v356
      %v437 = vunpack.c.l.b16 %v357
      %v438 = vunpack.c.l.b16 %v358
      %v439 = vunpack.c.l.b16 %v359
      %v440 = vpack.c.b16 %v409, %v408
      %v441 = vpack.c.b16 %v411, %v410
      %v442 = vpack.c.b16 %v413, %v412
      %v443 = vpack.c.b16 %v415, %v414
      %v444 = vpack.c.b16 %v417, %v416
      %v445 = vpack.c.b16 %v419, %v418
      %v446 = vpack.c.b16 %v421, %v420
      %v447 = vpack.c.b16 %v423, %v422
      %v448 = vpack.c.b16 %v425, %v424
      %v449 = vpack.c.b16 %v427, %v426
      %v450 = vpack.c.b16 %v429, %v428
      %v451 = vpack.c.b16 %v431, %v430
      %v452 = vpack.c.b16 %v433, %v432
      %v453 = vpack.c.b16 %v435, %v434
      %v454 = vpack.c.b16 %v437, %v436
      %v455 = vpack.c.b16 %v439, %v438
      %v488 = vunpack.c.l.b16 %v360
      %v489 = vunpack.c.l.b16 %v361
      %v490 = vunpack.c.l.b16 %v362
      %v491 = vunpack.c.l.b16 %v363
      %v492 = vunpack.c.l.b16 %v364
      %v493 = vunpack.c.l.b16 %v365
      %v494 = vunpack.c.l.b16 %v366
      %v495 = vunpack.c.l.b16 %v367
      %v496 = vunpack.c.l.b16 %v368
      %v497 = vunpack.c.l.b16 %v369
      %v498 = vunpack.c.l.b16 %v370
      %v499 = vunpack.c.l.b16 %v371
      %v500 = vunpack.c.l.b16 %v372
      %v501 = vunpack.c.l.b16 %v373
      %v502 = vunpack.c.l.b16 %v374
      %v503 = vunpack.c.l.b16 %v375
      %v504 = vpack.c.b16 %v489, %v488
      %v505 = vpack.c.b16 %v491, %v490
      %v506 = vpack.c.b16 %v493, %v492
      %v507 = vpack.c.b16 %v495, %v494
      %v508 = vpack.c.b16 %v497, %v496
      %v509 = vpack.c.b16 %v499, %v498
      %v510 = vpack.c.b16 %v501, %v500
      %v511 = vpack.c.b16 %v503, %v502
      %520 = vmatprep.subr.bf16.mxu0 0
      %521 = vmatpush1.bf16.msra.mxu0 %v511
      %522 = vmatprep.subr.bf16.mxu0 0
      %523 = vmatpush1.bf16.msra.mxu0 %v510
      %524 = vmatprep.subr.bf16.mxu0 0
      %525 = vmatpush1.bf16.msra.mxu0 %v509
      %526 = vmatprep.subr.bf16.mxu0 0
      %527 = vmatpush1.bf16.msra.mxu0 %v508
      %528 = vmatprep.subr.bf16.mxu0 0
      %529 = vmatpush1.bf16.msra.mxu0 %v507
      %530 = vmatprep.subr.bf16.mxu0 0
      %531 = vmatpush1.bf16.msra.mxu0 %v506
      %532 = vmatprep.subr.bf16.mxu0 0
      %533 = vmatpush1.bf16.msra.mxu0 %v505
      %534 = vmatprep.subr.bf16.mxu0 0
      %535 = vmatpush1.bf16.msra.mxu0 %v504
      %536 = vmatprep.subr.bf16.mxu0 0
      %537 = vmatpush2.bf16.msra.mxu0 0
      %538 = vmatprep.subr.bf16.mxu0 0
      %539 = vmatpush2.bf16.msra.mxu0 0
      %540 = vmatprep.subr.bf16.mxu0 0
      %541 = vmatpush2.bf16.msra.mxu0 0
      %542 = vmatprep.subr.bf16.mxu0 0
      %543 = vmatpush2.bf16.msra.mxu0 0
      %544 = vmatprep.subr.bf16.mxu0 0
      %545 = vmatpush2.bf16.msra.mxu0 0
      %546 = vmatprep.subr.bf16.mxu0 0
      %547 = vmatpush2.bf16.msra.mxu0 0
      %548 = vmatprep.subr.bf16.mxu0 0
      %549 = vmatpush2.bf16.msra.mxu0 0
      %550 = vmatprep.subr.bf16.mxu0 0
      %551 = vmatpush2.bf16.msra.mxu0 0
      %552 = vmatprep.mubr.bf16.mxu0 0
      %553 = vmatmul.mubr.bf16.gmra.mxu0 %v440
      %v554 = vpop.f32.mrf.mxu0
      %v555 = vadd.f32 0.0, %v554
      %v556 = vpop.f32.mrf.mxu0
      %v557 = vpop.f32.mrf.mxu0
      %v558 = vadd.f32 0.0, %v557
      %v559 = vpop.f32.mrf.mxu0
      %560 = vmatprep.mubr.bf16.mxu0 0
      %561 = vmatmul.mubr.bf16.gmra.mxu0 %v441
      %v562 = vpop.f32.mrf.mxu0
      %v563 = vadd.f32 0.0, %v562
      %v564 = vpop.f32.mrf.mxu0
      %v565 = vpop.f32.mrf.mxu0
      %v566 = vadd.f32 0.0, %v565
      %v567 = vpop.f32.mrf.mxu0
      %568 = vmatprep.mubr.bf16.mxu0 0
      %569 = vmatmul.mubr.bf16.gmra.mxu0 %v442
      %v570 = vpop.f32.mrf.mxu0
      %v571 = vadd.f32 0.0, %v570
      %v572 = vpop.f32.mrf.mxu0
      %v573 = vpop.f32.mrf.mxu0
      %v574 = vadd.f32 0.0, %v573
      %v575 = vpop.f32.mrf.mxu0
      %576 = vmatprep.mubr.bf16.mxu0 0
      %577 = vmatmul.mubr.bf16.gmra.mxu0 %v443
      %v578 = vpop.f32.mrf.mxu0
      %v579 = vadd.f32 0.0, %v578
      %v580 = vpop.f32.mrf.mxu0
      %v581 = vpop.f32.mrf.mxu0
      %v582 = vadd.f32 0.0, %v581
      %v583 = vpop.f32.mrf.mxu0
      %584 = vmatprep.mubr.bf16.mxu0 0
      %585 = vmatmul.mubr.bf16.gmra.mxu0 %v444
      %v586 = vpop.f32.mrf.mxu0
      %v587 = vadd.f32 0.0, %v586
      %v588 = vpop.f32.mrf.mxu0
      %v589 = vpop.f32.mrf.mxu0
      %v590 = vadd.f32 0.0, %v589
      %v591 = vpop.f32.mrf.mxu0
      %592 = vmatprep.mubr.bf16.mxu0 0
      %593 = vmatmul.mubr.bf16.gmra.mxu0 %v445
      %v594 = vpop.f32.mrf.mxu0
      %v595 = vadd.f32 0.0, %v594
      %v596 = vpop.f32.mrf.mxu0
      %v597 = vpop.f32.mrf.mxu0
      %v598 = vadd.f32 0.0, %v597
      %v599 = vpop.f32.mrf.mxu0
      %600 = vmatprep.mubr.bf16.mxu0 0
      %601 = vmatmul.mubr.bf16.gmra.mxu0 %v446
      %v602 = vpop.f32.mrf.mxu0
      %v603 = vadd.f32 0.0, %v602
      %v604 = vpop.f32.mrf.mxu0
      %v605 = vpop.f32.mrf.mxu0
      %v606 = vadd.f32 0.0, %v605
      %v607 = vpop.f32.mrf.mxu0
      %608 = vmatprep.mubr.bf16.mxu0 0
      %609 = vmatmul.mubr.bf16.gmra.mxu0 %v447
      %v610 = vpop.f32.mrf.mxu0
      %v611 = vadd.f32 0.0, %v610
      %v612 = vpop.f32.mrf.mxu0
      %v613 = vpop.f32.mrf.mxu0
      %v614 = vadd.f32 0.0, %v613
      %v615 = vpop.f32.mrf.mxu0
      %616 = vmatprep.mubr.bf16.mxu0 0
      %617 = vmatmul.mubr.bf16.gmra.mxu0 %v448
      %v618 = vpop.f32.mrf.mxu0
      %v619 = vadd.f32 0.0, %v618
      %v620 = vpop.f32.mrf.mxu0
      %v621 = vpop.f32.mrf.mxu0
      %v622 = vadd.f32 0.0, %v621
      %v623 = vpop.f32.mrf.mxu0
      %624 = vmatprep.mubr.bf16.mxu0 0
      %625 = vmatmul.mubr.bf16.gmra.mxu0 %v449
      %v626 = vpop.f32.mrf.mxu0
      %v627 = vadd.f32 0.0, %v626
      %v628 = vpop.f32.mrf.mxu0
      %v629 = vpop.f32.mrf.mxu0
      %v630 = vadd.f32 0.0, %v629
      %v631 = vpop.f32.mrf.mxu0
      %632 = vmatprep.mubr.bf16.mxu0 0
      %633 = vmatmul.mubr.bf16.gmra.mxu0 %v450
      %v634 = vpop.f32.mrf.mxu0
      %v635 = vadd.f32 0.0, %v634
      %v636 = vpop.f32.mrf.mxu0
      %v637 = vpop.f32.mrf.mxu0
      %v638 = vadd.f32 0.0, %v637
      %v639 = vpop.f32.mrf.mxu0
      %640 = vmatprep.mubr.bf16.mxu0 0
      %641 = vmatmul.mubr.bf16.gmra.mxu0 %v451
      %v642 = vpop.f32.mrf.mxu0
      %v643 = vadd.f32 0.0, %v642
      %v644 = vpop.f32.mrf.mxu0
      %v645 = vpop.f32.mrf.mxu0
      %v646 = vadd.f32 0.0, %v645
      %v647 = vpop.f32.mrf.mxu0
      %648 = vmatprep.mubr.bf16.mxu0 0
      %649 = vmatmul.mubr.bf16.gmra.mxu0 %v452
      %v650 = vpop.f32.mrf.mxu0
      %v651 = vadd.f32 0.0, %v650
      %v652 = vpop.f32.mrf.mxu0
      %v653 = vpop.f32.mrf.mxu0
      %v654 = vadd.f32 0.0, %v653
      %v655 = vpop.f32.mrf.mxu0
      %656 = vmatprep.mubr.bf16.mxu0 0
      %657 = vmatmul.mubr.bf16.gmra.mxu0 %v453
      %v658 = vpop.f32.mrf.mxu0
      %v659 = vadd.f32 0.0, %v658
      %v660 = vpop.f32.mrf.mxu0
      %v661 = vpop.f32.mrf.mxu0
      %v662 = vadd.f32 0.0, %v661
      %v663 = vpop.f32.mrf.mxu0
      %664 = vmatprep.mubr.bf16.mxu0 0
      %665 = vmatmul.mubr.bf16.gmra.mxu0 %v454
      %v666 = vpop.f32.mrf.mxu0
      %v667 = vadd.f32 0.0, %v666
      %v668 = vpop.f32.mrf.mxu0
      %v669 = vpop.f32.mrf.mxu0
      %v670 = vadd.f32 0.0, %v669
      %v671 = vpop.f32.mrf.mxu0
      %672 = vmatprep.mubr.bf16.mxu0 0
      %673 = vmatmul.mubr.bf16.gmra.mxu0 %v455
      %v674 = vpop.f32.mrf.mxu0
      %v675 = vadd.f32 0.0, %v674
      %v676 = vpop.f32.mrf.mxu0
      %v677 = vpop.f32.mrf.mxu0
      %v678 = vadd.f32 0.0, %v677
      %v679 = vpop.f32.mrf.mxu0
      %680 = vdwg.mxu0
      %v681 = vadd.f32 %v296, %v555
      %v682 = vadd.f32 %v297, %v558
      %v683 = vadd.f32 %v298, %v563
      %v684 = vadd.f32 %v299, %v566
      %v685 = vadd.f32 %v300, %v571
      %v686 = vadd.f32 %v301, %v574
      %v687 = vadd.f32 %v302, %v579
      %v688 = vadd.f32 %v303, %v582
      %v689 = vadd.f32 %v304, %v587
      %v690 = vadd.f32 %v305, %v590
      %v691 = vadd.f32 %v306, %v595
      %v692 = vadd.f32 %v307, %v598
      %v693 = vadd.f32 %v308, %v603
      %v694 = vadd.f32 %v309, %v606
      %v695 = vadd.f32 %v310, %v611
      %v696 = vadd.f32 %v311, %v614
      %v697 = vadd.f32 %v312, %v619
      %v698 = vadd.f32 %v313, %v622
      %v699 = vadd.f32 %v314, %v627
      %v700 = vadd.f32 %v315, %v630
      %v701 = vadd.f32 %v316, %v635
      %v702 = vadd.f32 %v317, %v638
      %v703 = vadd.f32 %v318, %v643
      %v704 = vadd.f32 %v319, %v646
      %v705 = vadd.f32 %v320, %v651
      %v706 = vadd.f32 %v321, %v654
      %v707 = vadd.f32 %v322, %v659
      %v708 = vadd.f32 %v323, %v662
      %v709 = vadd.f32 %v324, %v667
      %v710 = vadd.f32 %v325, %v670
      %v711 = vadd.f32 %v326, %v675
      %v712 = vadd.f32 %v327, %v678
      %713 = vst [vmem:[#allocation2] sm:$0xff] %v681
      %714 = vst [vmem:[#allocation2 + $0x8] sm:$0xff] %v682
      %715 = vst [vmem:[#allocation2 + $0x10] sm:$0xff] %v683
      %716 = vst [vmem:[#allocation2 + $0x18] sm:$0xff] %v684
      %717 = vst [vmem:[#allocation2 + $0x20] sm:$0xff] %v685
      %718 = vst [vmem:[#allocation2 + $0x28] sm:$0xff] %v686
      %719 = vst [vmem:[#allocation2 + $0x30] sm:$0xff] %v687
      %720 = vst [vmem:[#allocation2 + $0x38] sm:$0xff] %v688
      %721 = vst [vmem:[#allocation2 + $0x40] sm:$0xff] %v689
      %722 = vst [vmem:[#allocation2 + $0x48] sm:$0xff] %v690
      %723 = vst [vmem:[#allocation2 + $0x50] sm:$0xff] %v691
      %724 = vst [vmem:[#allocation2 + $0x58] sm:$0xff] %v692
      %725 = vst [vmem:[#allocation2 + $0x60] sm:$0xff] %v693
      %726 = vst [vmem:[#allocation2 + $0x68] sm:$0xff] %v694
      %727 = vst [vmem:[#allocation2 + $0x70] sm:$0xff] %v695
      %728 = vst [vmem:[#allocation2 + $0x78] sm:$0xff] %v696
      %729 = vst [vmem:[#allocation2 + $0x80] sm:$0xff] %v697
      %730 = vst [vmem:[#allocation2 + $0x88] sm:$0xff] %v698
      %731 = vst [vmem:[#allocation2 + $0x90] sm:$0xff] %v699
      %732 = vst [vmem:[#allocation2 + $0x98] sm:$0xff] %v700
      %733 = vst [vmem:[#allocation2 + $0xa0] sm:$0xff] %v701
      %734 = vst [vmem:[#allocation2 + $0xa8] sm:$0xff] %v702
      %735 = vst [vmem:[#allocation2 + $0xb0] sm:$0xff] %v703
      %736 = vst [vmem:[#allocation2 + $0xb8] sm:$0xff] %v704
      %737 = vst [vmem:[#allocation2 + $0xc0] sm:$0xff] %v705
      %738 = vst [vmem:[#allocation2 + $0xc8] sm:$0xff] %v706
      %739 = vst [vmem:[#allocation2 + $0xd0] sm:$0xff] %v707
      %740 = vst [vmem:[#allocation2 + $0xd8] sm:$0xff] %v708
      %741 = vst [vmem:[#allocation2 + $0xe0] sm:$0xff] %v709
      %742 = vst [vmem:[#allocation2 + $0xe8] sm:$0xff] %v710
      %743 = vst [vmem:[#allocation2 + $0xf0] sm:$0xff] %v711
      %744 = vst [vmem:[#allocation2 + $0xf8] sm:$0xff] %v712
      // Predicated region
      $region37: #{generator_forward.22} parent=31 // pred_check
        %p745 = pneg %p260
      $region38: #{generator_forward.22} parent=31 // pred_check_branch
        %747 = sbr.rel (%p745) target = $region40
      $region39: #{generator_forward.22} parent=31 // pred_region
        %v748 = vld [vmem:[#allocation2] sm:$0xff]
        %v749 = vld [vmem:[#allocation2 + $0x8] sm:$0xff]
        %v750 = vld [vmem:[#allocation2 + $0x10] sm:$0xff]
        %v751 = vld [vmem:[#allocation2 + $0x18] sm:$0xff]
        %v752 = vld [vmem:[#allocation2 + $0x20] sm:$0xff]
        %v753 = vld [vmem:[#allocation2 + $0x28] sm:$0xff]
        %v754 = vld [vmem:[#allocation2 + $0x30] sm:$0xff]
        %v755 = vld [vmem:[#allocation2 + $0x38] sm:$0xff]
        %v756 = vld [vmem:[#allocation2 + $0x40] sm:$0xff]
        %v757 = vld [vmem:[#allocation2 + $0x48] sm:$0xff]
        %v758 = vld [vmem:[#allocation2 + $0x50] sm:$0xff]
        %v759 = vld [vmem:[#allocation2 + $0x58] sm:$0xff]
        %v760 = vld [vmem:[#allocation2 + $0x60] sm:$0xff]
        %v761 = vld [vmem:[#allocation2 + $0x68] sm:$0xff]
        %v762 = vld [vmem:[#allocation2 + $0x70] sm:$0xff]
        %v763 = vld [vmem:[#allocation2 + $0x78] sm:$0xff]
        %v764 = vld [vmem:[#allocation2 + $0x80] sm:$0xff]
        %v765 = vld [vmem:[#allocation2 + $0x88] sm:$0xff]
        %v766 = vld [vmem:[#allocation2 + $0x90] sm:$0xff]
        %v767 = vld [vmem:[#allocation2 + $0x98] sm:$0xff]
        %v768 = vld [vmem:[#allocation2 + $0xa0] sm:$0xff]
        %v769 = vld [vmem:[#allocation2 + $0xa8] sm:$0xff]
        %v770 = vld [vmem:[#allocation2 + $0xb0] sm:$0xff]
        %v771 = vld [vmem:[#allocation2 + $0xb8] sm:$0xff]
        %v772 = vld [vmem:[#allocation2 + $0xc0] sm:$0xff]
        %v773 = vld [vmem:[#allocation2 + $0xc8] sm:$0xff]
        %v774 = vld [vmem:[#allocation2 + $0xd0] sm:$0xff]
        %v775 = vld [vmem:[#allocation2 + $0xd8] sm:$0xff]
        %v776 = vld [vmem:[#allocation2 + $0xe0] sm:$0xff]
        %v777 = vld [vmem:[#allocation2 + $0xe8] sm:$0xff]
        %v778 = vld [vmem:[#allocation2 + $0xf0] sm:$0xff]
        %v779 = vld [vmem:[#allocation2 + $0xf8] sm:$0xff]
        %v780 = vld [vmem:[%s249] sm:$0x1]
        %v782 = vlaneseq
        %v783 = vshrl.u32 %v782, 7
        %v784 = vsub.s32 0, %v783
        %v785 = vrot.slane %v780, %v784
        %v787 = vadd.f32 %v748, %v785
        %v788 = vadd.f32 %v749, %v785
        %v789 = vadd.f32 %v750, %v785
        %v790 = vadd.f32 %v751, %v785
        %v791 = vadd.f32 %v752, %v785
        %v792 = vadd.f32 %v753, %v785
        %v793 = vadd.f32 %v754, %v785
        %v794 = vadd.f32 %v755, %v785
        %v795 = vadd.f32 %v756, %v785
        %v796 = vadd.f32 %v757, %v785
        %v797 = vadd.f32 %v758, %v785
        %v798 = vadd.f32 %v759, %v785
        %v799 = vadd.f32 %v760, %v785
        %v800 = vadd.f32 %v761, %v785
        %v801 = vadd.f32 %v762, %v785
        %v802 = vadd.f32 %v763, %v785
        %v803 = vadd.f32 %v764, %v785
        %v804 = vadd.f32 %v765, %v785
        %v805 = vadd.f32 %v766, %v785
        %v806 = vadd.f32 %v767, %v785
        %v807 = vadd.f32 %v768, %v785
        %v808 = vadd.f32 %v769, %v785
        %v809 = vadd.f32 %v770, %v785
        %v810 = vadd.f32 %v771, %v785
        %v811 = vadd.f32 %v772, %v785
        %v812 = vadd.f32 %v773, %v785
        %v813 = vadd.f32 %v774, %v785
        %v814 = vadd.f32 %v775, %v785
        %v815 = vadd.f32 %v776, %v785
        %v816 = vadd.f32 %v777, %v785
        %v817 = vadd.f32 %v778, %v785
        %v818 = vadd.f32 %v779, %v785
        %819 = vst [vmem:[%s257] sm:$0xff] %v787
        %820 = vst [vmem:[%s257 + $0x8] sm:$0xff] %v788
        %821 = vst [vmem:[%s257 + $0x10] sm:$0xff] %v789
        %822 = vst [vmem:[%s257 + $0x18] sm:$0xff] %v790
        %823 = vst [vmem:[%s257 + $0x20] sm:$0xff] %v791
        %824 = vst [vmem:[%s257 + $0x28] sm:$0xff] %v792
        %825 = vst [vmem:[%s257 + $0x30] sm:$0xff] %v793
        %826 = vst [vmem:[%s257 + $0x38] sm:$0xff] %v794
        %827 = vst [vmem:[%s257 + $0x40] sm:$0xff] %v795
        %828 = vst [vmem:[%s257 + $0x48] sm:$0xff] %v796
        %829 = vst [vmem:[%s257 + $0x50] sm:$0xff] %v797
        %830 = vst [vmem:[%s257 + $0x58] sm:$0xff] %v798
        %831 = vst [vmem:[%s257 + $0x60] sm:$0xff] %v799
        %832 = vst [vmem:[%s257 + $0x68] sm:$0xff] %v800
        %833 = vst [vmem:[%s257 + $0x70] sm:$0xff] %v801
        %834 = vst [vmem:[%s257 + $0x78] sm:$0xff] %v802
        %835 = vst [vmem:[%s257 + $0x80] sm:$0xff] %v803
        %836 = vst [vmem:[%s257 + $0x88] sm:$0xff] %v804
        %837 = vst [vmem:[%s257 + $0x90] sm:$0xff] %v805
        %838 = vst [vmem:[%s257 + $0x98] sm:$0xff] %v806
        %839 = vst [vmem:[%s257 + $0xa0] sm:$0xff] %v807
        %840 = vst [vmem:[%s257 + $0xa8] sm:$0xff] %v808
        %841 = vst [vmem:[%s257 + $0xb0] sm:$0xff] %v809
        %842 = vst [vmem:[%s257 + $0xb8] sm:$0xff] %v810
        %843 = vst [vmem:[%s257 + $0xc0] sm:$0xff] %v811
        %844 = vst [vmem:[%s257 + $0xc8] sm:$0xff] %v812
        %845 = vst [vmem:[%s257 + $0xd0] sm:$0xff] %v813
        %846 = vst [vmem:[%s257 + $0xd8] sm:$0xff] %v814
        %847 = vst [vmem:[%s257 + $0xe0] sm:$0xff] %v815
        %848 = vst [vmem:[%s257 + $0xe8] sm:$0xff] %v816
        %849 = vst [vmem:[%s257 + $0xf0] sm:$0xff] %v817
        %850 = vst [vmem:[%s257 + $0xf8] sm:$0xff] %v818
      $region40: #{generator_forward.22} parent=31 // pred_fallthru
        _
      %s851 = smul.u32 32, %s19
      %p852 = scmp.lt.s32.totalorder %s851, 95
      %s853 = scalar_select %p852, %s851, 95
      %p854 = scmp.lt.s32.totalorder %s20, 0
      %s855 = scalar_select %p854, %s20, 0
      %s856 = sadd.s32 %s855, %s853
      %s857 = smul.addr %s856, 8
      %s858 = scalar_lea.vmem %s3, %s857
      // Predicated region
      $region41: #{generator_forward.22} parent=31 // pred_check
        %p859 = pneg %p135
      $region42: #{generator_forward.22} parent=31 // pred_check_branch
        %861 = sbr.rel (%p859) target = $region44
      $region43: #{generator_forward.22} parent=31 // pred_region
        %s862 = smul.u32 32, %s19
      $region44: #{generator_forward.22} parent=31 // pred_fallthru
        _
    $region32: #{generator_forward.22} parent=5 // pred_fallthru
      _
    %p863 = scmp.le.s32.totalorder 2, %s9
    // Predicated region
    $region45: #{generator_forward.22} parent=5 // pred_check
      %p864 = pneg %p863
    $region46: #{generator_forward.22} parent=5 // pred_check_branch
      %866 = sbr.rel (%p864) target = $region48
    $region47: #{generator_forward.22} parent=5 // pred_region
      %s867 = ssub.s32 %s9, 2
      // Predicated region
      $region49: #{generator_forward.22} parent=47 // pred_check
        %p868 = pneg %p141
      $region50: #{generator_forward.22} parent=47 // pred_check_branch
        %870 = sbr.rel (%p868) target = $region52
      $region51: #{generator_forward.22} parent=47 // pred_region
        %s871 = smul.u32 32, %s22
        %p872 = scmp.lt.s32.totalorder %s871, 95
        %s873 = scalar_select %p872, %s871, 95
        %p874 = scmp.lt.s32.totalorder %s23, 0
        %s875 = scalar_select %p874, %s23, 0
        %s876 = sadd.s32 %s875, %s873
        %s877 = smul.addr %s876, 8
        %s878 = scalar_lea.vmem %s3, %s877
      $region52: #{generator_forward.22} parent=47 // pred_fallthru
        _
    $region48: #{generator_forward.22} parent=5 // pred_fallthru
      _
  $region6: #{generator_forward.22} parent=0 // loop_footer
    %s13 = sadd.s32 1, %s9
  $region7: #{generator_forward.22} parent=0 // loop_footer_branch
    %8 = sbr.rel target = $region3
  $region8: #{generator_forward.22} parent=0 // loop_exit
    _

// kernel: generator_forward.24
$region0: #{generator_forward.24}
  #allocation0 [shape = 'u32[]', space=smem, size = 0x4, offset = 0x4, fixed_abs, tag = 'smem constant byte address 0x4 - core index']
  #allocation1 [shape = 'u32[144,128]{1,0:T(1,128)}', space=vmem, size = 0x12000, scoped, tag = 'internal scratch']
  %s0 = inlined_call_operand.vmem [shape: f32[2048,8], index: 0, kind: input, shape index: {}]
  %s1 = inlined_call_operand.vmem [shape: f32[1,8], index: 1, kind: input, shape index: {}]
  %s2 = inlined_call_operand.vmem [shape: f32[1,8], index: 2, kind: input, shape index: {}]
  %s3 = inlined_call_operand.vmem [shape: f32[2048,8], index: 3, kind: output, shape index: {}]
  %s4 = sld [smem:[#allocation0]]
  $region45: #{generator_forward.24} parent=0
    _
  %s6 = ssub.s32 1, %s4
  %s7 = scalar_select 0, %s6, %s4
  loop: start=0, step=1, limit=6
  $region2: #{generator_forward.24} parent=0 // loop_pre_header
    _
  $region3: #{generator_forward.24} parent=0 // loop_header
    %s9 = sphi 0, %s13
    %p10 = scmp.ge.s32.totalorder %s9, 6
    %s19 = sphi 0, %s21
    %s22 = sphi 0, %s19
    %s23 = sphi 0, %s22
    %s39 = sphi 0, %s23
    %s43 = sphi 0, %s43
    %s45 = sphi 0, %s43
    %s46 = sphi 0, %s45
    %s60 = sphi 0, %s46
    %s64 = sphi 0, %s64
    %s66 = sphi 0, %s64
    %s67 = sphi 0, %s66
    %s81 = sphi 0, %s67
    %s87 = sphi 0, %s89
    %s90 = sphi 0, %s87
    %s91 = sphi 0, %s90
    %s107 = sphi 0, %s91
  $region4: #{generator_forward.24} parent=0 // loop_header_branch
    %12 = sbr.rel (%p10) target = $region8
  $region5: #{generator_forward.24} parent=0 // loop_body
    %s14 = ssub.s32 %s9, 1
    %s15 = ssub.s32 %s9, 2
    %s16 = sadd.s32 %s9, 1
    %s17 = ssub.s32 %s9, %s16
    %p18 = scmp.eq.s32.totalorder %s17, 0
    %s20 = sadd.s32 %s19, 1
    %s21 = scalar_select %p18, %s19, %s20
    %p24 = pneg %p18
    %p25 = scmp.eq.s32.totalorder %s9, 3
    %p26 = por %p24, %p25
    %p27 = scmp.ne.s32.totalorder %s19, %s22
    %p28 = scmp.eq.s32.totalorder %s9, 0
    %p29 = por %p27, %p28
    %p30 = scmp.ne.s32.totalorder %s19, %s22
    %p31 = scmp.eq.s32.totalorder %s14, 3
    %p32 = por %p30, %p31
    %p33 = scmp.ne.s32.totalorder %s22, %s23
    %p34 = scmp.eq.s32.totalorder %s14, 0
    %p35 = por %p33, %p34
    %p36 = scmp.ne.s32.totalorder %s22, %s23
    %p37 = scmp.eq.s32.totalorder %s15, 3
    %p38 = por %p36, %p37
    %p40 = scmp.ne.s32.totalorder %s23, %s39
    %p41 = scmp.eq.s32.totalorder %s15, 0
    %p42 = por %p40, %p41
    %s44 = sadd.s32 %s43, 1
    %p47 = scmp.eq.s32.totalorder %s9, 3
    %p48 = scmp.ne.s32.totalorder %s43, %s45
    %p49 = scmp.eq.s32.totalorder %s9, 0
    %p50 = por %p48, %p49
    %p51 = scmp.ne.s32.totalorder %s43, %s45
    %p52 = scmp.eq.s32.totalorder %s14, 3
    %p53 = por %p51, %p52
    %p54 = scmp.ne.s32.totalorder %s45, %s46
    %p55 = scmp.eq.s32.totalorder %s14, 0
    %p56 = por %p54, %p55
    %p57 = scmp.ne.s32.totalorder %s45, %s46
    %p58 = scmp.eq.s32.totalorder %s15, 3
    %p59 = por %p57, %p58
    %p61 = scmp.ne.s32.totalorder %s46, %s60
    %p62 = scmp.eq.s32.totalorder %s15, 0
    %p63 = por %p61, %p62
    %s65 = sadd.s32 %s64, 1
    %p68 = scmp.eq.s32.totalorder %s9, 3
    %p69 = scmp.ne.s32.totalorder %s64, %s66
    %p70 = scmp.eq.s32.totalorder %s9, 0
    %p71 = por %p69, %p70
    %p72 = scmp.ne.s32.totalorder %s64, %s66
    %p73 = scmp.eq.s32.totalorder %s14, 3
    %p74 = por %p72, %p73
    %p75 = scmp.ne.s32.totalorder %s66, %s67
    %p76 = scmp.eq.s32.totalorder %s14, 0
    %p77 = por %p75, %p76
    %p78 = scmp.ne.s32.totalorder %s66, %s67
    %p79 = scmp.eq.s32.totalorder %s15, 3
    %p80 = por %p78, %p79
    %p82 = scmp.ne.s32.totalorder %s67, %s81
    %p83 = scmp.eq.s32.totalorder %s15, 0
    %p84 = por %p82, %p83
    %s85 = ssub.s32 %s9, %s16
    %p86 = scmp.eq.s32.totalorder %s85, 0
    %s88 = sadd.s32 %s87, 1
    %s89 = scalar_select %p86, %s87, %s88
    %p92 = pneg %p86
    %p93 = scmp.eq.s32.totalorder %s9, 3
    %p94 = por %p92, %p93
    %p95 = scmp.ne.s32.totalorder %s87, %s90
    %p96 = scmp.eq.s32.totalorder %s9, 0
    %p97 = por %p95, %p96
    %p98 = scmp.ne.s32.totalorder %s87, %s90
    %p99 = scmp.eq.s32.totalorder %s14, 3
    %p100 = por %p98, %p99
    %p101 = scmp.ne.s32.totalorder %s90, %s91
    %p102 = scmp.eq.s32.totalorder %s14, 0
    %p103 = por %p101, %p102
    %p104 = scmp.ne.s32.totalorder %s90, %s91
    %p105 = scmp.eq.s32.totalorder %s15, 3
    %p106 = por %p104, %p105
    %p108 = scmp.ne.s32.totalorder %s91, %s107
    %p109 = scmp.eq.s32.totalorder %s15, 0
    %p110 = por %p108, %p109
    %p111 = scmp.le.s32.totalorder 1, %s9
    %p112 = scmp.lt.s32.totalorder %s9, 5
    %p113 = pnand %p111, %p112
    %p114 = pneg %p113
    // Predicated region
    $region9: #{generator_forward.24} parent=5 // pred_check
      _
    $region10: #{generator_forward.24} parent=5 // pred_check_branch
      %116 = sbr.rel (%p113) target = $region12
    $region11: #{generator_forward.24} parent=5 // pred_region
      %s117 = ssub.s32 %s9, 1
      // Predicated region
      $region13: #{generator_forward.24} parent=11 // pred_check
        %p118 = pneg %p56
      $region14: #{generator_forward.24} parent=11 // pred_check_branch
        %120 = sbr.rel (%p118) target = $region16
      $region15: #{generator_forward.24} parent=11 // pred_region
        _
      $region16: #{generator_forward.24} parent=11 // pred_fallthru
        _
      // Predicated region
      $region17: #{generator_forward.24} parent=11 // pred_check
        %p121 = pneg %p77
      $region18: #{generator_forward.24} parent=11 // pred_check_branch
        %123 = sbr.rel (%p121) target = $region20
      $region19: #{generator_forward.24} parent=11 // pred_region
        _
      $region20: #{generator_forward.24} parent=11 // pred_fallthru
        _
    $region12: #{generator_forward.24} parent=5 // pred_fallthru
      _
    %p124 = scmp.lt.s32.totalorder %s9, 4
    // Predicated region
    $region21: #{generator_forward.24} parent=5 // pred_check
      %p125 = pneg %p124
    $region22: #{generator_forward.24} parent=5 // pred_check_branch
      %127 = sbr.rel (%p125) target = $region24
    $region23: #{generator_forward.24} parent=5 // pred_region
      // Predicated region
      $region25: #{generator_forward.24} parent=23 // pred_check
        %p128 = pneg %p29
      $region26: #{generator_forward.24} parent=23 // pred_check_branch
        %130 = sbr.rel (%p128) target = $region28
      $region27: #{generator_forward.24} parent=23 // pred_region
        %s131 = smul.u32 64, %s9
        %p132 = scmp.lt.s32.totalorder %s131, 255
        %s133 = scalar_select %p132, %s131, 255
        %s134 = smul.addr %s133, 8
        %s135 = scalar_lea.vmem %s0, %s134
        %s136 = smul.u32 64, %s9
      $region28: #{generator_forward.24} parent=23 // pred_fallthru
        _
    $region24: #{generator_forward.24} parent=5 // pred_fallthru
      _
    %p137 = scmp.le.s32.totalorder 1, %s9
    %p138 = scmp.lt.s32.totalorder %s9, 5
    %p139 = pnand %p137, %p138
    %p140 = pneg %p139
    // Predicated region
    $region29: #{generator_forward.24} parent=5 // pred_check
      _
    $region30: #{generator_forward.24} parent=5 // pred_check_branch
      %142 = sbr.rel (%p139) target = $region32
    $region31: #{generator_forward.24} parent=5 // pred_region
      %s143 = ssub.s32 %s9, 1
      %s144 = smul.u32 64, %s14
      %p145 = scmp.lt.s32.totalorder %s144, 255
      %s146 = scalar_select %p145, %s144, 255
      %s147 = smul.addr %s146, 8
      %s148 = scalar_lea.vmem %s0, %s147
      %p149 = pneg %p35
      %p150 = pneg %p32
      %p151 = pneg %p56
      %p152 = pneg %p53
      %p153 = pneg %p77
      %p154 = pneg %p74
      %p155 = pneg %p103
      %p156 = pneg %p100
      %s157 = smul.u32 64, %s14
      %p158 = scmp.lt.s32.totalorder %s157, 255
      %s159 = scalar_select %p158, %s157, 255
      %s160 = smul.addr %s159, 8
      %s161 = scalar_lea.vmem %s3, %s160
      %s162 = smul.u32 64, %s14
      %p163 = scmp.lt.s32.totalorder %s162, 255
      %s164 = scalar_select %p163, %s162, 255
      %s165 = smul.addr %s164, 8
      %s166 = scalar_lea.vmem %s0, %s165
      %s167 = smul.u32 64, %s14
      %s168 = smul.u32 64, %s14
      %p169 = scmp.lt.s32.totalorder %s168, 255
      %s170 = scalar_select %p169, %s168, 255
      %s171 = smul.addr %s170, 8
      %s172 = scalar_lea.vmem %s3, %s171
      %s173 = smul.u32 64, %s14
      %v174 = vld [vmem:[%s166] sm:$0xff]
      %v175 = vld [vmem:[%s166 + $0x8] sm:$0xff]
      %v176 = vld [vmem:[%s166 + $0x10] sm:$0xff]
      %v177 = vld [vmem:[%s166 + $0x18] sm:$0xff]
      %v178 = vld [vmem:[%s166 + $0x20] sm:$0xff]
      %v179 = vld [vmem:[%s166 + $0x28] sm:$0xff]
      %v180 = vld [vmem:[%s166 + $0x30] sm:$0xff]
      %v181 = vld [vmem:[%s166 + $0x38] sm:$0xff]
      %v182 = vld [vmem:[%s166 + $0x40] sm:$0xff]
      %v183 = vld [vmem:[%s166 + $0x48] sm:$0xff]
      %v184 = vld [vmem:[%s166 + $0x50] sm:$0xff]
      %v185 = vld [vmem:[%s166 + $0x58] sm:$0xff]
      %v186 = vld [vmem:[%s166 + $0x60] sm:$0xff]
      %v187 = vld [vmem:[%s166 + $0x68] sm:$0xff]
      %v188 = vld [vmem:[%s166 + $0x70] sm:$0xff]
      %v189 = vld [vmem:[%s166 + $0x78] sm:$0xff]
      %v190 = vld [vmem:[%s166 + $0x80] sm:$0xff]
      %v191 = vld [vmem:[%s166 + $0x88] sm:$0xff]
      %v192 = vld [vmem:[%s166 + $0x90] sm:$0xff]
      %v193 = vld [vmem:[%s166 + $0x98] sm:$0xff]
      %v194 = vld [vmem:[%s166 + $0xa0] sm:$0xff]
      %v195 = vld [vmem:[%s166 + $0xa8] sm:$0xff]
      %v196 = vld [vmem:[%s166 + $0xb0] sm:$0xff]
      %v197 = vld [vmem:[%s166 + $0xb8] sm:$0xff]
      %v198 = vld [vmem:[%s166 + $0xc0] sm:$0xff]
      %v199 = vld [vmem:[%s166 + $0xc8] sm:$0xff]
      %v200 = vld [vmem:[%s166 + $0xd0] sm:$0xff]
      %v201 = vld [vmem:[%s166 + $0xd8] sm:$0xff]
      %v202 = vld [vmem:[%s166 + $0xe0] sm:$0xff]
      %v203 = vld [vmem:[%s166 + $0xe8] sm:$0xff]
      %v204 = vld [vmem:[%s166 + $0xf0] sm:$0xff]
      %v205 = vld [vmem:[%s166 + $0xf8] sm:$0xff]
      %v206 = vld [vmem:[%s166 + $0x100] sm:$0xff]
      %v207 = vld [vmem:[%s166 + $0x108] sm:$0xff]
      %v208 = vld [vmem:[%s166 + $0x110] sm:$0xff]
      %v209 = vld [vmem:[%s166 + $0x118] sm:$0xff]
      %v210 = vld [vmem:[%s166 + $0x120] sm:$0xff]
      %v211 = vld [vmem:[%s166 + $0x128] sm:$0xff]
      %v212 = vld [vmem:[%s166 + $0x130] sm:$0xff]
      %v213 = vld [vmem:[%s166 + $0x138] sm:$0xff]
      %v214 = vld [vmem:[%s166 + $0x140] sm:$0xff]
      %v215 = vld [vmem:[%s166 + $0x148] sm:$0xff]
      %v216 = vld [vmem:[%s166 + $0x150] sm:$0xff]
      %v217 = vld [vmem:[%s166 + $0x158] sm:$0xff]
      %v218 = vld [vmem:[%s166 + $0x160] sm:$0xff]
      %v219 = vld [vmem:[%s166 + $0x168] sm:$0xff]
      %v220 = vld [vmem:[%s166 + $0x170] sm:$0xff]
      %v221 = vld [vmem:[%s166 + $0x178] sm:$0xff]
      %v222 = vld [vmem:[%s166 + $0x180] sm:$0xff]
      %v223 = vld [vmem:[%s166 + $0x188] sm:$0xff]
      %v224 = vld [vmem:[%s166 + $0x190] sm:$0xff]
      %v225 = vld [vmem:[%s166 + $0x198] sm:$0xff]
      %v226 = vld [vmem:[%s166 + $0x1a0] sm:$0xff]
      %v227 = vld [vmem:[%s166 + $0x1a8] sm:$0xff]
      %v228 = vld [vmem:[%s166 + $0x1b0] sm:$0xff]
      %v229 = vld [vmem:[%s166 + $0x1b8] sm:$0xff]
      %v230 = vld [vmem:[%s166 + $0x1c0] sm:$0xff]
      %v231 = vld [vmem:[%s166 + $0x1c8] sm:$0xff]
      %v232 = vld [vmem:[%s166 + $0x1d0] sm:$0xff]
      %v233 = vld [vmem:[%s166 + $0x1d8] sm:$0xff]
      %v234 = vld [vmem:[%s166 + $0x1e0] sm:$0xff]
      %v235 = vld [vmem:[%s166 + $0x1e8] sm:$0xff]
      %v236 = vld [vmem:[%s166 + $0x1f0] sm:$0xff]
      %v237 = vld [vmem:[%s166 + $0x1f8] sm:$0xff]
      %v238 = vld [vmem:[%s1] sm:$0x1]
      %v240 = vlaneseq
      %v241 = vshrl.u32 %v240, 7
      %v242 = vsub.s32 0, %v241
      %v243 = vrot.slane %v238, %v242
      %v245 = vmul.f32 %v174, %v243
      %v246 = vmul.f32 %v175, %v243
      %v247 = vmul.f32 %v176, %v243
      %v248 = vmul.f32 %v177, %v243
      %v249 = vmul.f32 %v178, %v243
      %v250 = vmul.f32 %v179, %v243
      %v251 = vmul.f32 %v180, %v243
      %v252 = vmul.f32 %v181, %v243
      %v253 = vmul.f32 %v182, %v243
      %v254 = vmul.f32 %v183, %v243
      %v255 = vmul.f32 %v184, %v243
      %v256 = vmul.f32 %v185, %v243
      %v257 = vmul.f32 %v186, %v243
      %v258 = vmul.f32 %v187, %v243
      %v259 = vmul.f32 %v188, %v243
      %v260 = vmul.f32 %v189, %v243
      %v261 = vmul.f32 %v190, %v243
      %v262 = vmul.f32 %v191, %v243
      %v263 = vmul.f32 %v192, %v243
      %v264 = vmul.f32 %v193, %v243
      %v265 = vmul.f32 %v194, %v243
      %v266 = vmul.f32 %v195, %v243
      %v267 = vmul.f32 %v196, %v243
      %v268 = vmul.f32 %v197, %v243
      %v269 = vmul.f32 %v198, %v243
      %v270 = vmul.f32 %v199, %v243
      %v271 = vmul.f32 %v200, %v243
      %v272 = vmul.f32 %v201, %v243
      %v273 = vmul.f32 %v202, %v243
      %v274 = vmul.f32 %v203, %v243
      %v275 = vmul.f32 %v204, %v243
      %v276 = vmul.f32 %v205, %v243
      %v277 = vmul.f32 %v206, %v243
      %v278 = vmul.f32 %v207, %v243
      %v279 = vmul.f32 %v208, %v243
      %v280 = vmul.f32 %v209, %v243
      %v281 = vmul.f32 %v210, %v243
      %v282 = vmul.f32 %v211, %v243
      %v283 = vmul.f32 %v212, %v243
      %v284 = vmul.f32 %v213, %v243
      %v285 = vmul.f32 %v214, %v243
      %v286 = vmul.f32 %v215, %v243
      %v287 = vmul.f32 %v216, %v243
      %v288 = vmul.f32 %v217, %v243
      %v289 = vmul.f32 %v218, %v243
      %v290 = vmul.f32 %v219, %v243
      %v291 = vmul.f32 %v220, %v243
      %v292 = vmul.f32 %v221, %v243
      %v293 = vmul.f32 %v222, %v243
      %v294 = vmul.f32 %v223, %v243
      %v295 = vmul.f32 %v224, %v243
      %v296 = vmul.f32 %v225, %v243
      %v297 = vmul.f32 %v226, %v243
      %v298 = vmul.f32 %v227, %v243
      %v299 = vmul.f32 %v228, %v243
      %v300 = vmul.f32 %v229, %v243
      %v301 = vmul.f32 %v230, %v243
      %v302 = vmul.f32 %v231, %v243
      %v303 = vmul.f32 %v232, %v243
      %v304 = vmul.f32 %v233, %v243
      %v305 = vmul.f32 %v234, %v243
      %v306 = vmul.f32 %v235, %v243
      %v307 = vmul.f32 %v236, %v243
      %v308 = vmul.f32 %v237, %v243
      %v309 = vld [vmem:[%s2] sm:$0x1]
      %v311 = vlaneseq
      %v312 = vshrl.u32 %v311, 7
      %v313 = vsub.s32 0, %v312
      %v314 = vrot.slane %v309, %v313
      %v316 = vadd.f32 %v245, %v314
      %v317 = vadd.f32 %v246, %v314
      %v318 = vadd.f32 %v247, %v314
      %v319 = vadd.f32 %v248, %v314
      %v320 = vadd.f32 %v249, %v314
      %v321 = vadd.f32 %v250, %v314
      %v322 = vadd.f32 %v251, %v314
      %v323 = vadd.f32 %v252, %v314
      %v324 = vadd.f32 %v253, %v314
      %v325 = vadd.f32 %v254, %v314
      %v326 = vadd.f32 %v255, %v314
      %v327 = vadd.f32 %v256, %v314
      %v328 = vadd.f32 %v257, %v314
      %v329 = vadd.f32 %v258, %v314
      %v330 = vadd.f32 %v259, %v314
      %v331 = vadd.f32 %v260, %v314
      %v332 = vadd.f32 %v261, %v314
      %v333 = vadd.f32 %v262, %v314
      %v334 = vadd.f32 %v263, %v314
      %v335 = vadd.f32 %v264, %v314
      %v336 = vadd.f32 %v265, %v314
      %v337 = vadd.f32 %v266, %v314
      %v338 = vadd.f32 %v267, %v314
      %v339 = vadd.f32 %v268, %v314
      %v340 = vadd.f32 %v269, %v314
      %v341 = vadd.f32 %v270, %v314
      %v342 = vadd.f32 %v271, %v314
      %v343 = vadd.f32 %v272, %v314
      %v344 = vadd.f32 %v273, %v314
      %v345 = vadd.f32 %v274, %v314
      %v346 = vadd.f32 %v275, %v314
      %v347 = vadd.f32 %v276, %v314
      %v348 = vadd.f32 %v277, %v314
      %v349 = vadd.f32 %v278, %v314
      %v350 = vadd.f32 %v279, %v314
      %v351 = vadd.f32 %v280, %v314
      %v352 = vadd.f32 %v281, %v314
      %v353 = vadd.f32 %v282, %v314
      %v354 = vadd.f32 %v283, %v314
      %v355 = vadd.f32 %v284, %v314
      %v356 = vadd.f32 %v285, %v314
      %v357 = vadd.f32 %v286, %v314
      %v358 = vadd.f32 %v287, %v314
      %v359 = vadd.f32 %v288, %v314
      %v360 = vadd.f32 %v289, %v314
      %v361 = vadd.f32 %v290, %v314
      %v362 = vadd.f32 %v291, %v314
      %v363 = vadd.f32 %v292, %v314
      %v364 = vadd.f32 %v293, %v314
      %v365 = vadd.f32 %v294, %v314
      %v366 = vadd.f32 %v295, %v314
      %v367 = vadd.f32 %v296, %v314
      %v368 = vadd.f32 %v297, %v314
      %v369 = vadd.f32 %v298, %v314
      %v370 = vadd.f32 %v299, %v314
      %v371 = vadd.f32 %v300, %v314
      %v372 = vadd.f32 %v301, %v314
      %v373 = vadd.f32 %v302, %v314
      %v374 = vadd.f32 %v303, %v314
      %v375 = vadd.f32 %v304, %v314
      %v376 = vadd.f32 %v305, %v314
      %v377 = vadd.f32 %v306, %v314
      %v378 = vadd.f32 %v307, %v314
      %v379 = vadd.f32 %v308, %v314
      %v380 = vmax.f32 %v316, 0.0
      %v381 = vmax.f32 %v317, 0.0
      %v382 = vmax.f32 %v318, 0.0
      %v383 = vmax.f32 %v319, 0.0
      %v384 = vmax.f32 %v320, 0.0
      %v385 = vmax.f32 %v321, 0.0
      %v386 = vmax.f32 %v322, 0.0
      %v387 = vmax.f32 %v323, 0.0
      %v388 = vmax.f32 %v324, 0.0
      %v389 = vmax.f32 %v325, 0.0
      %v390 = vmax.f32 %v326, 0.0
      %v391 = vmax.f32 %v327, 0.0
      %v392 = vmax.f32 %v328, 0.0
      %v393 = vmax.f32 %v329, 0.0
      %v394 = vmax.f32 %v330, 0.0
      %v395 = vmax.f32 %v331, 0.0
      %v396 = vmax.f32 %v332, 0.0
      %v397 = vmax.f32 %v333, 0.0
      %v398 = vmax.f32 %v334, 0.0
      %v399 = vmax.f32 %v335, 0.0
      %v400 = vmax.f32 %v336, 0.0
      %v401 = vmax.f32 %v337, 0.0
      %v402 = vmax.f32 %v338, 0.0
      %v403 = vmax.f32 %v339, 0.0
      %v404 = vmax.f32 %v340, 0.0
      %v405 = vmax.f32 %v341, 0.0
      %v406 = vmax.f32 %v342, 0.0
      %v407 = vmax.f32 %v343, 0.0
      %v408 = vmax.f32 %v344, 0.0
      %v409 = vmax.f32 %v345, 0.0
      %v410 = vmax.f32 %v346, 0.0
      %v411 = vmax.f32 %v347, 0.0
      %v412 = vmax.f32 %v348, 0.0
      %v413 = vmax.f32 %v349, 0.0
      %v414 = vmax.f32 %v350, 0.0
      %v415 = vmax.f32 %v351, 0.0
      %v416 = vmax.f32 %v352, 0.0
      %v417 = vmax.f32 %v353, 0.0
      %v418 = vmax.f32 %v354, 0.0
      %v419 = vmax.f32 %v355, 0.0
      %v420 = vmax.f32 %v356, 0.0
      %v421 = vmax.f32 %v357, 0.0
      %v422 = vmax.f32 %v358, 0.0
      %v423 = vmax.f32 %v359, 0.0
      %v424 = vmax.f32 %v360, 0.0
      %v425 = vmax.f32 %v361, 0.0
      %v426 = vmax.f32 %v362, 0.0
      %v427 = vmax.f32 %v363, 0.0
      %v428 = vmax.f32 %v364, 0.0
      %v429 = vmax.f32 %v365, 0.0
      %v430 = vmax.f32 %v366, 0.0
      %v431 = vmax.f32 %v367, 0.0
      %v432 = vmax.f32 %v368, 0.0
      %v433 = vmax.f32 %v369, 0.0
      %v434 = vmax.f32 %v370, 0.0
      %v435 = vmax.f32 %v371, 0.0
      %v436 = vmax.f32 %v372, 0.0
      %v437 = vmax.f32 %v373, 0.0
      %v438 = vmax.f32 %v374, 0.0
      %v439 = vmax.f32 %v375, 0.0
      %v440 = vmax.f32 %v376, 0.0
      %v441 = vmax.f32 %v377, 0.0
      %v442 = vmax.f32 %v378, 0.0
      %v443 = vmax.f32 %v379, 0.0
      %vm444 = vcmask 64512
      %445 = vst.msk [vmem:[%s172] sm:$0xff] %vm444, %v380
      %446 = vst.msk [vmem:[%s172 + $0x8] sm:$0xff] %vm444, %v381
      %447 = vst.msk [vmem:[%s172 + $0x10] sm:$0xff] %vm444, %v382
      %448 = vst.msk [vmem:[%s172 + $0x18] sm:$0xff] %vm444, %v383
      %449 = vst.msk [vmem:[%s172 + $0x20] sm:$0xff] %vm444, %v384
      %450 = vst.msk [vmem:[%s172 + $0x28] sm:$0xff] %vm444, %v385
      %451 = vst.msk [vmem:[%s172 + $0x30] sm:$0xff] %vm444, %v386
      %452 = vst.msk [vmem:[%s172 + $0x38] sm:$0xff] %vm444, %v387
      %453 = vst.msk [vmem:[%s172 + $0x40] sm:$0xff] %vm444, %v388
      %454 = vst.msk [vmem:[%s172 + $0x48] sm:$0xff] %vm444, %v389
      %455 = vst.msk [vmem:[%s172 + $0x50] sm:$0xff] %vm444, %v390
      %456 = vst.msk [vmem:[%s172 + $0x58] sm:$0xff] %vm444, %v391
      %457 = vst.msk [vmem:[%s172 + $0x60] sm:$0xff] %vm444, %v392
      %458 = vst.msk [vmem:[%s172 + $0x68] sm:$0xff] %vm444, %v393
      %459 = vst.msk [vmem:[%s172 + $0x70] sm:$0xff] %vm444, %v394
      %460 = vst.msk [vmem:[%s172 + $0x78] sm:$0xff] %vm444, %v395
      %461 = vst.msk [vmem:[%s172 + $0x80] sm:$0xff] %vm444, %v396
      %462 = vst.msk [vmem:[%s172 + $0x88] sm:$0xff] %vm444, %v397
      %463 = vst.msk [vmem:[%s172 + $0x90] sm:$0xff] %vm444, %v398
      %464 = vst.msk [vmem:[%s172 + $0x98] sm:$0xff] %vm444, %v399
      %465 = vst.msk [vmem:[%s172 + $0xa0] sm:$0xff] %vm444, %v400
      %466 = vst.msk [vmem:[%s172 + $0xa8] sm:$0xff] %vm444, %v401
      %467 = vst.msk [vmem:[%s172 + $0xb0] sm:$0xff] %vm444, %v402
      %468 = vst.msk [vmem:[%s172 + $0xb8] sm:$0xff] %vm444, %v403
      %469 = vst.msk [vmem:[%s172 + $0xc0] sm:$0xff] %vm444, %v404
      %470 = vst.msk [vmem:[%s172 + $0xc8] sm:$0xff] %vm444, %v405
      %471 = vst.msk [vmem:[%s172 + $0xd0] sm:$0xff] %vm444, %v406
      %472 = vst.msk [vmem:[%s172 + $0xd8] sm:$0xff] %vm444, %v407
      %473 = vst.msk [vmem:[%s172 + $0xe0] sm:$0xff] %vm444, %v408
      %474 = vst.msk [vmem:[%s172 + $0xe8] sm:$0xff] %vm444, %v409
      %475 = vst.msk [vmem:[%s172 + $0xf0] sm:$0xff] %vm444, %v410
      %476 = vst.msk [vmem:[%s172 + $0xf8] sm:$0xff] %vm444, %v411
      %477 = vst.msk [vmem:[%s172 + $0x100] sm:$0xff] %vm444, %v412
      %478 = vst.msk [vmem:[%s172 + $0x108] sm:$0xff] %vm444, %v413
      %479 = vst.msk [vmem:[%s172 + $0x110] sm:$0xff] %vm444, %v414
      %480 = vst.msk [vmem:[%s172 + $0x118] sm:$0xff] %vm444, %v415
      %481 = vst.msk [vmem:[%s172 + $0x120] sm:$0xff] %vm444, %v416
      %482 = vst.msk [vmem:[%s172 + $0x128] sm:$0xff] %vm444, %v417
      %483 = vst.msk [vmem:[%s172 + $0x130] sm:$0xff] %vm444, %v418
      %484 = vst.msk [vmem:[%s172 + $0x138] sm:$0xff] %vm444, %v419
      %485 = vst.msk [vmem:[%s172 + $0x140] sm:$0xff] %vm444, %v420
      %486 = vst.msk [vmem:[%s172 + $0x148] sm:$0xff] %vm444, %v421
      %487 = vst.msk [vmem:[%s172 + $0x150] sm:$0xff] %vm444, %v422
      %488 = vst.msk [vmem:[%s172 + $0x158] sm:$0xff] %vm444, %v423
      %489 = vst.msk [vmem:[%s172 + $0x160] sm:$0xff] %vm444, %v424
      %490 = vst.msk [vmem:[%s172 + $0x168] sm:$0xff] %vm444, %v425
      %491 = vst.msk [vmem:[%s172 + $0x170] sm:$0xff] %vm444, %v426
      %492 = vst.msk [vmem:[%s172 + $0x178] sm:$0xff] %vm444, %v427
      %493 = vst.msk [vmem:[%s172 + $0x180] sm:$0xff] %vm444, %v428
      %494 = vst.msk [vmem:[%s172 + $0x188] sm:$0xff] %vm444, %v429
      %495 = vst.msk [vmem:[%s172 + $0x190] sm:$0xff] %vm444, %v430
      %496 = vst.msk [vmem:[%s172 + $0x198] sm:$0xff] %vm444, %v431
      %497 = vst.msk [vmem:[%s172 + $0x1a0] sm:$0xff] %vm444, %v432
      %498 = vst.msk [vmem:[%s172 + $0x1a8] sm:$0xff] %vm444, %v433
      %499 = vst.msk [vmem:[%s172 + $0x1b0] sm:$0xff] %vm444, %v434
      %500 = vst.msk [vmem:[%s172 + $0x1b8] sm:$0xff] %vm444, %v435
      %501 = vst.msk [vmem:[%s172 + $0x1c0] sm:$0xff] %vm444, %v436
      %502 = vst.msk [vmem:[%s172 + $0x1c8] sm:$0xff] %vm444, %v437
      %503 = vst.msk [vmem:[%s172 + $0x1d0] sm:$0xff] %vm444, %v438
      %504 = vst.msk [vmem:[%s172 + $0x1d8] sm:$0xff] %vm444, %v439
      %505 = vst.msk [vmem:[%s172 + $0x1e0] sm:$0xff] %vm444, %v440
      %506 = vst.msk [vmem:[%s172 + $0x1e8] sm:$0xff] %vm444, %v441
      %507 = vst.msk [vmem:[%s172 + $0x1f0] sm:$0xff] %vm444, %v442
      %508 = vst.msk [vmem:[%s172 + $0x1f8] sm:$0xff] %vm444, %v443
      %s509 = smul.u32 64, %s14
      %p510 = scmp.lt.s32.totalorder %s509, 255
      %s511 = scalar_select %p510, %s509, 255
      %s512 = smul.addr %s511, 8
      %s513 = scalar_lea.vmem %s3, %s512
      // Predicated region
      $region33: #{generator_forward.24} parent=31 // pred_check
        %p514 = pneg %p100
      $region34: #{generator_forward.24} parent=31 // pred_check_branch
        %516 = sbr.rel (%p514) target = $region36
      $region35: #{generator_forward.24} parent=31 // pred_region
        %s517 = smul.u32 64, %s14
      $region36: #{generator_forward.24} parent=31 // pred_fallthru
        _
    $region32: #{generator_forward.24} parent=5 // pred_fallthru
      _
    %p518 = scmp.le.s32.totalorder 2, %s9
    // Predicated region
    $region37: #{generator_forward.24} parent=5 // pred_check
      %p519 = pneg %p518
    $region38: #{generator_forward.24} parent=5 // pred_check_branch
      %521 = sbr.rel (%p519) target = $region40
    $region39: #{generator_forward.24} parent=5 // pred_region
      %s522 = ssub.s32 %s9, 2
      // Predicated region
      $region41: #{generator_forward.24} parent=39 // pred_check
        %p523 = pneg %p106
      $region42: #{generator_forward.24} parent=39 // pred_check_branch
        %525 = sbr.rel (%p523) target = $region44
      $region43: #{generator_forward.24} parent=39 // pred_region
        %s526 = smul.u32 64, %s15
        %p527 = scmp.lt.s32.totalorder %s526, 255
        %s528 = scalar_select %p527, %s526, 255
        %s529 = smul.addr %s528, 8
        %s530 = scalar_lea.vmem %s3, %s529
      $region44: #{generator_forward.24} parent=39 // pred_fallthru
        _
    $region40: #{generator_forward.24} parent=5 // pred_fallthru
      _
  $region6: #{generator_forward.24} parent=0 // loop_footer
    %s13 = sadd.s32 1, %s9
  $region7: #{generator_forward.24} parent=0 // loop_footer_branch
    %8 = sbr.rel target = $region3
  $region8: #{generator_forward.24} parent=0 // loop_exit
    _

// kernel: generator_forward.23
$region0: #{generator_forward.23}
  #allocation0 [shape = 'u32[]', space=smem, size = 0x4, offset = 0x4, fixed_abs, tag = 'smem constant byte address 0x4 - core index']
  #allocation1 [shape = 'u32[144,128]{1,0:T(1,128)}', space=vmem, size = 0x12000, scoped, tag = 'internal scratch']
  %s0 = inlined_call_operand.vmem [shape: f32[2048,8], index: 0, kind: input, shape index: {}]
  %s1 = inlined_call_operand.vmem [shape: f32[1,8], index: 1, kind: output, shape index: {0}]
  %s2 = inlined_call_operand.vmem [shape: f32[1,8], index: 2, kind: output, shape index: {1}]
  %3 = xla_tuple %s1, %s2
  %s4 = sld [smem:[#allocation0]]
  $region49: #{generator_forward.23} parent=0
    _
  %s6 = ssub.s32 1, %s4
  %s7 = scalar_select 0, %s6, %s4
  loop: start=0, step=1, limit=6
  $region2: #{generator_forward.23} parent=0 // loop_pre_header
    _
  $region3: #{generator_forward.23} parent=0 // loop_header
    %s9 = sphi 0, %s13
    %p10 = scmp.ge.s32.totalorder %s9, 6
    %s19 = sphi 0, %s21
    %s22 = sphi 0, %s19
    %s23 = sphi 0, %s22
    %s39 = sphi 0, %s23
    %s43 = sphi 0, %s43
    %s45 = sphi 0, %s43
    %s46 = sphi 0, %s45
    %s60 = sphi 0, %s46
    %s64 = sphi 0, %s64
    %s66 = sphi 0, %s64
    %s67 = sphi 0, %s66
    %s81 = sphi 0, %s67
  $region4: #{generator_forward.23} parent=0 // loop_header_branch
    %12 = sbr.rel (%p10) target = $region8
  $region5: #{generator_forward.23} parent=0 // loop_body
    %s14 = ssub.s32 %s9, 1
    %s15 = ssub.s32 %s9, 2
    %s16 = sadd.s32 %s9, 1
    %s17 = ssub.s32 %s9, %s16
    %p18 = scmp.eq.s32.totalorder %s17, 0
    %s20 = sadd.s32 %s19, 1
    %s21 = scalar_select %p18, %s19, %s20
    %p24 = pneg %p18
    %p25 = scmp.eq.s32.totalorder %s9, 3
    %p26 = por %p24, %p25
    %p27 = scmp.ne.s32.totalorder %s19, %s22
    %p28 = scmp.eq.s32.totalorder %s9, 0
    %p29 = por %p27, %p28
    %p30 = scmp.ne.s32.totalorder %s19, %s22
    %p31 = scmp.eq.s32.totalorder %s14, 3
    %p32 = por %p30, %p31
    %p33 = scmp.ne.s32.totalorder %s22, %s23
    %p34 = scmp.eq.s32.totalorder %s14, 0
    %p35 = por %p33, %p34
    %p36 = scmp.ne.s32.totalorder %s22, %s23
    %p37 = scmp.eq.s32.totalorder %s15, 3
    %p38 = por %p36, %p37
    %p40 = scmp.ne.s32.totalorder %s23, %s39
    %p41 = scmp.eq.s32.totalorder %s15, 0
    %p42 = por %p40, %p41
    %s44 = sadd.s32 %s43, 1
    %p47 = scmp.eq.s32.totalorder %s9, 3
    %p48 = scmp.ne.s32.totalorder %s43, %s45
    %p49 = scmp.eq.s32.totalorder %s9, 0
    %p50 = por %p48, %p49
    %p51 = scmp.ne.s32.totalorder %s43, %s45
    %p52 = scmp.eq.s32.totalorder %s14, 3
    %p53 = por %p51, %p52
    %p54 = scmp.ne.s32.totalorder %s45, %s46
    %p55 = scmp.eq.s32.totalorder %s14, 0
    %p56 = por %p54, %p55
    %p57 = scmp.ne.s32.totalorder %s45, %s46
    %p58 = scmp.eq.s32.totalorder %s15, 3
    %p59 = por %p57, %p58
    %p61 = scmp.ne.s32.totalorder %s46, %s60
    %p62 = scmp.eq.s32.totalorder %s15, 0
    %p63 = por %p61, %p62
    %s65 = sadd.s32 %s64, 1
    %p68 = scmp.eq.s32.totalorder %s9, 3
    %p69 = scmp.ne.s32.totalorder %s64, %s66
    %p70 = scmp.eq.s32.totalorder %s9, 0
    %p71 = por %p69, %p70
    %p72 = scmp.ne.s32.totalorder %s64, %s66
    %p73 = scmp.eq.s32.totalorder %s14, 3
    %p74 = por %p72, %p73
    %p75 = scmp.ne.s32.totalorder %s66, %s67
    %p76 = scmp.eq.s32.totalorder %s14, 0
    %p77 = por %p75, %p76
    %p78 = scmp.ne.s32.totalorder %s66, %s67
    %p79 = scmp.eq.s32.totalorder %s15, 3
    %p80 = por %p78, %p79
    %p82 = scmp.ne.s32.totalorder %s67, %s81
    %p83 = scmp.eq.s32.totalorder %s15, 0
    %p84 = por %p82, %p83
    %p85 = scmp.le.s32.totalorder 1, %s9
    %p86 = scmp.lt.s32.totalorder %s9, 5
    %p87 = pnand %p85, %p86
    %p88 = pneg %p87
    // Predicated region
    $region9: #{generator_forward.23} parent=5 // pred_check
      _
    $region10: #{generator_forward.23} parent=5 // pred_check_branch
      %90 = sbr.rel (%p87) target = $region12
    $region11: #{generator_forward.23} parent=5 // pred_region
      %s91 = ssub.s32 %s9, 1
    $region12: #{generator_forward.23} parent=5 // pred_fallthru
      _
    %p92 = scmp.lt.s32.totalorder %s9, 4
    // Predicated region
    $region13: #{generator_forward.23} parent=5 // pred_check
      %p93 = pneg %p92
    $region14: #{generator_forward.23} parent=5 // pred_check_branch
      %95 = sbr.rel (%p93) target = $region16
    $region15: #{generator_forward.23} parent=5 // pred_region
      // Predicated region
      $region17: #{generator_forward.23} parent=15 // pred_check
        %p96 = pneg %p29
      $region18: #{generator_forward.23} parent=15 // pred_check_branch
        %98 = sbr.rel (%p96) target = $region20
      $region19: #{generator_forward.23} parent=15 // pred_region
        %s99 = smul.u32 64, %s9
        %p100 = scmp.lt.s32.totalorder %s99, 255
        %s101 = scalar_select %p100, %s99, 255
        %s102 = smul.addr %s101, 8
        %s103 = scalar_lea.vmem %s0, %s102
        %s104 = smul.u32 64, %s9
      $region20: #{generator_forward.23} parent=15 // pred_fallthru
        _
    $region16: #{generator_forward.23} parent=5 // pred_fallthru
      _
    %p105 = scmp.le.s32.totalorder 1, %s9
    %p106 = scmp.lt.s32.totalorder %s9, 5
    %p107 = pnand %p105, %p106
    %p108 = pneg %p107
    // Predicated region
    $region21: #{generator_forward.23} parent=5 // pred_check
      _
    $region22: #{generator_forward.23} parent=5 // pred_check_branch
      %110 = sbr.rel (%p107) target = $region24
    $region23: #{generator_forward.23} parent=5 // pred_region
      %s111 = ssub.s32 %s9, 1
      %s112 = smul.u32 64, %s14
      %p113 = scmp.lt.s32.totalorder %s112, 255
      %s114 = scalar_select %p113, %s112, 255
      %s115 = smul.addr %s114, 8
      %s116 = scalar_lea.vmem %s0, %s115
      %p117 = pneg %p35
      %p118 = pneg %p32
      %p119 = pneg %p56
      %p120 = pneg %p53
      %p121 = pneg %p77
      %p122 = pneg %p74
      %s123 = smul.u32 64, %s14
      %p124 = scmp.lt.s32.totalorder %s123, 255
      %s125 = scalar_select %p124, %s123, 255
      %s126 = smul.addr %s125, 8
      %s127 = scalar_lea.vmem %s0, %s126
      %s128 = smul.u32 64, %s14
      %p129 = scmp.eq.s32.totalorder %s14, 0
      // Predicated region
      $region25: #{generator_forward.23} parent=23 // pred_check
        %p130 = pneg %p129
      $region26: #{generator_forward.23} parent=23 // pred_check_branch
        %132 = sbr.rel (%p130) target = $region28
      $region27: #{generator_forward.23} parent=23 // pred_region
        %vm133 = vcmask 57344
        %134 = vst.msk [vmem:[%s1] sm:$0x1] %vm133, 0.0
        %135 = vst.msk [vmem:[%s2] sm:$0x1] %vm133, 0.0
      $region28: #{generator_forward.23} parent=23 // pred_fallthru
        _
      %v136 = vld [vmem:[%s127] sm:$0xff]
      %v137 = vld [vmem:[%s127 + $0x8] sm:$0xff]
      %v138 = vld [vmem:[%s127 + $0x10] sm:$0xff]
      %v139 = vld [vmem:[%s127 + $0x18] sm:$0xff]
      %v140 = vld [vmem:[%s127 + $0x20] sm:$0xff]
      %v141 = vld [vmem:[%s127 + $0x28] sm:$0xff]
      %v142 = vld [vmem:[%s127 + $0x30] sm:$0xff]
      %v143 = vld [vmem:[%s127 + $0x38] sm:$0xff]
      %v144 = vld [vmem:[%s127 + $0x40] sm:$0xff]
      %v145 = vld [vmem:[%s127 + $0x48] sm:$0xff]
      %v146 = vld [vmem:[%s127 + $0x50] sm:$0xff]
      %v147 = vld [vmem:[%s127 + $0x58] sm:$0xff]
      %v148 = vld [vmem:[%s127 + $0x60] sm:$0xff]
      %v149 = vld [vmem:[%s127 + $0x68] sm:$0xff]
      %v150 = vld [vmem:[%s127 + $0x70] sm:$0xff]
      %v151 = vld [vmem:[%s127 + $0x78] sm:$0xff]
      %v152 = vld [vmem:[%s127 + $0x80] sm:$0xff]
      %v153 = vld [vmem:[%s127 + $0x88] sm:$0xff]
      %v154 = vld [vmem:[%s127 + $0x90] sm:$0xff]
      %v155 = vld [vmem:[%s127 + $0x98] sm:$0xff]
      %v156 = vld [vmem:[%s127 + $0xa0] sm:$0xff]
      %v157 = vld [vmem:[%s127 + $0xa8] sm:$0xff]
      %v158 = vld [vmem:[%s127 + $0xb0] sm:$0xff]
      %v159 = vld [vmem:[%s127 + $0xb8] sm:$0xff]
      %v160 = vld [vmem:[%s127 + $0xc0] sm:$0xff]
      %v161 = vld [vmem:[%s127 + $0xc8] sm:$0xff]
      %v162 = vld [vmem:[%s127 + $0xd0] sm:$0xff]
      %v163 = vld [vmem:[%s127 + $0xd8] sm:$0xff]
      %v164 = vld [vmem:[%s127 + $0xe0] sm:$0xff]
      %v165 = vld [vmem:[%s127 + $0xe8] sm:$0xff]
      %v166 = vld [vmem:[%s127 + $0xf0] sm:$0xff]
      %v167 = vld [vmem:[%s127 + $0xf8] sm:$0xff]
      %v168 = vld [vmem:[%s127 + $0x100] sm:$0xff]
      %v169 = vld [vmem:[%s127 + $0x108] sm:$0xff]
      %v170 = vld [vmem:[%s127 + $0x110] sm:$0xff]
      %v171 = vld [vmem:[%s127 + $0x118] sm:$0xff]
      %v172 = vld [vmem:[%s127 + $0x120] sm:$0xff]
      %v173 = vld [vmem:[%s127 + $0x128] sm:$0xff]
      %v174 = vld [vmem:[%s127 + $0x130] sm:$0xff]
      %v175 = vld [vmem:[%s127 + $0x138] sm:$0xff]
      %v176 = vld [vmem:[%s127 + $0x140] sm:$0xff]
      %v177 = vld [vmem:[%s127 + $0x148] sm:$0xff]
      %v178 = vld [vmem:[%s127 + $0x150] sm:$0xff]
      %v179 = vld [vmem:[%s127 + $0x158] sm:$0xff]
      %v180 = vld [vmem:[%s127 + $0x160] sm:$0xff]
      %v181 = vld [vmem:[%s127 + $0x168] sm:$0xff]
      %v182 = vld [vmem:[%s127 + $0x170] sm:$0xff]
      %v183 = vld [vmem:[%s127 + $0x178] sm:$0xff]
      %v184 = vld [vmem:[%s127 + $0x180] sm:$0xff]
      %v185 = vld [vmem:[%s127 + $0x188] sm:$0xff]
      %v186 = vld [vmem:[%s127 + $0x190] sm:$0xff]
      %v187 = vld [vmem:[%s127 + $0x198] sm:$0xff]
      %v188 = vld [vmem:[%s127 + $0x1a0] sm:$0xff]
      %v189 = vld [vmem:[%s127 + $0x1a8] sm:$0xff]
      %v190 = vld [vmem:[%s127 + $0x1b0] sm:$0xff]
      %v191 = vld [vmem:[%s127 + $0x1b8] sm:$0xff]
      %v192 = vld [vmem:[%s127 + $0x1c0] sm:$0xff]
      %v193 = vld [vmem:[%s127 + $0x1c8] sm:$0xff]
      %v194 = vld [vmem:[%s127 + $0x1d0] sm:$0xff]
      %v195 = vld [vmem:[%s127 + $0x1d8] sm:$0xff]
      %v196 = vld [vmem:[%s127 + $0x1e0] sm:$0xff]
      %v197 = vld [vmem:[%s127 + $0x1e8] sm:$0xff]
      %v198 = vld [vmem:[%s127 + $0x1f0] sm:$0xff]
      %v199 = vld [vmem:[%s127 + $0x1f8] sm:$0xff]
      %v200 = vld [vmem:[%s1] sm:$0x1]
      %vm201 = vcmask 64512
      %v202 = vsel %vm201, %v136, 0.0
      %v203 = vsel %vm201, %v137, 0.0
      %v204 = vadd.f32 %v202, %v203
      %v205 = vsel %vm201, %v138, 0.0
      %v206 = vadd.f32 %v204, %v205
      %v207 = vsel %vm201, %v139, 0.0
      %v208 = vadd.f32 %v206, %v207
      %v209 = vsel %vm201, %v140, 0.0
      %v210 = vadd.f32 %v208, %v209
      %v211 = vsel %vm201, %v141, 0.0
      %v212 = vadd.f32 %v210, %v211
      %v213 = vsel %vm201, %v142, 0.0
      %v214 = vadd.f32 %v212, %v213
      %v215 = vsel %vm201, %v143, 0.0
      %v216 = vadd.f32 %v214, %v215
      %v217 = vsel %vm201, %v144, 0.0
      %v218 = vadd.f32 %v216, %v217
      %v219 = vsel %vm201, %v145, 0.0
      %v220 = vadd.f32 %v218, %v219
      %v221 = vsel %vm201, %v146, 0.0
      %v222 = vadd.f32 %v220, %v221
      %v223 = vsel %vm201, %v147, 0.0
      %v224 = vadd.f32 %v222, %v223
      %v225 = vsel %vm201, %v148, 0.0
      %v226 = vadd.f32 %v224, %v225
      %v227 = vsel %vm201, %v149, 0.0
      %v228 = vadd.f32 %v226, %v227
      %v229 = vsel %vm201, %v150, 0.0
      %v230 = vadd.f32 %v228, %v229
      %v231 = vsel %vm201, %v151, 0.0
      %v232 = vadd.f32 %v230, %v231
      %v233 = vsel %vm201, %v152, 0.0
      %v234 = vadd.f32 %v232, %v233
      %v235 = vsel %vm201, %v153, 0.0
      %v236 = vadd.f32 %v234, %v235
      %v237 = vsel %vm201, %v154, 0.0
      %v238 = vadd.f32 %v236, %v237
      %v239 = vsel %vm201, %v155, 0.0
      %v240 = vadd.f32 %v238, %v239
      %v241 = vsel %vm201, %v156, 0.0
      %v242 = vadd.f32 %v240, %v241
      %v243 = vsel %vm201, %v157, 0.0
      %v244 = vadd.f32 %v242, %v243
      %v245 = vsel %vm201, %v158, 0.0
      %v246 = vadd.f32 %v244, %v245
      %v247 = vsel %vm201, %v159, 0.0
      %v248 = vadd.f32 %v246, %v247
      %v249 = vsel %vm201, %v160, 0.0
      %v250 = vadd.f32 %v248, %v249
      %v251 = vsel %vm201, %v161, 0.0
      %v252 = vadd.f32 %v250, %v251
      %v253 = vsel %vm201, %v162, 0.0
      %v254 = vadd.f32 %v252, %v253
      %v255 = vsel %vm201, %v163, 0.0
      %v256 = vadd.f32 %v254, %v255
      %v257 = vsel %vm201, %v164, 0.0
      %v258 = vadd.f32 %v256, %v257
      %v259 = vsel %vm201, %v165, 0.0
      %v260 = vadd.f32 %v258, %v259
      %v261 = vsel %vm201, %v166, 0.0
      %v262 = vadd.f32 %v260, %v261
      %v263 = vsel %vm201, %v167, 0.0
      %v264 = vadd.f32 %v262, %v263
      %v265 = vsel %vm201, %v168, 0.0
      %v266 = vadd.f32 %v264, %v265
      %v267 = vsel %vm201, %v169, 0.0
      %v268 = vadd.f32 %v266, %v267
      %v269 = vsel %vm201, %v170, 0.0
      %v270 = vadd.f32 %v268, %v269
      %v271 = vsel %vm201, %v171, 0.0
      %v272 = vadd.f32 %v270, %v271
      %v273 = vsel %vm201, %v172, 0.0
      %v274 = vadd.f32 %v272, %v273
      %v275 = vsel %vm201, %v173, 0.0
      %v276 = vadd.f32 %v274, %v275
      %v277 = vsel %vm201, %v174, 0.0
      %v278 = vadd.f32 %v276, %v277
      %v279 = vsel %vm201, %v175, 0.0
      %v280 = vadd.f32 %v278, %v279
      %v281 = vsel %vm201, %v176, 0.0
      %v282 = vadd.f32 %v280, %v281
      %v283 = vsel %vm201, %v177, 0.0
      %v284 = vadd.f32 %v282, %v283
      %v285 = vsel %vm201, %v178, 0.0
      %v286 = vadd.f32 %v284, %v285
      %v287 = vsel %vm201, %v179, 0.0
      %v288 = vadd.f32 %v286, %v287
      %v289 = vsel %vm201, %v180, 0.0
      %v290 = vadd.f32 %v288, %v289
      %v291 = vsel %vm201, %v181, 0.0
      %v292 = vadd.f32 %v290, %v291
      %v293 = vsel %vm201, %v182, 0.0
      %v294 = vadd.f32 %v292, %v293
      %v295 = vsel %vm201, %v183, 0.0
      %v296 = vadd.f32 %v294, %v295
      %v297 = vsel %vm201, %v184, 0.0
      %v298 = vadd.f32 %v296, %v297
      %v299 = vsel %vm201, %v185, 0.0
      %v300 = vadd.f32 %v298, %v299
      %v301 = vsel %vm201, %v186, 0.0
      %v302 = vadd.f32 %v300, %v301
      %v303 = vsel %vm201, %v187, 0.0
      %v304 = vadd.f32 %v302, %v303
      %v305 = vsel %vm201, %v188, 0.0
      %v306 = vadd.f32 %v304, %v305
      %v307 = vsel %vm201, %v189, 0.0
      %v308 = vadd.f32 %v306, %v307
      %v309 = vsel %vm201, %v190, 0.0
      %v310 = vadd.f32 %v308, %v309
      %v311 = vsel %vm201, %v191, 0.0
      %v312 = vadd.f32 %v310, %v311
      %v313 = vsel %vm201, %v192, 0.0
      %v314 = vadd.f32 %v312, %v313
      %v315 = vsel %vm201, %v193, 0.0
      %v316 = vadd.f32 %v314, %v315
      %v317 = vsel %vm201, %v194, 0.0
      %v318 = vadd.f32 %v316, %v317
      %v319 = vsel %vm201, %v195, 0.0
      %v320 = vadd.f32 %v318, %v319
      %v321 = vsel %vm201, %v196, 0.0
      %v322 = vadd.f32 %v320, %v321
      %v323 = vsel %vm201, %v197, 0.0
      %v324 = vadd.f32 %v322, %v323
      %v325 = vsel %vm201, %v198, 0.0
      %v326 = vadd.f32 %v324, %v325
      %v327 = vsel %vm201, %v199, 0.0
      %v328 = vadd.f32 %v326, %v327
      %v329 = vrot.slane %v328, 4
      %v330 = vadd.f32 %v328, %v329
      %v331 = vrot.slane %v330, 2
      %v332 = vadd.f32 %v330, %v331
      %v333 = vrot.slane %v332, 1
      %v334 = vadd.f32 %v332, %v333
      %v335 = vadd.f32 %v200, %v334
      %vm336 = vcmask 57344
      %337 = vst.msk [vmem:[%s1] sm:$0x1] %vm336, %v335
      %v338 = vld [vmem:[%s2] sm:$0x1]
      %v339 = vmul.f32 %v136, %v136
      %v340 = vmul.f32 %v137, %v137
      %v341 = vmul.f32 %v138, %v138
      %v342 = vmul.f32 %v139, %v139
      %v343 = vmul.f32 %v140, %v140
      %v344 = vmul.f32 %v141, %v141
      %v345 = vmul.f32 %v142, %v142
      %v346 = vmul.f32 %v143, %v143
      %v347 = vmul.f32 %v144, %v144
      %v348 = vmul.f32 %v145, %v145
      %v349 = vmul.f32 %v146, %v146
      %v350 = vmul.f32 %v147, %v147
      %v351 = vmul.f32 %v148, %v148
      %v352 = vmul.f32 %v149, %v149
      %v353 = vmul.f32 %v150, %v150
      %v354 = vmul.f32 %v151, %v151
      %v355 = vmul.f32 %v152, %v152
      %v356 = vmul.f32 %v153, %v153
      %v357 = vmul.f32 %v154, %v154
      %v358 = vmul.f32 %v155, %v155
      %v359 = vmul.f32 %v156, %v156
      %v360 = vmul.f32 %v157, %v157
      %v361 = vmul.f32 %v158, %v158
      %v362 = vmul.f32 %v159, %v159
      %v363 = vmul.f32 %v160, %v160
      %v364 = vmul.f32 %v161, %v161
      %v365 = vmul.f32 %v162, %v162
      %v366 = vmul.f32 %v163, %v163
      %v367 = vmul.f32 %v164, %v164
      %v368 = vmul.f32 %v165, %v165
      %v369 = vmul.f32 %v166, %v166
      %v370 = vmul.f32 %v167, %v167
      %v371 = vmul.f32 %v168, %v168
      %v372 = vmul.f32 %v169, %v169
      %v373 = vmul.f32 %v170, %v170
      %v374 = vmul.f32 %v171, %v171
      %v375 = vmul.f32 %v172, %v172
      %v376 = vmul.f32 %v173, %v173
      %v377 = vmul.f32 %v174, %v174
      %v378 = vmul.f32 %v175, %v175
      %v379 = vmul.f32 %v176, %v176
      %v380 = vmul.f32 %v177, %v177
      %v381 = vmul.f32 %v178, %v178
      %v382 = vmul.f32 %v179, %v179
      %v383 = vmul.f32 %v180, %v180
      %v384 = vmul.f32 %v181, %v181
      %v385 = vmul.f32 %v182, %v182
      %v386 = vmul.f32 %v183, %v183
      %v387 = vmul.f32 %v184, %v184
      %v388 = vmul.f32 %v185, %v185
      %v389 = vmul.f32 %v186, %v186
      %v390 = vmul.f32 %v187, %v187
      %v391 = vmul.f32 %v188, %v188
      %v392 = vmul.f32 %v189, %v189
      %v393 = vmul.f32 %v190, %v190
      %v394 = vmul.f32 %v191, %v191
      %v395 = vmul.f32 %v192, %v192
      %v396 = vmul.f32 %v193, %v193
      %v397 = vmul.f32 %v194, %v194
      %v398 = vmul.f32 %v195, %v195
      %v399 = vmul.f32 %v196, %v196
      %v400 = vmul.f32 %v197, %v197
      %v401 = vmul.f32 %v198, %v198
      %v402 = vmul.f32 %v199, %v199
      %v403 = vsel %vm201, %v339, 0.0
      %v404 = vsel %vm201, %v340, 0.0
      %v405 = vadd.f32 %v403, %v404
      %v406 = vsel %vm201, %v341, 0.0
      %v407 = vadd.f32 %v405, %v406
      %v408 = vsel %vm201, %v342, 0.0
      %v409 = vadd.f32 %v407, %v408
      %v410 = vsel %vm201, %v343, 0.0
      %v411 = vadd.f32 %v409, %v410
      %v412 = vsel %vm201, %v344, 0.0
      %v413 = vadd.f32 %v411, %v412
      %v414 = vsel %vm201, %v345, 0.0
      %v415 = vadd.f32 %v413, %v414
      %v416 = vsel %vm201, %v346, 0.0
      %v417 = vadd.f32 %v415, %v416
      %v418 = vsel %vm201, %v347, 0.0
      %v419 = vadd.f32 %v417, %v418
      %v420 = vsel %vm201, %v348, 0.0
      %v421 = vadd.f32 %v419, %v420
      %v422 = vsel %vm201, %v349, 0.0
      %v423 = vadd.f32 %v421, %v422
      %v424 = vsel %vm201, %v350, 0.0
      %v425 = vadd.f32 %v423, %v424
      %v426 = vsel %vm201, %v351, 0.0
      %v427 = vadd.f32 %v425, %v426
      %v428 = vsel %vm201, %v352, 0.0
      %v429 = vadd.f32 %v427, %v428
      %v430 = vsel %vm201, %v353, 0.0
      %v431 = vadd.f32 %v429, %v430
      %v432 = vsel %vm201, %v354, 0.0
      %v433 = vadd.f32 %v431, %v432
      %v434 = vsel %vm201, %v355, 0.0
      %v435 = vadd.f32 %v433, %v434
      %v436 = vsel %vm201, %v356, 0.0
      %v437 = vadd.f32 %v435, %v436
      %v438 = vsel %vm201, %v357, 0.0
      %v439 = vadd.f32 %v437, %v438
      %v440 = vsel %vm201, %v358, 0.0
      %v441 = vadd.f32 %v439, %v440
      %v442 = vsel %vm201, %v359, 0.0
      %v443 = vadd.f32 %v441, %v442
      %v444 = vsel %vm201, %v360, 0.0
      %v445 = vadd.f32 %v443, %v444
      %v446 = vsel %vm201, %v361, 0.0
      %v447 = vadd.f32 %v445, %v446
      %v448 = vsel %vm201, %v362, 0.0
      %v449 = vadd.f32 %v447, %v448
      %v450 = vsel %vm201, %v363, 0.0
      %v451 = vadd.f32 %v449, %v450
      %v452 = vsel %vm201, %v364, 0.0
      %v453 = vadd.f32 %v451, %v452
      %v454 = vsel %vm201, %v365, 0.0
      %v455 = vadd.f32 %v453, %v454
      %v456 = vsel %vm201, %v366, 0.0
      %v457 = vadd.f32 %v455, %v456
      %v458 = vsel %vm201, %v367, 0.0
      %v459 = vadd.f32 %v457, %v458
      %v460 = vsel %vm201, %v368, 0.0
      %v461 = vadd.f32 %v459, %v460
      %v462 = vsel %vm201, %v369, 0.0
      %v463 = vadd.f32 %v461, %v462
      %v464 = vsel %vm201, %v370, 0.0
      %v465 = vadd.f32 %v463, %v464
      %v466 = vsel %vm201, %v371, 0.0
      %v467 = vadd.f32 %v465, %v466
      %v468 = vsel %vm201, %v372, 0.0
      %v469 = vadd.f32 %v467, %v468
      %v470 = vsel %vm201, %v373, 0.0
      %v471 = vadd.f32 %v469, %v470
      %v472 = vsel %vm201, %v374, 0.0
      %v473 = vadd.f32 %v471, %v472
      %v474 = vsel %vm201, %v375, 0.0
      %v475 = vadd.f32 %v473, %v474
      %v476 = vsel %vm201, %v376, 0.0
      %v477 = vadd.f32 %v475, %v476
      %v478 = vsel %vm201, %v377, 0.0
      %v479 = vadd.f32 %v477, %v478
      %v480 = vsel %vm201, %v378, 0.0
      %v481 = vadd.f32 %v479, %v480
      %v482 = vsel %vm201, %v379, 0.0
      %v483 = vadd.f32 %v481, %v482
      %v484 = vsel %vm201, %v380, 0.0
      %v485 = vadd.f32 %v483, %v484
      %v486 = vsel %vm201, %v381, 0.0
      %v487 = vadd.f32 %v485, %v486
      %v488 = vsel %vm201, %v382, 0.0
      %v489 = vadd.f32 %v487, %v488
      %v490 = vsel %vm201, %v383, 0.0
      %v491 = vadd.f32 %v489, %v490
      %v492 = vsel %vm201, %v384, 0.0
      %v493 = vadd.f32 %v491, %v492
      %v494 = vsel %vm201, %v385, 0.0
      %v495 = vadd.f32 %v493, %v494
      %v496 = vsel %vm201, %v386, 0.0
      %v497 = vadd.f32 %v495, %v496
      %v498 = vsel %vm201, %v387, 0.0
      %v499 = vadd.f32 %v497, %v498
      %v500 = vsel %vm201, %v388, 0.0
      %v501 = vadd.f32 %v499, %v500
      %v502 = vsel %vm201, %v389, 0.0
      %v503 = vadd.f32 %v501, %v502
      %v504 = vsel %vm201, %v390, 0.0
      %v505 = vadd.f32 %v503, %v504
      %v506 = vsel %vm201, %v391, 0.0
      %v507 = vadd.f32 %v505, %v506
      %v508 = vsel %vm201, %v392, 0.0
      %v509 = vadd.f32 %v507, %v508
      %v510 = vsel %vm201, %v393, 0.0
      %v511 = vadd.f32 %v509, %v510
      %v512 = vsel %vm201, %v394, 0.0
      %v513 = vadd.f32 %v511, %v512
      %v514 = vsel %vm201, %v395, 0.0
      %v515 = vadd.f32 %v513, %v514
      %v516 = vsel %vm201, %v396, 0.0
      %v517 = vadd.f32 %v515, %v516
      %v518 = vsel %vm201, %v397, 0.0
      %v519 = vadd.f32 %v517, %v518
      %v520 = vsel %vm201, %v398, 0.0
      %v521 = vadd.f32 %v519, %v520
      %v522 = vsel %vm201, %v399, 0.0
      %v523 = vadd.f32 %v521, %v522
      %v524 = vsel %vm201, %v400, 0.0
      %v525 = vadd.f32 %v523, %v524
      %v526 = vsel %vm201, %v401, 0.0
      %v527 = vadd.f32 %v525, %v526
      %v528 = vsel %vm201, %v402, 0.0
      %v529 = vadd.f32 %v527, %v528
      %v530 = vrot.slane %v529, 4
      %v531 = vadd.f32 %v529, %v530
      %v532 = vrot.slane %v531, 2
      %v533 = vadd.f32 %v531, %v532
      %v534 = vrot.slane %v533, 1
      %v535 = vadd.f32 %v533, %v534
      %v536 = vadd.f32 %v338, %v535
      %537 = vst.msk [vmem:[%s2] sm:$0x1] %vm336, %v536
      // Predicated region
      $region29: #{generator_forward.23} parent=23 // pred_check
        %p538 = pneg %p53
      $region30: #{generator_forward.23} parent=23 // pred_check_branch
        %540 = sbr.rel (%p538) target = $region32
      $region31: #{generator_forward.23} parent=23 // pred_region
        _
      $region32: #{generator_forward.23} parent=23 // pred_fallthru
        _
      // Predicated region
      $region33: #{generator_forward.23} parent=23 // pred_check
        %p541 = pneg %p74
      $region34: #{generator_forward.23} parent=23 // pred_check_branch
        %543 = sbr.rel (%p541) target = $region36
      $region35: #{generator_forward.23} parent=23 // pred_region
        _
      $region36: #{generator_forward.23} parent=23 // pred_fallthru
        _
      // Predicated region
      $region37: #{generator_forward.23} parent=23 // pred_check
        %p544 = pneg %p53
      $region38: #{generator_forward.23} parent=23 // pred_check_branch
        %546 = sbr.rel (%p544) target = $region40
      $region39: #{generator_forward.23} parent=23 // pred_region
        _
      $region40: #{generator_forward.23} parent=23 // pred_fallthru
        _
      // Predicated region
      $region41: #{generator_forward.23} parent=23 // pred_check
        %p547 = pneg %p74
      $region42: #{generator_forward.23} parent=23 // pred_check_branch
        %549 = sbr.rel (%p547) target = $region44
      $region43: #{generator_forward.23} parent=23 // pred_region
        _
      $region44: #{generator_forward.23} parent=23 // pred_fallthru
        _
    $region24: #{generator_forward.23} parent=5 // pred_fallthru
      _
    %p550 = scmp.le.s32.totalorder 2, %s9
    // Predicated region
    $region45: #{generator_forward.23} parent=5 // pred_check
      %p551 = pneg %p550
    $region46: #{generator_forward.23} parent=5 // pred_check_branch
      %553 = sbr.rel (%p551) target = $region48
    $region47: #{generator_forward.23} parent=5 // pred_region
      %s554 = ssub.s32 %s9, 2
    $region48: #{generator_forward.23} parent=5 // pred_fallthru
      _
  $region6: #{generator_forward.23} parent=0 // loop_footer
    %s13 = sadd.s32 1, %s9
  $region7: #{generator_forward.23} parent=0 // loop_footer_branch
    %8 = sbr.rel target = $region3
  $region8: #{generator_forward.23} parent=0 // loop_exit
    _

// kernel: generator_forward.25
$region0: #{generator_forward.25}
  #allocation0 [shape = 'u32[]', space=smem, size = 0x4, offset = 0x4, fixed_abs, tag = 'smem constant byte address 0x4 - core index']
  #allocation1 [shape = 'u32[144,128]{1,0:T(1,128)}', space=vmem, size = 0x12000, scoped, tag = 'internal scratch']
  #allocation2 [shape = 'f32[256,128]{1,0:T(8,128)}', space=vmem, size = 0x20000, scoped, tag = 'scratch operand']
  %s0 = inlined_call_operand.vmem [shape: bf16[2304,128], index: 0, kind: input, shape index: {}]
  %s1 = inlined_call_operand.vmem [shape: bf16[128,128], index: 1, kind: input, shape index: {}]
  %s2 = inlined_call_operand.vmem [shape: f32[1,128], index: 2, kind: input, shape index: {}]
  %s3 = inlined_call_operand.vmem [shape: f32[2304,128], index: 3, kind: output, shape index: {}]
  %s4 = sld [smem:[#allocation0]]
  $region53: #{generator_forward.25} parent=0
    _
  %s6 = ssub.s32 1, %s4
  %s7 = scalar_select 0, %s6, %s4
  loop: start=0, step=1, limit=11
  $region2: #{generator_forward.25} parent=0 // loop_pre_header
    _
  $region3: #{generator_forward.25} parent=0 // loop_header
    %s9 = sphi 0, %s13
    %p10 = scmp.ge.s32.totalorder %s9, 11
    %s16 = sphi 0, %s35
    %s17 = sphi 0, %s31
    %s18 = sphi 0, %s27
    %s19 = sphi 0, %s16
    %s20 = sphi 0, %s17
    %s21 = sphi 0, %s18
    %s22 = sphi 0, %s19
    %s23 = sphi 0, %s20
    %s24 = sphi 0, %s21
    %s40 = sphi 0, %s42
    %s43 = sphi 0, %s40
    %s44 = sphi 0, %s43
    %s60 = sphi 0, %s44
    %s68 = sphi 0, %s70
    %s71 = sphi 0, %s68
    %s72 = sphi 0, %s71
    %s88 = sphi 0, %s72
    %s94 = sphi 0, %s96
    %s97 = sphi 0, %s94
    %s98 = sphi 0, %s97
    %s114 = sphi 0, %s98
    %s122 = sphi 0, %s124
    %s125 = sphi 0, %s122
    %s126 = sphi 0, %s125
    %s142 = sphi 0, %s126
  $region4: #{generator_forward.25} parent=0 // loop_header_branch
    %12 = sbr.rel (%p10) target = $region8
  $region5: #{generator_forward.25} parent=0 // loop_body
    %s14 = ssub.s32 %s9, 1
    %s15 = ssub.s32 %s9, 2
    %s25 = sadd.s32 1, %s18
    %p26 = scmp.ge.s32.totalorder %s25, 1
    %s27 = scalar_select %p26, 0, %s25
    %s28 = sadd.s32 1, %s17
    %s29 = scalar_select %p26, %s28, %s17
    %p30 = scmp.ge.s32.totalorder %s29, 1
    %s31 = scalar_select %p30, 0, %s29
    %s32 = sadd.s32 1, %s16
    %s33 = scalar_select %p30, %s32, %s16
    %p34 = scmp.ge.s32.totalorder %s33, 9
    %s35 = scalar_select %p34, 0, %s33
    %s36 = ssub.s32 %s16, %s35
    %s37 = ssub.s32 %s18, %s27
    %s38 = sor.u32 %s36, %s37
    %p39 = scmp.eq.s32.totalorder %s38, 0
    %s41 = sadd.s32 %s40, 1
    %s42 = scalar_select %p39, %s40, %s41
    %p45 = pneg %p39
    %p46 = scmp.eq.s32.totalorder %s9, 8
    %p47 = por %p45, %p46
    %p48 = scmp.ne.s32.totalorder %s40, %s43
    %p49 = scmp.eq.s32.totalorder %s9, 0
    %p50 = por %p48, %p49
    %p51 = scmp.ne.s32.totalorder %s40, %s43
    %p52 = scmp.eq.s32.totalorder %s14, 8
    %p53 = por %p51, %p52
    %p54 = scmp.ne.s32.totalorder %s43, %s44
    %p55 = scmp.eq.s32.totalorder %s14, 0
    %p56 = por %p54, %p55
    %p57 = scmp.ne.s32.totalorder %s43, %s44
    %p58 = scmp.eq.s32.totalorder %s15, 8
    %p59 = por %p57, %p58
    %p61 = scmp.ne.s32.totalorder %s44, %s60
    %p62 = scmp.eq.s32.totalorder %s15, 0
    %p63 = por %p61, %p62
    %s64 = ssub.s32 %s18, %s27
    %s65 = ssub.s32 %s17, %s31
    %s66 = sor.u32 %s64, %s65
    %p67 = scmp.eq.s32.totalorder %s66, 0
    %s69 = sadd.s32 %s68, 1
    %s70 = scalar_select %p67, %s68, %s69
    %p73 = pneg %p67
    %p74 = scmp.eq.s32.totalorder %s9, 8
    %p75 = por %p73, %p74
    %p76 = scmp.ne.s32.totalorder %s68, %s71
    %p77 = scmp.eq.s32.totalorder %s9, 0
    %p78 = por %p76, %p77
    %p79 = scmp.ne.s32.totalorder %s68, %s71
    %p80 = scmp.eq.s32.totalorder %s14, 8
    %p81 = por %p79, %p80
    %p82 = scmp.ne.s32.totalorder %s71, %s72
    %p83 = scmp.eq.s32.totalorder %s14, 0
    %p84 = por %p82, %p83
    %p85 = scmp.ne.s32.totalorder %s71, %s72
    %p86 = scmp.eq.s32.totalorder %s15, 8
    %p87 = por %p85, %p86
    %p89 = scmp.ne.s32.totalorder %s72, %s88
    %p90 = scmp.eq.s32.totalorder %s15, 0
    %p91 = por %p89, %p90
    %s92 = ssub.s32 %s17, %s31
    %p93 = scmp.eq.s32.totalorder %s92, 0
    %s95 = sadd.s32 %s94, 1
    %s96 = scalar_select %p93, %s94, %s95
    %p99 = pneg %p93
    %p100 = scmp.eq.s32.totalorder %s9, 8
    %p101 = por %p99, %p100
    %p102 = scmp.ne.s32.totalorder %s94, %s97
    %p103 = scmp.eq.s32.totalorder %s9, 0
    %p104 = por %p102, %p103
    %p105 = scmp.ne.s32.totalorder %s94, %s97
    %p106 = scmp.eq.s32.totalorder %s14, 8
    %p107 = por %p105, %p106
    %p108 = scmp.ne.s32.totalorder %s97, %s98
    %p109 = scmp.eq.s32.totalorder %s14, 0
    %p110 = por %p108, %p109
    %p111 = scmp.ne.s32.totalorder %s97, %s98
    %p112 = scmp.eq.s32.totalorder %s15, 8
    %p113 = por %p111, %p112
    %p115 = scmp.ne.s32.totalorder %s98, %s114
    %p116 = scmp.eq.s32.totalorder %s15, 0
    %p117 = por %p115, %p116
    %s118 = ssub.s32 %s16, %s35
    %s119 = ssub.s32 %s17, %s31
    %s120 = sor.u32 %s118, %s119
    %p121 = scmp.eq.s32.totalorder %s120, 0
    %s123 = sadd.s32 %s122, 1
    %s124 = scalar_select %p121, %s122, %s123
    %p127 = pneg %p121
    %p128 = scmp.eq.s32.totalorder %s9, 8
    %p129 = por %p127, %p128
    %p130 = scmp.ne.s32.totalorder %s122, %s125
    %p131 = scmp.eq.s32.totalorder %s9, 0
    %p132 = por %p130, %p131
    %p133 = scmp.ne.s32.totalorder %s122, %s125
    %p134 = scmp.eq.s32.totalorder %s14, 8
    %p135 = por %p133, %p134
    %p136 = scmp.ne.s32.totalorder %s125, %s126
    %p137 = scmp.eq.s32.totalorder %s14, 0
    %p138 = por %p136, %p137
    %p139 = scmp.ne.s32.totalorder %s125, %s126
    %p140 = scmp.eq.s32.totalorder %s15, 8
    %p141 = por %p139, %p140
    %p143 = scmp.ne.s32.totalorder %s126, %s142
    %p144 = scmp.eq.s32.totalorder %s15, 0
    %p145 = por %p143, %p144
    %p146 = scmp.le.s32.totalorder 1, %s9
    %p147 = scmp.lt.s32.totalorder %s9, 10
    %p148 = pnand %p146, %p147
    %p149 = pneg %p148
    // Predicated region
    $region9: #{generator_forward.25} parent=5 // pred_check
      _
    $region10: #{generator_forward.25} parent=5 // pred_check_branch
      %151 = sbr.rel (%p148) target = $region12
    $region11: #{generator_forward.25} parent=5 // pred_region
      %s152 = ssub.s32 %s9, 1
      // Predicated region
      $region13: #{generator_forward.25} parent=11 // pred_check
        %p153 = pneg %p84
      $region14: #{generator_forward.25} parent=11 // pred_check_branch
        %155 = sbr.rel (%p153) target = $region16
      $region15: #{generator_forward.25} parent=11 // pred_region
        %s156 = smul.u32 16, %s21
        %p157 = scmp.lt.s32.totalorder %s156, 15
        %s158 = scalar_select %p157, %s156, 15
        %p159 = scmp.lt.s32.totalorder %s20, 0
        %s160 = scalar_select %p159, %s20, 0
        %s161 = sadd.s32 %s160, %s158
        %s162 = smul.addr %s161, 4
        %s163 = scalar_lea.vmem %s1, %s162
        %s164 = smul.u32 16, %s21
      $region16: #{generator_forward.25} parent=11 // pred_fallthru
        _
      // Predicated region
      $region17: #{generator_forward.25} parent=11 // pred_check
        %p165 = pneg %p110
      $region18: #{generator_forward.25} parent=11 // pred_check_branch
        %167 = sbr.rel (%p165) target = $region20
      $region19: #{generator_forward.25} parent=11 // pred_region
        %p168 = scmp.lt.s32.totalorder %s20, 0
        %s169 = scalar_select %p168, %s20, 0
        %s170 = scalar_lea.vmem %s2, %s169
      $region20: #{generator_forward.25} parent=11 // pred_fallthru
        _
    $region12: #{generator_forward.25} parent=5 // pred_fallthru
      _
    %p171 = scmp.lt.s32.totalorder %s9, 9
    // Predicated region
    $region21: #{generator_forward.25} parent=5 // pred_check
      %p172 = pneg %p171
    $region22: #{generator_forward.25} parent=5 // pred_check_branch
      %174 = sbr.rel (%p172) target = $region24
    $region23: #{generator_forward.25} parent=5 // pred_region
      // Predicated region
      $region25: #{generator_forward.25} parent=23 // pred_check
        %p175 = pneg %p50
      $region26: #{generator_forward.25} parent=23 // pred_check_branch
        %177 = sbr.rel (%p175) target = $region28
      $region27: #{generator_forward.25} parent=23 // pred_region
        %s178 = smul.u32 32, %s16
        %p179 = scmp.lt.s32.totalorder %s178, 287
        %s180 = scalar_select %p179, %s178, 287
        %p181 = scmp.lt.s32.totalorder %s18, 0
        %s182 = scalar_select %p181, %s18, 0
        %s183 = sadd.s32 %s182, %s180
        %s184 = smul.addr %s183, 4
        %s185 = scalar_lea.vmem %s0, %s184
        %s186 = smul.u32 32, %s16
      $region28: #{generator_forward.25} parent=23 // pred_fallthru
        _
    $region24: #{generator_forward.25} parent=5 // pred_fallthru
      _
    %p187 = scmp.le.s32.totalorder 1, %s9
    %p188 = scmp.lt.s32.totalorder %s9, 10
    %p189 = pnand %p187, %p188
    %p190 = pneg %p189
    // Predicated region
    $region29: #{generator_forward.25} parent=5 // pred_check
      _
    $region30: #{generator_forward.25} parent=5 // pred_check_branch
      %192 = sbr.rel (%p189) target = $region32
    $region31: #{generator_forward.25} parent=5 // pred_region
      %s193 = ssub.s32 %s9, 1
      %s194 = smul.u32 32, %s19
      %p195 = scmp.lt.s32.totalorder %s194, 287
      %s196 = scalar_select %p195, %s194, 287
      %p197 = scmp.lt.s32.totalorder %s21, 0
      %s198 = scalar_select %p197, %s21, 0
      %s199 = sadd.s32 %s198, %s196
      %s200 = smul.addr %s199, 4
      %s201 = scalar_lea.vmem %s0, %s200
      %p202 = pneg %p56
      %p203 = pneg %p53
      %s204 = smul.u32 16, %s21
      %p205 = scmp.lt.s32.totalorder %s204, 15
      %s206 = scalar_select %p205, %s204, 15
      %p207 = scmp.lt.s32.totalorder %s20, 0
      %s208 = scalar_select %p207, %s20, 0
      %s209 = sadd.s32 %s208, %s206
      %s210 = smul.addr %s209, 4
      %s211 = scalar_lea.vmem %s1, %s210
      %p212 = pneg %p84
      %p213 = pneg %p81
      %p214 = scmp.lt.s32.totalorder %s20, 0
      %s215 = scalar_select %p214, %s20, 0
      %s216 = scalar_lea.vmem %s2, %s215
      %p217 = pneg %p110
      %p218 = pneg %p107
      %p219 = pneg %p138
      %p220 = pneg %p135
      %s221 = smul.u32 32, %s19
      %p222 = scmp.lt.s32.totalorder %s221, 287
      %s223 = scalar_select %p222, %s221, 287
      %p224 = scmp.lt.s32.totalorder %s20, 0
      %s225 = scalar_select %p224, %s20, 0
      %s226 = sadd.s32 %s225, %s223
      %s227 = smul.addr %s226, 8
      %s228 = scalar_lea.vmem %s3, %s227
      %s229 = smul.u32 32, %s19
      %p230 = scmp.lt.s32.totalorder %s229, 287
      %s231 = scalar_select %p230, %s229, 287
      %p232 = scmp.lt.s32.totalorder %s21, 0
      %s233 = scalar_select %p232, %s21, 0
      %s234 = sadd.s32 %s233, %s231
      %s235 = smul.addr %s234, 4
      %s236 = scalar_lea.vmem %s0, %s235
      %s237 = smul.u32 32, %s19
      %s238 = smul.u32 16, %s21
      %p239 = scmp.lt.s32.totalorder %s238, 15
      %s240 = scalar_select %p239, %s238, 15
      %p241 = scmp.lt.s32.totalorder %s20, 0
      %s242 = scalar_select %p241, %s20, 0
      %s243 = sadd.s32 %s242, %s240
      %s244 = smul.addr %s243, 4
      %s245 = scalar_lea.vmem %s1, %s244
      %s246 = smul.u32 16, %s21
      %p247 = scmp.lt.s32.totalorder %s20, 0
      %s248 = scalar_select %p247, %s20, 0
      %s249 = scalar_lea.vmem %s2, %s248
      %s250 = smul.u32 32, %s19
      %p251 = scmp.lt.s32.totalorder %s250, 287
      %s252 = scalar_select %p251, %s250, 287
      %p253 = scmp.lt.s32.totalorder %s20, 0
      %s254 = scalar_select %p253, %s20, 0
      %s255 = sadd.s32 %s254, %s252
      %s256 = smul.addr %s255, 8
      %s257 = scalar_lea.vmem %s3, %s256
      %s258 = smul.u32 32, %s19
      %p260 = scmp.eq.s32.totalorder %s21, 0
      // Predicated region
      $region33: #{generator_forward.25} parent=31 // pred_check
        %p261 = pneg %p260
      $region34: #{generator_forward.25} parent=31 // pred_check_branch
        %263 = sbr.rel (%p261) target = $region36
      $region35: #{generator_forward.25} parent=31 // pred_region
        %264 = vst [vmem:[#allocation2] sm:$0xff] 0.0
        %265 = vst [vmem:[#allocation2 + $0x8] sm:$0xff] 0.0
        %266 = vst [vmem:[#allocation2 + $0x10] sm:$0xff] 0.0
        %267 = vst [vmem:[#allocation2 + $0x18] sm:$0xff] 0.0
        %268 = vst [vmem:[#allocation2 + $0x20] sm:$0xff] 0.0
        %269 = vst [vmem:[#allocation2 + $0x28] sm:$0xff] 0.0
        %270 = vst [vmem:[#allocation2 + $0x30] sm:$0xff] 0.0
        %271 = vst [vmem:[#allocation2 + $0x38] sm:$0xff] 0.0
        %272 = vst [vmem:[#allocation2 + $0x40] sm:$0xff] 0.0
        %273 = vst [vmem:[#allocation2 + $0x48] sm:$0xff] 0.0
        %274 = vst [vmem:[#allocation2 + $0x50] sm:$0xff] 0.0
        %275 = vst [vmem:[#allocation2 + $0x58] sm:$0xff] 0.0
        %276 = vst [vmem:[#allocation2 + $0x60] sm:$0xff] 0.0
        %277 = vst [vmem:[#allocation2 + $0x68] sm:$0xff] 0.0
        %278 = vst [vmem:[#allocation2 + $0x70] sm:$0xff] 0.0
        %279 = vst [vmem:[#allocation2 + $0x78] sm:$0xff] 0.0
        %280 = vst [vmem:[#allocation2 + $0x80] sm:$0xff] 0.0
        %281 = vst [vmem:[#allocation2 + $0x88] sm:$0xff] 0.0
        %282 = vst [vmem:[#allocation2 + $0x90] sm:$0xff] 0.0
        %283 = vst [vmem:[#allocation2 + $0x98] sm:$0xff] 0.0
        %284 = vst [vmem:[#allocation2 + $0xa0] sm:$0xff] 0.0
        %285 = vst [vmem:[#allocation2 + $0xa8] sm:$0xff] 0.0
        %286 = vst [vmem:[#allocation2 + $0xb0] sm:$0xff] 0.0
        %287 = vst [vmem:[#allocation2 + $0xb8] sm:$0xff] 0.0
        %288 = vst [vmem:[#allocation2 + $0xc0] sm:$0xff] 0.0
        %289 = vst [vmem:[#allocation2 + $0xc8] sm:$0xff] 0.0
        %290 = vst [vmem:[#allocation2 + $0xd0] sm:$0xff] 0.0
        %291 = vst [vmem:[#allocation2 + $0xd8] sm:$0xff] 0.0
        %292 = vst [vmem:[#allocation2 + $0xe0] sm:$0xff] 0.0
        %293 = vst [vmem:[#allocation2 + $0xe8] sm:$0xff] 0.0
        %294 = vst [vmem:[#allocation2 + $0xf0] sm:$0xff] 0.0
        %295 = vst [vmem:[#allocation2 + $0xf8] sm:$0xff] 0.0
      $region36: #{generator_forward.25} parent=31 // pred_fallthru
        _
      %v296 = vld [vmem:[#allocation2] sm:$0xff]
      %v297 = vld [vmem:[#allocation2 + $0x8] sm:$0xff]
      %v298 = vld [vmem:[#allocation2 + $0x10] sm:$0xff]
      %v299 = vld [vmem:[#allocation2 + $0x18] sm:$0xff]
      %v300 = vld [vmem:[#allocation2 + $0x20] sm:$0xff]
      %v301 = vld [vmem:[#allocation2 + $0x28] sm:$0xff]
      %v302 = vld [vmem:[#allocation2 + $0x30] sm:$0xff]
      %v303 = vld [vmem:[#allocation2 + $0x38] sm:$0xff]
      %v304 = vld [vmem:[#allocation2 + $0x40] sm:$0xff]
      %v305 = vld [vmem:[#allocation2 + $0x48] sm:$0xff]
      %v306 = vld [vmem:[#allocation2 + $0x50] sm:$0xff]
      %v307 = vld [vmem:[#allocation2 + $0x58] sm:$0xff]
      %v308 = vld [vmem:[#allocation2 + $0x60] sm:$0xff]
      %v309 = vld [vmem:[#allocation2 + $0x68] sm:$0xff]
      %v310 = vld [vmem:[#allocation2 + $0x70] sm:$0xff]
      %v311 = vld [vmem:[#allocation2 + $0x78] sm:$0xff]
      %v312 = vld [vmem:[#allocation2 + $0x80] sm:$0xff]
      %v313 = vld [vmem:[#allocation2 + $0x88] sm:$0xff]
      %v314 = vld [vmem:[#allocation2 + $0x90] sm:$0xff]
      %v315 = vld [vmem:[#allocation2 + $0x98] sm:$0xff]
      %v316 = vld [vmem:[#allocation2 + $0xa0] sm:$0xff]
      %v317 = vld [vmem:[#allocation2 + $0xa8] sm:$0xff]
      %v318 = vld [vmem:[#allocation2 + $0xb0] sm:$0xff]
      %v319 = vld [vmem:[#allocation2 + $0xb8] sm:$0xff]
      %v320 = vld [vmem:[#allocation2 + $0xc0] sm:$0xff]
      %v321 = vld [vmem:[#allocation2 + $0xc8] sm:$0xff]
      %v322 = vld [vmem:[#allocation2 + $0xd0] sm:$0xff]
      %v323 = vld [vmem:[#allocation2 + $0xd8] sm:$0xff]
      %v324 = vld [vmem:[#allocation2 + $0xe0] sm:$0xff]
      %v325 = vld [vmem:[#allocation2 + $0xe8] sm:$0xff]
      %v326 = vld [vmem:[#allocation2 + $0xf0] sm:$0xff]
      %v327 = vld [vmem:[#allocation2 + $0xf8] sm:$0xff]
      %v328 = vld [vmem:[%s236] sm:$0xf]
      %v329 = vld [vmem:[%s236 + $0x4] sm:$0xf]
      %v330 = vld [vmem:[%s236 + $0x8] sm:$0xf]
      %v331 = vld [vmem:[%s236 + $0xc] sm:$0xf]
      %v332 = vld [vmem:[%s236 + $0x10] sm:$0xf]
      %v333 = vld [vmem:[%s236 + $0x14] sm:$0xf]
      %v334 = vld [vmem:[%s236 + $0x18] sm:$0xf]
      %v335 = vld [vmem:[%s236 + $0x1c] sm:$0xf]
      %v336 = vld [vmem:[%s236 + $0x20] sm:$0xf]
      %v337 = vld [vmem:[%s236 + $0x24] sm:$0xf]
      %v338 = vld [vmem:[%s236 + $0x28] sm:$0xf]
      %v339 = vld [vmem:[%s236 + $0x2c] sm:$0xf]
      %v340 = vld [vmem:[%s236 + $0x30] sm:$0xf]
      %v341 = vld [vmem:[%s236 + $0x34] sm:$0xf]
      %v342 = vld [vmem:[%s236 + $0x38] sm:$0xf]
      %v343 = vld [vmem:[%s236 + $0x3c] sm:$0xf]
      %v344 = vld [vmem:[%s236 + $0x40] sm:$0xf]
      %v345 = vld [vmem:[%s236 + $0x44] sm:$0xf]
      %v346 = vld [vmem:[%s236 + $0x48] sm:$0xf]
      %v347 = vld [vmem:[%s236 + $0x4c] sm:$0xf]
      %v348 = vld [vmem:[%s236 + $0x50] sm:$0xf]
      %v349 = vld [vmem:[%s236 + $0x54] sm:$0xf]
      %v350 = vld [vmem:[%s236 + $0x58] sm:$0xf]
      %v351 = vld [vmem:[%s236 + $0x5c] sm:$0xf]
      %v352 = vld [vmem:[%s236 + $0x60] sm:$0xf]
      %v353 = vld [vmem:[%s236 + $0x64] sm:$0xf]
      %v354 = vld [vmem:[%s236 + $0x68] sm:$0xf]
      %v355 = vld [vmem:[%s236 + $0x6c] sm:$0xf]
      %v356 = vld [vmem:[%s236 + $0x70] sm:$0xf]
      %v357 = vld [vmem:[%s236 + $0x74] sm:$0xf]
      %v358 = vld [vmem:[%s236 + $0x78] sm:$0xf]
      %v359 = vld [vmem:[%s236 + $0x7c] sm:$0xf]
      %v360 = vld [vmem:[%s245] sm:$0xf]
      %v361 = vld [vmem:[%s245 + $0x4] sm:$0xf]
      %v362 = vld [vmem:[%s245 + $0x8] sm:$0xf]
      %v363 = vld [vmem:[%s245 + $0xc] sm:$0xf]
      %v364 = vld [vmem:[%s245 + $0x10] sm:$0xf]
      %v365 = vld [vmem:[%s245 + $0x14] sm:$0xf]
      %v366 = vld [vmem:[%s245 + $0x18] sm:$0xf]
      %v367 = vld [vmem:[%s245 + $0x1c] sm:$0xf]
      %v368 = vld [vmem:[%s245 + $0x20] sm:$0xf]
      %v369 = vld [vmem:[%s245 + $0x24] sm:$0xf]
      %v370 = vld [vmem:[%s245 + $0x28] sm:$0xf]
      %v371 = vld [vmem:[%s245 + $0x2c] sm:$0xf]
      %v372 = vld [vmem:[%s245 + $0x30] sm:$0xf]
      %v373 = vld [vmem:[%s245 + $0x34] sm:$0xf]
      %v374 = vld [vmem:[%s245 + $0x38] sm:$0xf]
      %v375 = vld [vmem:[%s245 + $0x3c] sm:$0xf]
      %v408 = vunpack.c.l.b16 %v328
      %v409 = vunpack.c.l.b16 %v329
      %v410 = vunpack.c.l.b16 %v330
      %v411 = vunpack.c.l.b16 %v331
      %v412 = vunpack.c.l.b16 %v332
      %v413 = vunpack.c.l.b16 %v333
      %v414 = vunpack.c.l.b16 %v334
      %v415 = vunpack.c.l.b16 %v335
      %v416 = vunpack.c.l.b16 %v336
      %v417 = vunpack.c.l.b16 %v337
      %v418 = vunpack.c.l.b16 %v338
      %v419 = vunpack.c.l.b16 %v339
      %v420 = vunpack.c.l.b16 %v340
      %v421 = vunpack.c.l.b16 %v341
      %v422 = vunpack.c.l.b16 %v342
      %v423 = vunpack.c.l.b16 %v343
      %v424 = vunpack.c.l.b16 %v344
      %v425 = vunpack.c.l.b16 %v345
      %v426 = vunpack.c.l.b16 %v346
      %v427 = vunpack.c.l.b16 %v347
      %v428 = vunpack.c.l.b16 %v348
      %v429 = vunpack.c.l.b16 %v349
      %v430 = vunpack.c.l.b16 %v350
      %v431 = vunpack.c.l.b16 %v351
      %v432 = vunpack.c.l.b16 %v352
      %v433 = vunpack.c.l.b16 %v353
      %v434 = vunpack.c.l.b16 %v354
      %v435 = vunpack.c.l.b16 %v355
      %v436 = vunpack.c.l.b16 %v356
      %v437 = vunpack.c.l.b16 %v357
      %v438 = vunpack.c.l.b16 %v358
      %v439 = vunpack.c.l.b16 %v359
      %v440 = vpack.c.b16 %v409, %v408
      %v441 = vpack.c.b16 %v411, %v410
      %v442 = vpack.c.b16 %v413, %v412
      %v443 = vpack.c.b16 %v415, %v414
      %v444 = vpack.c.b16 %v417, %v416
      %v445 = vpack.c.b16 %v419, %v418
      %v446 = vpack.c.b16 %v421, %v420
      %v447 = vpack.c.b16 %v423, %v422
      %v448 = vpack.c.b16 %v425, %v424
      %v449 = vpack.c.b16 %v427, %v426
      %v450 = vpack.c.b16 %v429, %v428
      %v451 = vpack.c.b16 %v431, %v430
      %v452 = vpack.c.b16 %v433, %v432
      %v453 = vpack.c.b16 %v435, %v434
      %v454 = vpack.c.b16 %v437, %v436
      %v455 = vpack.c.b16 %v439, %v438
      %v488 = vunpack.c.l.b16 %v360
      %v489 = vunpack.c.l.b16 %v361
      %v490 = vunpack.c.l.b16 %v362
      %v491 = vunpack.c.l.b16 %v363
      %v492 = vunpack.c.l.b16 %v364
      %v493 = vunpack.c.l.b16 %v365
      %v494 = vunpack.c.l.b16 %v366
      %v495 = vunpack.c.l.b16 %v367
      %v496 = vunpack.c.l.b16 %v368
      %v497 = vunpack.c.l.b16 %v369
      %v498 = vunpack.c.l.b16 %v370
      %v499 = vunpack.c.l.b16 %v371
      %v500 = vunpack.c.l.b16 %v372
      %v501 = vunpack.c.l.b16 %v373
      %v502 = vunpack.c.l.b16 %v374
      %v503 = vunpack.c.l.b16 %v375
      %v504 = vpack.c.b16 %v489, %v488
      %v505 = vpack.c.b16 %v491, %v490
      %v506 = vpack.c.b16 %v493, %v492
      %v507 = vpack.c.b16 %v495, %v494
      %v508 = vpack.c.b16 %v497, %v496
      %v509 = vpack.c.b16 %v499, %v498
      %v510 = vpack.c.b16 %v501, %v500
      %v511 = vpack.c.b16 %v503, %v502
      %520 = vmatprep.subr.bf16.mxu0 0
      %521 = vmatpush1.bf16.msra.mxu0 %v511
      %522 = vmatprep.subr.bf16.mxu0 0
      %523 = vmatpush1.bf16.msra.mxu0 %v510
      %524 = vmatprep.subr.bf16.mxu0 0
      %525 = vmatpush1.bf16.msra.mxu0 %v509
      %526 = vmatprep.subr.bf16.mxu0 0
      %527 = vmatpush1.bf16.msra.mxu0 %v508
      %528 = vmatprep.subr.bf16.mxu0 0
      %529 = vmatpush1.bf16.msra.mxu0 %v507
      %530 = vmatprep.subr.bf16.mxu0 0
      %531 = vmatpush1.bf16.msra.mxu0 %v506
      %532 = vmatprep.subr.bf16.mxu0 0
      %533 = vmatpush1.bf16.msra.mxu0 %v505
      %534 = vmatprep.subr.bf16.mxu0 0
      %535 = vmatpush1.bf16.msra.mxu0 %v504
      %536 = vmatprep.subr.bf16.mxu0 0
      %537 = vmatpush2.bf16.msra.mxu0 0
      %538 = vmatprep.subr.bf16.mxu0 0
      %539 = vmatpush2.bf16.msra.mxu0 0
      %540 = vmatprep.subr.bf16.mxu0 0
      %541 = vmatpush2.bf16.msra.mxu0 0
      %542 = vmatprep.subr.bf16.mxu0 0
      %543 = vmatpush2.bf16.msra.mxu0 0
      %544 = vmatprep.subr.bf16.mxu0 0
      %545 = vmatpush2.bf16.msra.mxu0 0
      %546 = vmatprep.subr.bf16.mxu0 0
      %547 = vmatpush2.bf16.msra.mxu0 0
      %548 = vmatprep.subr.bf16.mxu0 0
      %549 = vmatpush2.bf16.msra.mxu0 0
      %550 = vmatprep.subr.bf16.mxu0 0
      %551 = vmatpush2.bf16.msra.mxu0 0
      %552 = vmatprep.mubr.bf16.mxu0 0
      %553 = vmatmul.mubr.bf16.gmra.mxu0 %v440
      %v554 = vpop.f32.mrf.mxu0
      %v555 = vadd.f32 0.0, %v554
      %v556 = vpop.f32.mrf.mxu0
      %v557 = vpop.f32.mrf.mxu0
      %v558 = vadd.f32 0.0, %v557
      %v559 = vpop.f32.mrf.mxu0
      %560 = vmatprep.mubr.bf16.mxu0 0
      %561 = vmatmul.mubr.bf16.gmra.mxu0 %v441
      %v562 = vpop.f32.mrf.mxu0
      %v563 = vadd.f32 0.0, %v562
      %v564 = vpop.f32.mrf.mxu0
      %v565 = vpop.f32.mrf.mxu0
      %v566 = vadd.f32 0.0, %v565
      %v567 = vpop.f32.mrf.mxu0
      %568 = vmatprep.mubr.bf16.mxu0 0
      %569 = vmatmul.mubr.bf16.gmra.mxu0 %v442
      %v570 = vpop.f32.mrf.mxu0
      %v571 = vadd.f32 0.0, %v570
      %v572 = vpop.f32.mrf.mxu0
      %v573 = vpop.f32.mrf.mxu0
      %v574 = vadd.f32 0.0, %v573
      %v575 = vpop.f32.mrf.mxu0
      %576 = vmatprep.mubr.bf16.mxu0 0
      %577 = vmatmul.mubr.bf16.gmra.mxu0 %v443
      %v578 = vpop.f32.mrf.mxu0
      %v579 = vadd.f32 0.0, %v578
      %v580 = vpop.f32.mrf.mxu0
      %v581 = vpop.f32.mrf.mxu0
      %v582 = vadd.f32 0.0, %v581
      %v583 = vpop.f32.mrf.mxu0
      %584 = vmatprep.mubr.bf16.mxu0 0
      %585 = vmatmul.mubr.bf16.gmra.mxu0 %v444
      %v586 = vpop.f32.mrf.mxu0
      %v587 = vadd.f32 0.0, %v586
      %v588 = vpop.f32.mrf.mxu0
      %v589 = vpop.f32.mrf.mxu0
      %v590 = vadd.f32 0.0, %v589
      %v591 = vpop.f32.mrf.mxu0
      %592 = vmatprep.mubr.bf16.mxu0 0
      %593 = vmatmul.mubr.bf16.gmra.mxu0 %v445
      %v594 = vpop.f32.mrf.mxu0
      %v595 = vadd.f32 0.0, %v594
      %v596 = vpop.f32.mrf.mxu0
      %v597 = vpop.f32.mrf.mxu0
      %v598 = vadd.f32 0.0, %v597
      %v599 = vpop.f32.mrf.mxu0
      %600 = vmatprep.mubr.bf16.mxu0 0
      %601 = vmatmul.mubr.bf16.gmra.mxu0 %v446
      %v602 = vpop.f32.mrf.mxu0
      %v603 = vadd.f32 0.0, %v602
      %v604 = vpop.f32.mrf.mxu0
      %v605 = vpop.f32.mrf.mxu0
      %v606 = vadd.f32 0.0, %v605
      %v607 = vpop.f32.mrf.mxu0
      %608 = vmatprep.mubr.bf16.mxu0 0
      %609 = vmatmul.mubr.bf16.gmra.mxu0 %v447
      %v610 = vpop.f32.mrf.mxu0
      %v611 = vadd.f32 0.0, %v610
      %v612 = vpop.f32.mrf.mxu0
      %v613 = vpop.f32.mrf.mxu0
      %v614 = vadd.f32 0.0, %v613
      %v615 = vpop.f32.mrf.mxu0
      %616 = vmatprep.mubr.bf16.mxu0 0
      %617 = vmatmul.mubr.bf16.gmra.mxu0 %v448
      %v618 = vpop.f32.mrf.mxu0
      %v619 = vadd.f32 0.0, %v618
      %v620 = vpop.f32.mrf.mxu0
      %v621 = vpop.f32.mrf.mxu0
      %v622 = vadd.f32 0.0, %v621
      %v623 = vpop.f32.mrf.mxu0
      %624 = vmatprep.mubr.bf16.mxu0 0
      %625 = vmatmul.mubr.bf16.gmra.mxu0 %v449
      %v626 = vpop.f32.mrf.mxu0
      %v627 = vadd.f32 0.0, %v626
      %v628 = vpop.f32.mrf.mxu0
      %v629 = vpop.f32.mrf.mxu0
      %v630 = vadd.f32 0.0, %v629
      %v631 = vpop.f32.mrf.mxu0
      %632 = vmatprep.mubr.bf16.mxu0 0
      %633 = vmatmul.mubr.bf16.gmra.mxu0 %v450
      %v634 = vpop.f32.mrf.mxu0
      %v635 = vadd.f32 0.0, %v634
      %v636 = vpop.f32.mrf.mxu0
      %v637 = vpop.f32.mrf.mxu0
      %v638 = vadd.f32 0.0, %v637
      %v639 = vpop.f32.mrf.mxu0
      %640 = vmatprep.mubr.bf16.mxu0 0
      %641 = vmatmul.mubr.bf16.gmra.mxu0 %v451
      %v642 = vpop.f32.mrf.mxu0
      %v643 = vadd.f32 0.0, %v642
      %v644 = vpop.f32.mrf.mxu0
      %v645 = vpop.f32.mrf.mxu0
      %v646 = vadd.f32 0.0, %v645
      %v647 = vpop.f32.mrf.mxu0
      %648 = vmatprep.mubr.bf16.mxu0 0
      %649 = vmatmul.mubr.bf16.gmra.mxu0 %v452
      %v650 = vpop.f32.mrf.mxu0
      %v651 = vadd.f32 0.0, %v650
      %v652 = vpop.f32.mrf.mxu0
      %v653 = vpop.f32.mrf.mxu0
      %v654 = vadd.f32 0.0, %v653
      %v655 = vpop.f32.mrf.mxu0
      %656 = vmatprep.mubr.bf16.mxu0 0
      %657 = vmatmul.mubr.bf16.gmra.mxu0 %v453
      %v658 = vpop.f32.mrf.mxu0
      %v659 = vadd.f32 0.0, %v658
      %v660 = vpop.f32.mrf.mxu0
      %v661 = vpop.f32.mrf.mxu0
      %v662 = vadd.f32 0.0, %v661
      %v663 = vpop.f32.mrf.mxu0
      %664 = vmatprep.mubr.bf16.mxu0 0
      %665 = vmatmul.mubr.bf16.gmra.mxu0 %v454
      %v666 = vpop.f32.mrf.mxu0
      %v667 = vadd.f32 0.0, %v666
      %v668 = vpop.f32.mrf.mxu0
      %v669 = vpop.f32.mrf.mxu0
      %v670 = vadd.f32 0.0, %v669
      %v671 = vpop.f32.mrf.mxu0
      %672 = vmatprep.mubr.bf16.mxu0 0
      %673 = vmatmul.mubr.bf16.gmra.mxu0 %v455
      %v674 = vpop.f32.mrf.mxu0
      %v675 = vadd.f32 0.0, %v674
      %v676 = vpop.f32.mrf.mxu0
      %v677 = vpop.f32.mrf.mxu0
      %v678 = vadd.f32 0.0, %v677
      %v679 = vpop.f32.mrf.mxu0
      %680 = vdwg.mxu0
      %v681 = vadd.f32 %v296, %v555
      %v682 = vadd.f32 %v297, %v558
      %v683 = vadd.f32 %v298, %v563
      %v684 = vadd.f32 %v299, %v566
      %v685 = vadd.f32 %v300, %v571
      %v686 = vadd.f32 %v301, %v574
      %v687 = vadd.f32 %v302, %v579
      %v688 = vadd.f32 %v303, %v582
      %v689 = vadd.f32 %v304, %v587
      %v690 = vadd.f32 %v305, %v590
      %v691 = vadd.f32 %v306, %v595
      %v692 = vadd.f32 %v307, %v598
      %v693 = vadd.f32 %v308, %v603
      %v694 = vadd.f32 %v309, %v606
      %v695 = vadd.f32 %v310, %v611
      %v696 = vadd.f32 %v311, %v614
      %v697 = vadd.f32 %v312, %v619
      %v698 = vadd.f32 %v313, %v622
      %v699 = vadd.f32 %v314, %v627
      %v700 = vadd.f32 %v315, %v630
      %v701 = vadd.f32 %v316, %v635
      %v702 = vadd.f32 %v317, %v638
      %v703 = vadd.f32 %v318, %v643
      %v704 = vadd.f32 %v319, %v646
      %v705 = vadd.f32 %v320, %v651
      %v706 = vadd.f32 %v321, %v654
      %v707 = vadd.f32 %v322, %v659
      %v708 = vadd.f32 %v323, %v662
      %v709 = vadd.f32 %v324, %v667
      %v710 = vadd.f32 %v325, %v670
      %v711 = vadd.f32 %v326, %v675
      %v712 = vadd.f32 %v327, %v678
      %713 = vst [vmem:[#allocation2] sm:$0xff] %v681
      %714 = vst [vmem:[#allocation2 + $0x8] sm:$0xff] %v682
      %715 = vst [vmem:[#allocation2 + $0x10] sm:$0xff] %v683
      %716 = vst [vmem:[#allocation2 + $0x18] sm:$0xff] %v684
      %717 = vst [vmem:[#allocation2 + $0x20] sm:$0xff] %v685
      %718 = vst [vmem:[#allocation2 + $0x28] sm:$0xff] %v686
      %719 = vst [vmem:[#allocation2 + $0x30] sm:$0xff] %v687
      %720 = vst [vmem:[#allocation2 + $0x38] sm:$0xff] %v688
      %721 = vst [vmem:[#allocation2 + $0x40] sm:$0xff] %v689
      %722 = vst [vmem:[#allocation2 + $0x48] sm:$0xff] %v690
      %723 = vst [vmem:[#allocation2 + $0x50] sm:$0xff] %v691
      %724 = vst [vmem:[#allocation2 + $0x58] sm:$0xff] %v692
      %725 = vst [vmem:[#allocation2 + $0x60] sm:$0xff] %v693
      %726 = vst [vmem:[#allocation2 + $0x68] sm:$0xff] %v694
      %727 = vst [vmem:[#allocation2 + $0x70] sm:$0xff] %v695
      %728 = vst [vmem:[#allocation2 + $0x78] sm:$0xff] %v696
      %729 = vst [vmem:[#allocation2 + $0x80] sm:$0xff] %v697
      %730 = vst [vmem:[#allocation2 + $0x88] sm:$0xff] %v698
      %731 = vst [vmem:[#allocation2 + $0x90] sm:$0xff] %v699
      %732 = vst [vmem:[#allocation2 + $0x98] sm:$0xff] %v700
      %733 = vst [vmem:[#allocation2 + $0xa0] sm:$0xff] %v701
      %734 = vst [vmem:[#allocation2 + $0xa8] sm:$0xff] %v702
      %735 = vst [vmem:[#allocation2 + $0xb0] sm:$0xff] %v703
      %736 = vst [vmem:[#allocation2 + $0xb8] sm:$0xff] %v704
      %737 = vst [vmem:[#allocation2 + $0xc0] sm:$0xff] %v705
      %738 = vst [vmem:[#allocation2 + $0xc8] sm:$0xff] %v706
      %739 = vst [vmem:[#allocation2 + $0xd0] sm:$0xff] %v707
      %740 = vst [vmem:[#allocation2 + $0xd8] sm:$0xff] %v708
      %741 = vst [vmem:[#allocation2 + $0xe0] sm:$0xff] %v709
      %742 = vst [vmem:[#allocation2 + $0xe8] sm:$0xff] %v710
      %743 = vst [vmem:[#allocation2 + $0xf0] sm:$0xff] %v711
      %744 = vst [vmem:[#allocation2 + $0xf8] sm:$0xff] %v712
      // Predicated region
      $region37: #{generator_forward.25} parent=31 // pred_check
        %p745 = pneg %p260
      $region38: #{generator_forward.25} parent=31 // pred_check_branch
        %747 = sbr.rel (%p745) target = $region40
      $region39: #{generator_forward.25} parent=31 // pred_region
        %v748 = vld [vmem:[#allocation2] sm:$0xff]
        %v749 = vld [vmem:[#allocation2 + $0x8] sm:$0xff]
        %v750 = vld [vmem:[#allocation2 + $0x10] sm:$0xff]
        %v751 = vld [vmem:[#allocation2 + $0x18] sm:$0xff]
        %v752 = vld [vmem:[#allocation2 + $0x20] sm:$0xff]
        %v753 = vld [vmem:[#allocation2 + $0x28] sm:$0xff]
        %v754 = vld [vmem:[#allocation2 + $0x30] sm:$0xff]
        %v755 = vld [vmem:[#allocation2 + $0x38] sm:$0xff]
        %v756 = vld [vmem:[#allocation2 + $0x40] sm:$0xff]
        %v757 = vld [vmem:[#allocation2 + $0x48] sm:$0xff]
        %v758 = vld [vmem:[#allocation2 + $0x50] sm:$0xff]
        %v759 = vld [vmem:[#allocation2 + $0x58] sm:$0xff]
        %v760 = vld [vmem:[#allocation2 + $0x60] sm:$0xff]
        %v761 = vld [vmem:[#allocation2 + $0x68] sm:$0xff]
        %v762 = vld [vmem:[#allocation2 + $0x70] sm:$0xff]
        %v763 = vld [vmem:[#allocation2 + $0x78] sm:$0xff]
        %v764 = vld [vmem:[#allocation2 + $0x80] sm:$0xff]
        %v765 = vld [vmem:[#allocation2 + $0x88] sm:$0xff]
        %v766 = vld [vmem:[#allocation2 + $0x90] sm:$0xff]
        %v767 = vld [vmem:[#allocation2 + $0x98] sm:$0xff]
        %v768 = vld [vmem:[#allocation2 + $0xa0] sm:$0xff]
        %v769 = vld [vmem:[#allocation2 + $0xa8] sm:$0xff]
        %v770 = vld [vmem:[#allocation2 + $0xb0] sm:$0xff]
        %v771 = vld [vmem:[#allocation2 + $0xb8] sm:$0xff]
        %v772 = vld [vmem:[#allocation2 + $0xc0] sm:$0xff]
        %v773 = vld [vmem:[#allocation2 + $0xc8] sm:$0xff]
        %v774 = vld [vmem:[#allocation2 + $0xd0] sm:$0xff]
        %v775 = vld [vmem:[#allocation2 + $0xd8] sm:$0xff]
        %v776 = vld [vmem:[#allocation2 + $0xe0] sm:$0xff]
        %v777 = vld [vmem:[#allocation2 + $0xe8] sm:$0xff]
        %v778 = vld [vmem:[#allocation2 + $0xf0] sm:$0xff]
        %v779 = vld [vmem:[#allocation2 + $0xf8] sm:$0xff]
        %v780 = vld [vmem:[%s249] sm:$0x1]
        %v782 = vlaneseq
        %v783 = vshrl.u32 %v782, 7
        %v784 = vsub.s32 0, %v783
        %v785 = vrot.slane %v780, %v784
        %v787 = vadd.f32 %v748, %v785
        %v788 = vadd.f32 %v749, %v785
        %v789 = vadd.f32 %v750, %v785
        %v790 = vadd.f32 %v751, %v785
        %v791 = vadd.f32 %v752, %v785
        %v792 = vadd.f32 %v753, %v785
        %v793 = vadd.f32 %v754, %v785
        %v794 = vadd.f32 %v755, %v785
        %v795 = vadd.f32 %v756, %v785
        %v796 = vadd.f32 %v757, %v785
        %v797 = vadd.f32 %v758, %v785
        %v798 = vadd.f32 %v759, %v785
        %v799 = vadd.f32 %v760, %v785
        %v800 = vadd.f32 %v761, %v785
        %v801 = vadd.f32 %v762, %v785
        %v802 = vadd.f32 %v763, %v785
        %v803 = vadd.f32 %v764, %v785
        %v804 = vadd.f32 %v765, %v785
        %v805 = vadd.f32 %v766, %v785
        %v806 = vadd.f32 %v767, %v785
        %v807 = vadd.f32 %v768, %v785
        %v808 = vadd.f32 %v769, %v785
        %v809 = vadd.f32 %v770, %v785
        %v810 = vadd.f32 %v771, %v785
        %v811 = vadd.f32 %v772, %v785
        %v812 = vadd.f32 %v773, %v785
        %v813 = vadd.f32 %v774, %v785
        %v814 = vadd.f32 %v775, %v785
        %v815 = vadd.f32 %v776, %v785
        %v816 = vadd.f32 %v777, %v785
        %v817 = vadd.f32 %v778, %v785
        %v818 = vadd.f32 %v779, %v785
        %v819 = vtanh.pop %v787
        %v820 = vtanh.pop %v788
        %v821 = vtanh.pop %v789
        %v822 = vtanh.pop %v790
        %v823 = vtanh.pop %v791
        %v824 = vtanh.pop %v792
        %v825 = vtanh.pop %v793
        %v826 = vtanh.pop %v794
        %v827 = vtanh.pop %v795
        %v828 = vtanh.pop %v796
        %v829 = vtanh.pop %v797
        %v830 = vtanh.pop %v798
        %v831 = vtanh.pop %v799
        %v832 = vtanh.pop %v800
        %v833 = vtanh.pop %v801
        %v834 = vtanh.pop %v802
        %v835 = vtanh.pop %v803
        %v836 = vtanh.pop %v804
        %v837 = vtanh.pop %v805
        %v838 = vtanh.pop %v806
        %v839 = vtanh.pop %v807
        %v840 = vtanh.pop %v808
        %v841 = vtanh.pop %v809
        %v842 = vtanh.pop %v810
        %v843 = vtanh.pop %v811
        %v844 = vtanh.pop %v812
        %v845 = vtanh.pop %v813
        %v846 = vtanh.pop %v814
        %v847 = vtanh.pop %v815
        %v848 = vtanh.pop %v816
        %v849 = vtanh.pop %v817
        %v850 = vtanh.pop %v818
        %851 = vst [vmem:[%s257] sm:$0xff] %v819
        %852 = vst [vmem:[%s257 + $0x8] sm:$0xff] %v820
        %853 = vst [vmem:[%s257 + $0x10] sm:$0xff] %v821
        %854 = vst [vmem:[%s257 + $0x18] sm:$0xff] %v822
        %855 = vst [vmem:[%s257 + $0x20] sm:$0xff] %v823
        %856 = vst [vmem:[%s257 + $0x28] sm:$0xff] %v824
        %857 = vst [vmem:[%s257 + $0x30] sm:$0xff] %v825
        %858 = vst [vmem:[%s257 + $0x38] sm:$0xff] %v826
        %859 = vst [vmem:[%s257 + $0x40] sm:$0xff] %v827
        %860 = vst [vmem:[%s257 + $0x48] sm:$0xff] %v828
        %861 = vst [vmem:[%s257 + $0x50] sm:$0xff] %v829
        %862 = vst [vmem:[%s257 + $0x58] sm:$0xff] %v830
        %863 = vst [vmem:[%s257 + $0x60] sm:$0xff] %v831
        %864 = vst [vmem:[%s257 + $0x68] sm:$0xff] %v832
        %865 = vst [vmem:[%s257 + $0x70] sm:$0xff] %v833
        %866 = vst [vmem:[%s257 + $0x78] sm:$0xff] %v834
        %867 = vst [vmem:[%s257 + $0x80] sm:$0xff] %v835
        %868 = vst [vmem:[%s257 + $0x88] sm:$0xff] %v836
        %869 = vst [vmem:[%s257 + $0x90] sm:$0xff] %v837
        %870 = vst [vmem:[%s257 + $0x98] sm:$0xff] %v838
        %871 = vst [vmem:[%s257 + $0xa0] sm:$0xff] %v839
        %872 = vst [vmem:[%s257 + $0xa8] sm:$0xff] %v840
        %873 = vst [vmem:[%s257 + $0xb0] sm:$0xff] %v841
        %874 = vst [vmem:[%s257 + $0xb8] sm:$0xff] %v842
        %875 = vst [vmem:[%s257 + $0xc0] sm:$0xff] %v843
        %876 = vst [vmem:[%s257 + $0xc8] sm:$0xff] %v844
        %877 = vst [vmem:[%s257 + $0xd0] sm:$0xff] %v845
        %878 = vst [vmem:[%s257 + $0xd8] sm:$0xff] %v846
        %879 = vst [vmem:[%s257 + $0xe0] sm:$0xff] %v847
        %880 = vst [vmem:[%s257 + $0xe8] sm:$0xff] %v848
        %881 = vst [vmem:[%s257 + $0xf0] sm:$0xff] %v849
        %882 = vst [vmem:[%s257 + $0xf8] sm:$0xff] %v850
      $region40: #{generator_forward.25} parent=31 // pred_fallthru
        _
      %s883 = smul.u32 32, %s19
      %p884 = scmp.lt.s32.totalorder %s883, 287
      %s885 = scalar_select %p884, %s883, 287
      %p886 = scmp.lt.s32.totalorder %s20, 0
      %s887 = scalar_select %p886, %s20, 0
      %s888 = sadd.s32 %s887, %s885
      %s889 = smul.addr %s888, 8
      %s890 = scalar_lea.vmem %s3, %s889
      // Predicated region
      $region41: #{generator_forward.25} parent=31 // pred_check
        %p891 = pneg %p135
      $region42: #{generator_forward.25} parent=31 // pred_check_branch
        %893 = sbr.rel (%p891) target = $region44
      $region43: #{generator_forward.25} parent=31 // pred_region
        %s894 = smul.u32 32, %s19
      $region44: #{generator_forward.25} parent=31 // pred_fallthru
        _
    $region32: #{generator_forward.25} parent=5 // pred_fallthru
      _
    %p895 = scmp.le.s32.totalorder 2, %s9
    // Predicated region
    $region45: #{generator_forward.25} parent=5 // pred_check
      %p896 = pneg %p895
    $region46: #{generator_forward.25} parent=5 // pred_check_branch
      %898 = sbr.rel (%p896) target = $region48
    $region47: #{generator_forward.25} parent=5 // pred_region
      %s899 = ssub.s32 %s9, 2
      // Predicated region
      $region49: #{generator_forward.25} parent=47 // pred_check
        %p900 = pneg %p141
      $region50: #{generator_forward.25} parent=47 // pred_check_branch
        %902 = sbr.rel (%p900) target = $region52
      $region51: #{generator_forward.25} parent=47 // pred_region
        %s903 = smul.u32 32, %s22
        %p904 = scmp.lt.s32.totalorder %s903, 287
        %s905 = scalar_select %p904, %s903, 287
        %p906 = scmp.lt.s32.totalorder %s23, 0
        %s907 = scalar_select %p906, %s23, 0
        %s908 = sadd.s32 %s907, %s905
        %s909 = smul.addr %s908, 8
        %s910 = scalar_lea.vmem %s3, %s909
      $region52: #{generator_forward.25} parent=47 // pred_fallthru
        _
    $region48: #{generator_forward.25} parent=5 // pred_fallthru
      _
  $region6: #{generator_forward.25} parent=0 // loop_footer
    %s13 = sadd.s32 1, %s9
  $region7: #{generator_forward.25} parent=0 // loop_footer_branch
    %8 = sbr.rel target = $region3
  $region8: #{generator_forward.25} parent=0 // loop_exit
    _

</llo_original>
